<compile_context>
chip_gen: v6e
topology: v6e:2x2x1
jax: 0.10.0
libtpu: 0.0.40
codegen_flags: <defaults>
</compile_context>

<pallas_src>
import jax
import jax.numpy as jnp
from jax.experimental import pallas as pl
from jax.experimental.pallas import tpu as pltpu

# ----------------------------- config ---------------------------------------
VOCAB = 256
HIDDEN = 128
N_HEADS = 4
HEAD_DIM = HIDDEN // N_HEADS        # 32
INTERMEDIATE = 256
N_LAYERS = 2
MAX_CACHE_LEN = 32                  # static cache length
BATCH = 1
SEQLEN = 8
RMS_EPS = 1e-6
NEG_INF = -1e30


# ----------------------------- RoPE glue -------------------------------------
def rope_cos_sin(positions, dim, base=10000.0):
    inv_freq = 1.0 / (base ** (jnp.arange(0, dim, 2, dtype=jnp.float32) / dim))
    freqs = positions.astype(jnp.float32)[:, None] * inv_freq[None, :]   # (S, D/2)
    emb = jnp.concatenate([freqs, freqs], axis=-1)                        # (S, D)
    return jnp.cos(emb), jnp.sin(emb)


# ----------------------------- fused Pallas kernel ---------------------------
def _fused_decoder_kernel(pos_ref, x_ref, cos_ref, sin_ref, cache_ref,
                          ln1_ref, wqkv_ref, wo_ref, ln2_ref, wgu_ref, wd_ref,
                          lnf_ref, lmh_ref,
                          logits_ref, cache_out_ref):
    BS, H = x_ref.shape
    S, Dh = cos_ref.shape
    B = BS // S
    nH = H // Dh
    L = cache_ref.shape[0]
    T = cache_ref.shape[3]
    F = wd_ref.shape[1]
    scale = 1.0 / (Dh ** 0.5)

    pos0 = pos_ref[0]                        # first cache slot (contiguous positions)
    cos = cos_ref[...]                       # (S, Dh) f32
    sin = sin_ref[...]
    x = x_ref[...].astype(jnp.float32)       # (B*S, H)

    def rms(v, w):
        var = jnp.mean(v * v, axis=-1, keepdims=True)
        return v * jax.lax.rsqrt(var + RMS_EPS) * w

    def mxu(a, b):                           # bf16 MXU, f32 accumulation
        return jax.lax.dot_general(
            a.astype(jnp.bfloat16), b.astype(jnp.bfloat16),
            dimension_numbers=(((1,), (0,)), ((), ())),
            preferred_element_type=jnp.float32)

    def rope(v):                             # v: (S, Dh); rotate_half in-kernel
        half = Dh // 2
        rot = jnp.concatenate([-v[:, half:], v[:, :half]], axis=-1)
        return v * cos + rot * sin

    # causal mask sliced by cache_position: slot j visible iff j <= pos0 + row
    row = jax.lax.broadcasted_iota(jnp.int32, (S, T), 0)
    col = jax.lax.broadcasted_iota(jnp.int32, (S, T), 1)
    visible = col <= (pos0 + row)

    for li in range(L):
        # --- fused RMSNorm + QKV projection ---
        h1 = rms(x, ln1_ref[li].astype(jnp.float32))          # (B*S, H)
        qkv = mxu(h1, wqkv_ref[li])                           # (B*S, 3H) f32

        attn_rows = []
        for b in range(B):
            r0 = b * S
            q_heads, k_heads, v_heads = [], [], []
            for h in range(nH):
                c = h * Dh
                q_heads.append(rope(qkv[r0:r0 + S, c:c + Dh]))
                k_heads.append(rope(qkv[r0:r0 + S, H + c:H + c + Dh]))
                v_heads.append(qkv[r0:r0 + S, 2 * H + c:2 * H + c + Dh])
            k_new = jnp.concatenate(k_heads, axis=-1)          # (S, H) lane-dense
            v_new = jnp.concatenate(v_heads, axis=-1)

            # --- static cache update in VMEM (StaticCache.update semantics,
            #     contiguous cache_position) ---
            kco = cache_out_ref.at[li, 0, b]                   # (T, H) views
            vco = cache_out_ref.at[li, 1, b]
            kco[...] = cache_ref[li, 0, b]
            vco[...] = cache_ref[li, 1, b]
            kco[pl.ds(pos0, S), :] = k_new.astype(cache_out_ref.dtype)
            vco[pl.ds(pos0, S), :] = v_new.astype(cache_out_ref.dtype)
            k_all = kco[...].astype(jnp.float32)               # (T, H) updated
            v_all = vco[...].astype(jnp.float32)

            # --- attention over the full static cache, per head ---
            outs = []
            for h in range(nH):
                c = h * Dh
                k_h = k_all[:, c:c + Dh]                       # (T, Dh)
                v_h = v_all[:, c:c + Dh]
                s = jax.lax.dot_general(                       # contract last dims
                    q_heads[h].astype(jnp.bfloat16), k_h.astype(jnp.bfloat16),
                    dimension_numbers=(((1,), (1,)), ((), ())),
                    preferred_element_type=jnp.float32) * scale
                s = jnp.where(visible, s, NEG_INF)
                m = jnp.max(s, axis=-1, keepdims=True)
                p = jnp.exp(s - m)
                denom = jnp.sum(p, axis=-1, keepdims=True)
                p = p * pl.reciprocal(denom, approx=True)
                outs.append(jax.lax.dot_general(
                    p.astype(jnp.bfloat16), v_h.astype(jnp.bfloat16),
                    dimension_numbers=(((1,), (0,)), ((), ())),
                    preferred_element_type=jnp.float32))       # (S, Dh)
            attn_rows.append(jnp.concatenate(outs, axis=-1))   # (S, H) lane-dense

        attn = attn_rows[0] if B == 1 else jnp.concatenate(attn_rows, axis=0)
        x = x + mxu(attn, wo_ref[li])

        # --- fused RMSNorm + SwiGLU MLP (gate|up fused) ---
        h2 = rms(x, ln2_ref[li].astype(jnp.float32))
        gu = mxu(h2, wgu_ref[li])                              # (B*S, 2F)
        g = gu[:, :F]
        u = gu[:, F:]
        x = x + mxu(g * jax.nn.sigmoid(g) * u, wd_ref[li])

    # --- final norm + lm_head ---
    xf = rms(x, lnf_ref[...].astype(jnp.float32))
    logits_ref[...] = mxu(xf, lmh_ref[...]).astype(logits_ref.dtype)


# ----------------------------- wrapper ---------------------------------------
@jax.jit
def forward(params, kv_cache, input_ids, cache_position):
    """Pallas equivalent of TorchExportableModuleWithStaticCache.forward.

    Returns (logits, updated_kv_cache). Assumes cache_position is a
    contiguous arange (the way ExecuTorch/StaticCache drives prefill/decode).
    """
    B, S = input_ids.shape
    # embedding gather is plain-JAX glue (no clean single-kernel Pallas gather)
    x = jnp.take(params["embed"], input_ids.reshape(-1), axis=0)     # (B*S, H) f32
    cos, sin = rope_cos_sin(cache_position, HEAD_DIM)                # (S, Dh)

    vmem = pl.BlockSpec(memory_space=pltpu.MemorySpace.VMEM)
    smem = pl.BlockSpec(memory_space=pltpu.MemorySpace.SMEM)
    logits, new_cache = pl.pallas_call(
        _fused_decoder_kernel,
        out_shape=(jax.ShapeDtypeStruct((B * S, VOCAB), jnp.float32),
                   jax.ShapeDtypeStruct(kv_cache.shape, kv_cache.dtype)),
        in_specs=[smem] + [vmem] * 12,
        out_specs=(vmem, vmem),
    )(cache_position.astype(jnp.int32), x, cos, sin, kv_cache,
      params["ln1"], params["wqkv"], params["wo"], params["ln2"],
      params["wgu"], params["wd"], params["ln_f"], params["lm_head"])
    return logits.reshape(B, S, VOCAB), new_cache


# ----------------------------- pure-JAX reference ----------------------------
def reference_forward(params, kv_cache, input_ids, cache_position):
    """f32 reference with the same math (for correctness checking only)."""
    B, S = input_ids.shape
    H, nH, Dh, T = HIDDEN, N_HEADS, HEAD_DIM, MAX_CACHE_LEN
    f32 = jnp.float32
    x = jnp.take(params["embed"], input_ids.reshape(-1), axis=0).reshape(B, S, H).astype(f32)
    cos, sin = rope_cos_sin(cache_position, Dh)

    def rms(v, w):
        var = jnp.mean(v * v, axis=-1, keepdims=True)
        return v * jax.lax.rsqrt(var + RMS_EPS) * w.astype(f32)

    def rope(v):                          # (B, nH, S, Dh)
        half = Dh // 2
        rot = jnp.concatenate([-v[..., half:], v[..., :half]], axis=-1)
        return v * cos[None, None] + rot * sin[None, None]

    def split_heads(t):                   # (B,S,H) -> (B,nH,S,Dh)
        return jnp.transpose(t.reshape(B, S, nH, Dh), (0, 2, 1, 3))

    col = jnp.arange(T)
    mask = col[None, :] <= cache_position[:, None]               # (S, T)
    new_cache = kv_cache
    start = cache_position[0]
    for li in range(N_LAYERS):
        h1 = rms(x, params["ln1"][li])
        qkv = h1 @ params["wqkv"][li].astype(f32)
        q, k, v = jnp.split(qkv, 3, axis=-1)
        q, k, v = split_heads(q), split_heads(k), split_heads(v)
        q, k = rope(q), rope(k)
        k_rows = jnp.transpose(k, (0, 2, 1, 3)).reshape(B, S, H)
        v_rows = jnp.transpose(v, (0, 2, 1, 3)).reshape(B, S, H)
        kc = jax.lax.dynamic_update_slice_in_dim(new_cache[li, 0], k_rows, start, axis=1)
        vc = jax.lax.dynamic_update_slice_in_dim(new_cache[li, 1], v_rows, start, axis=1)
        new_cache = new_cache.at[li, 0].set(kc).at[li, 1].set(vc)
        k_all = jnp.transpose(kc.reshape(B, T, nH, Dh), (0, 2, 1, 3))
        v_all = jnp.transpose(vc.reshape(B, T, nH, Dh), (0, 2, 1, 3))
        scores = jnp.einsum("bhsd,bhtd->bhst", q, k_all) / (Dh ** 0.5)
        scores = jnp.where(mask[None, None], scores, NEG_INF)
        p = jax.nn.softmax(scores, axis=-1)
        o = jnp.einsum("bhst,bhtd->bhsd", p, v_all)
        o = jnp.transpose(o, (0, 2, 1, 3)).reshape(B, S, H)
        x = x + o @ params["wo"][li].astype(f32)
        h2 = rms(x, params["ln2"][li])
        gu = h2 @ params["wgu"][li].astype(f32)
        g, u = jnp.split(gu, 2, axis=-1)
        x = x + (g * jax.nn.sigmoid(g) * u) @ params["wd"][li].astype(f32)
    xf = rms(x, params["ln_f"])
    return xf @ params["lm_head"].astype(f32), new_cache


# ----------------------------- param init ------------------------------------
def init_params(key):
    def nrm(k, shape, dtype=jnp.bfloat16, scale=0.02):
        return (scale * jax.random.normal(k, shape, dtype=jnp.float32)).astype(dtype)

    keys = jax.random.split(key, 6)
    return {
        "embed": nrm(keys[0], (VOCAB, HIDDEN), dtype=jnp.float32),
        "ln1": jnp.ones((N_LAYERS, 1, HIDDEN), jnp.float32),
        "wqkv": nrm(keys[1], (N_LAYERS, HIDDEN, 3 * HIDDEN)),     # q|k|v fused
        "wo": nrm(keys[2], (N_LAYERS, HIDDEN, HIDDEN)),
        "ln2": jnp.ones((N_LAYERS, 1, HIDDEN), jnp.float32),
        "wgu": nrm(keys[3], (N_LAYERS, HIDDEN, 2 * INTERMEDIATE)),  # gate|up fused
        "wd": nrm(keys[4], (N_LAYERS, INTERMEDIATE, HIDDEN)),
        "ln_f": jnp.ones((1, HIDDEN), jnp.float32),
        "lm_head": nrm(keys[5], (HIDDEN, VOCAB)),
    }


# ----------------------------- main -------------------------------------------
if __name__ == "__main__":
    key = jax.random.PRNGKey(0)
    pkey, ikey = jax.random.split(key)
    params = init_params(pkey)

    cache_shape = (N_LAYERS, 2, BATCH, MAX_CACHE_LEN, HIDDEN)
    kv_cache = jnp.zeros(cache_shape, jnp.float32)       # StaticCache: zeros
    ref_cache = jnp.zeros(cache_shape, jnp.float32)

    # --- prefill step: ExecuTorch-style signature (input_ids, cache_position) ---
    input_ids = jax.random.randint(ikey, (BATCH, SEQLEN), 0, VOCAB, dtype=jnp.int32)
    cache_position = jnp.arange(SEQLEN, dtype=jnp.int32)

    logits, kv_cache = forward(params, kv_cache, input_ids, cache_position)
    logits = jax.block_until_ready(logits)
    assert logits.shape == (BATCH, SEQLEN, VOCAB)
    assert bool(jnp.all(jnp.isfinite(logits)))

    ref_logits, ref_cache = reference_forward(params, ref_cache, input_ids, cache_position)
    assert float(jnp.max(jnp.abs(logits - ref_logits))) < 3e-2

    # --- true single-token decode at cache slot SEQLEN (no cache pollution) ---
    next_id = jnp.argmax(logits[:, -1, :], axis=-1).astype(jnp.int32).reshape(BATCH, 1)
    dec_pos = jnp.arange(SEQLEN, SEQLEN + 1, dtype=jnp.int32)

    dec_logits, kv_cache = forward(params, kv_cache, next_id, dec_pos)
    dec_logits = jax.block_until_ready(dec_logits)
    assert dec_logits.shape == (BATCH, 1, VOCAB)
    assert bool(jnp.all(jnp.isfinite(dec_logits)))

    ref_dec_logits, ref_cache = reference_forward(params, ref_cache, next_id, dec_pos)
    assert float(jnp.max(jnp.abs(dec_logits - ref_dec_logits))) < 3e-2

    print("KERNEL_OK")
</pallas_src>

<mosaic_0001>
module attributes {stable_mosaic.version = 11 : i64} {
  func.func @_fused_decoder_kernel(%arg0: memref<8xi32, #tpu.memory_space<smem>>, %arg1: memref<8x128xf32, #tpu.memory_space<vmem>>, %arg2: memref<8x32xf32, #tpu.memory_space<vmem>>, %arg3: memref<8x32xf32, #tpu.memory_space<vmem>>, %arg4: memref<2x2x1x32x128xf32, #tpu.memory_space<vmem>>, %arg5: memref<2x1x128xf32, #tpu.memory_space<vmem>>, %arg6: memref<2x128x384xbf16, #tpu.memory_space<vmem>>, %arg7: memref<2x128x128xbf16, #tpu.memory_space<vmem>>, %arg8: memref<2x1x128xf32, #tpu.memory_space<vmem>>, %arg9: memref<2x128x512xbf16, #tpu.memory_space<vmem>>, %arg10: memref<2x256x128xbf16, #tpu.memory_space<vmem>>, %arg11: memref<1x128xf32, #tpu.memory_space<vmem>>, %arg12: memref<128x256xbf16, #tpu.memory_space<vmem>>, %arg13: memref<8x256xf32, #tpu.memory_space<vmem>>, %arg14: memref<2x2x1x32x128xf32, #tpu.memory_space<vmem>>) attributes {dimension_semantics = [], scalar_prefetch = 0 : i64, scratch_operands = 0 : i64, tpu.core_type = #tpu.core_type<tc>} {
    %c0 = arith.constant 0 : index
    %0 = memref.load %arg0[%c0] : memref<8xi32, #tpu.memory_space<smem>>
    %c0_0 = arith.constant 0 : index
    %c0_1 = arith.constant 0 : index
    %1 = vector.load %arg2[%c0_0, %c0_1] : memref<8x32xf32, #tpu.memory_space<vmem>>, vector<8x32xf32>
    %c0_2 = arith.constant 0 : index
    %c0_3 = arith.constant 0 : index
    %2 = vector.load %arg3[%c0_2, %c0_3] : memref<8x32xf32, #tpu.memory_space<vmem>>, vector<8x32xf32>
    %c0_4 = arith.constant 0 : index
    %c0_5 = arith.constant 0 : index
    %3 = vector.load %arg1[%c0_4, %c0_5] : memref<8x128xf32, #tpu.memory_space<vmem>>, vector<8x128xf32>
    %4 = tpu.iota {dimensions = array<i32: 0>} : vector<8x32xi32>
    %5 = tpu.iota {dimensions = array<i32: 1>} : vector<8x32xi32>
    %6 = vector.broadcast %0 : i32 to vector<8x32xi32>
    %7 = arith.addi %6, %4 : vector<8x32xi32>
    %8 = arith.cmpi sle, %5, %7 : vector<8x32xi32>
    %c0_6 = arith.constant 0 : index
    %c0_7 = arith.constant 0 : index
    %c0_8 = arith.constant 0 : index
    %9 = vector.load %arg5[%c0_6, %c0_7, %c0_8] : memref<2x1x128xf32, #tpu.memory_space<vmem>>, vector<1x1x128xf32>
    %10 = vector.shape_cast %9 : vector<1x1x128xf32> to vector<1x128xf32>
    %11 = arith.mulf %3, %3 : vector<8x128xf32>
    %cst = arith.constant dense<0.000000e+00> : vector<8xf32>
    %12 = vector.multi_reduction <add>, %11, %cst [1] : vector<8x128xf32> to vector<8xf32>
    %13 = vector.shape_cast %12 : vector<8xf32> to vector<8x1xf32>
    %cst_9 = arith.constant 1.280000e+02 : f32
    %14 = vector.broadcast %cst_9 : f32 to vector<8x1xf32>
    %15 = arith.divf %13, %14 : vector<8x1xf32>
    %cst_10 = arith.constant 9.99999997E-7 : f32
    %16 = vector.broadcast %cst_10 : f32 to vector<8x1xf32>
    %17 = arith.addf %15, %16 : vector<8x1xf32>
    %18 = math.rsqrt %17 : vector<8x1xf32>
    %19 = vector.broadcast %18 : vector<8x1xf32> to vector<8x128xf32>
    %20 = arith.mulf %3, %19 : vector<8x128xf32>
    %21 = vector.broadcast %10 : vector<1x128xf32> to vector<8x128xf32>
    %22 = arith.mulf %20, %21 : vector<8x128xf32>
    %c0_11 = arith.constant 0 : index
    %c0_12 = arith.constant 0 : index
    %c0_13 = arith.constant 0 : index
    %23 = vector.load %arg6[%c0_11, %c0_12, %c0_13] : memref<2x128x384xbf16, #tpu.memory_space<vmem>>, vector<1x128x384xbf16>
    %24 = vector.shape_cast %23 : vector<1x128x384xbf16> to vector<128x384xbf16>
    %25 = arith.truncf %22 : vector<8x128xf32> to vector<8x128xbf16>
    %cst_14 = arith.constant dense<0.000000e+00> : vector<8x384xf32>
    %26 = tpu.matmul %25, %24, %cst_14 {dimension_numbers = #tpu.dot_dimension_numbers<[1], [0], [0], [1], [0, 0, 1, 1], [], []>} : vector<8x128xbf16>, vector<128x384xbf16>, vector<8x384xf32> -> vector<8x384xf32>
    %27 = vector.extract_strided_slice %26 {offsets = [0, 0], sizes = [8, 32], strides = [1, 1]} : vector<8x384xf32> to vector<8x32xf32>
    %28 = vector.extract_strided_slice %27 {offsets = [0, 16], sizes = [8, 16], strides = [1, 1]} : vector<8x32xf32> to vector<8x16xf32>
    %cst_15 = arith.constant 0.000000e+00 : f32
    %29 = vector.broadcast %cst_15 : f32 to vector<8x16xf32>
    %30 = arith.subf %29, %28 : vector<8x16xf32>
    %31 = vector.extract_strided_slice %27 {offsets = [0, 0], sizes = [8, 16], strides = [1, 1]} : vector<8x32xf32> to vector<8x16xf32>
    %32 = tpu.concatenate %30, %31 in 1 : vector<8x16xf32>, vector<8x16xf32> -> vector<8x32xf32>
    %33 = arith.mulf %27, %1 : vector<8x32xf32>
    %34 = arith.mulf %32, %2 : vector<8x32xf32>
    %35 = arith.addf %33, %34 : vector<8x32xf32>
    %36 = vector.extract_strided_slice %26 {offsets = [0, 128], sizes = [8, 32], strides = [1, 1]} : vector<8x384xf32> to vector<8x32xf32>
    %37 = vector.extract_strided_slice %36 {offsets = [0, 16], sizes = [8, 16], strides = [1, 1]} : vector<8x32xf32> to vector<8x16xf32>
    %cst_16 = arith.constant 0.000000e+00 : f32
    %38 = vector.broadcast %cst_16 : f32 to vector<8x16xf32>
    %39 = arith.subf %38, %37 : vector<8x16xf32>
    %40 = vector.extract_strided_slice %36 {offsets = [0, 0], sizes = [8, 16], strides = [1, 1]} : vector<8x32xf32> to vector<8x16xf32>
    %41 = tpu.concatenate %39, %40 in 1 : vector<8x16xf32>, vector<8x16xf32> -> vector<8x32xf32>
    %42 = arith.mulf %36, %1 : vector<8x32xf32>
    %43 = arith.mulf %41, %2 : vector<8x32xf32>
    %44 = arith.addf %42, %43 : vector<8x32xf32>
    %45 = vector.extract_strided_slice %26 {offsets = [0, 256], sizes = [8, 32], strides = [1, 1]} : vector<8x384xf32> to vector<8x32xf32>
    %46 = vector.extract_strided_slice %26 {offsets = [0, 32], sizes = [8, 32], strides = [1, 1]} : vector<8x384xf32> to vector<8x32xf32>
    %47 = vector.extract_strided_slice %46 {offsets = [0, 16], sizes = [8, 16], strides = [1, 1]} : vector<8x32xf32> to vector<8x16xf32>
    %cst_17 = arith.constant 0.000000e+00 : f32
    %48 = vector.broadcast %cst_17 : f32 to vector<8x16xf32>
    %49 = arith.subf %48, %47 : vector<8x16xf32>
    %50 = vector.extract_strided_slice %46 {offsets = [0, 0], sizes = [8, 16], strides = [1, 1]} : vector<8x32xf32> to vector<8x16xf32>
    %51 = tpu.concatenate %49, %50 in 1 : vector<8x16xf32>, vector<8x16xf32> -> vector<8x32xf32>
    %52 = arith.mulf %46, %1 : vector<8x32xf32>
    %53 = arith.mulf %51, %2 : vector<8x32xf32>
    %54 = arith.addf %52, %53 : vector<8x32xf32>
    %55 = vector.extract_strided_slice %26 {offsets = [0, 160], sizes = [8, 32], strides = [1, 1]} : vector<8x384xf32> to vector<8x32xf32>
    %56 = vector.extract_strided_slice %55 {offsets = [0, 16], sizes = [8, 16], strides = [1, 1]} : vector<8x32xf32> to vector<8x16xf32>
    %cst_18 = arith.constant 0.000000e+00 : f32
    %57 = vector.broadcast %cst_18 : f32 to vector<8x16xf32>
    %58 = arith.subf %57, %56 : vector<8x16xf32>
    %59 = vector.extract_strided_slice %55 {offsets = [0, 0], sizes = [8, 16], strides = [1, 1]} : vector<8x32xf32> to vector<8x16xf32>
    %60 = tpu.concatenate %58, %59 in 1 : vector<8x16xf32>, vector<8x16xf32> -> vector<8x32xf32>
    %61 = arith.mulf %55, %1 : vector<8x32xf32>
    %62 = arith.mulf %60, %2 : vector<8x32xf32>
    %63 = arith.addf %61, %62 : vector<8x32xf32>
    %64 = vector.extract_strided_slice %26 {offsets = [0, 288], sizes = [8, 32], strides = [1, 1]} : vector<8x384xf32> to vector<8x32xf32>
    %65 = vector.extract_strided_slice %26 {offsets = [0, 64], sizes = [8, 32], strides = [1, 1]} : vector<8x384xf32> to vector<8x32xf32>
    %66 = vector.extract_strided_slice %65 {offsets = [0, 16], sizes = [8, 16], strides = [1, 1]} : vector<8x32xf32> to vector<8x16xf32>
    %cst_19 = arith.constant 0.000000e+00 : f32
    %67 = vector.broadcast %cst_19 : f32 to vector<8x16xf32>
    %68 = arith.subf %67, %66 : vector<8x16xf32>
    %69 = vector.extract_strided_slice %65 {offsets = [0, 0], sizes = [8, 16], strides = [1, 1]} : vector<8x32xf32> to vector<8x16xf32>
    %70 = tpu.concatenate %68, %69 in 1 : vector<8x16xf32>, vector<8x16xf32> -> vector<8x32xf32>
    %71 = arith.mulf %65, %1 : vector<8x32xf32>
    %72 = arith.mulf %70, %2 : vector<8x32xf32>
    %73 = arith.addf %71, %72 : vector<8x32xf32>
    %74 = vector.extract_strided_slice %26 {offsets = [0, 192], sizes = [8, 32], strides = [1, 1]} : vector<8x384xf32> to vector<8x32xf32>
    %75 = vector.extract_strided_slice %74 {offsets = [0, 16], sizes = [8, 16], strides = [1, 1]} : vector<8x32xf32> to vector<8x16xf32>
    %cst_20 = arith.constant 0.000000e+00 : f32
    %76 = vector.broadcast %cst_20 : f32 to vector<8x16xf32>
    %77 = arith.subf %76, %75 : vector<8x16xf32>
    %78 = vector.extract_strided_slice %74 {offsets = [0, 0], sizes = [8, 16], strides = [1, 1]} : vector<8x32xf32> to vector<8x16xf32>
    %79 = tpu.concatenate %77, %78 in 1 : vector<8x16xf32>, vector<8x16xf32> -> vector<8x32xf32>
    %80 = arith.mulf %74, %1 : vector<8x32xf32>
    %81 = arith.mulf %79, %2 : vector<8x32xf32>
    %82 = arith.addf %80, %81 : vector<8x32xf32>
    %83 = vector.extract_strided_slice %26 {offsets = [0, 320], sizes = [8, 32], strides = [1, 1]} : vector<8x384xf32> to vector<8x32xf32>
    %84 = vector.extract_strided_slice %26 {offsets = [0, 96], sizes = [8, 32], strides = [1, 1]} : vector<8x384xf32> to vector<8x32xf32>
    %85 = vector.extract_strided_slice %84 {offsets = [0, 16], sizes = [8, 16], strides = [1, 1]} : vector<8x32xf32> to vector<8x16xf32>
    %cst_21 = arith.constant 0.000000e+00 : f32
    %86 = vector.broadcast %cst_21 : f32 to vector<8x16xf32>
    %87 = arith.subf %86, %85 : vector<8x16xf32>
    %88 = vector.extract_strided_slice %84 {offsets = [0, 0], sizes = [8, 16], strides = [1, 1]} : vector<8x32xf32> to vector<8x16xf32>
    %89 = tpu.concatenate %87, %88 in 1 : vector<8x16xf32>, vector<8x16xf32> -> vector<8x32xf32>
    %90 = arith.mulf %84, %1 : vector<8x32xf32>
    %91 = arith.mulf %89, %2 : vector<8x32xf32>
    %92 = arith.addf %90, %91 : vector<8x32xf32>
    %93 = vector.extract_strided_slice %26 {offsets = [0, 224], sizes = [8, 32], strides = [1, 1]} : vector<8x384xf32> to vector<8x32xf32>
    %94 = vector.extract_strided_slice %93 {offsets = [0, 16], sizes = [8, 16], strides = [1, 1]} : vector<8x32xf32> to vector<8x16xf32>
    %cst_22 = arith.constant 0.000000e+00 : f32
    %95 = vector.broadcast %cst_22 : f32 to vector<8x16xf32>
    %96 = arith.subf %95, %94 : vector<8x16xf32>
    %97 = vector.extract_strided_slice %93 {offsets = [0, 0], sizes = [8, 16], strides = [1, 1]} : vector<8x32xf32> to vector<8x16xf32>
    %98 = tpu.concatenate %96, %97 in 1 : vector<8x16xf32>, vector<8x16xf32> -> vector<8x32xf32>
    %99 = arith.mulf %93, %1 : vector<8x32xf32>
    %100 = arith.mulf %98, %2 : vector<8x32xf32>
    %101 = arith.addf %99, %100 : vector<8x32xf32>
    %102 = vector.extract_strided_slice %26 {offsets = [0, 352], sizes = [8, 32], strides = [1, 1]} : vector<8x384xf32> to vector<8x32xf32>
    %103 = tpu.concatenate %44, %63, %82, %101 in 1 : vector<8x32xf32>, vector<8x32xf32>, vector<8x32xf32>, vector<8x32xf32> -> vector<8x128xf32>
    %104 = tpu.concatenate %45, %64, %83, %102 in 1 : vector<8x32xf32>, vector<8x32xf32>, vector<8x32xf32>, vector<8x32xf32> -> vector<8x128xf32>
    %c0_23 = arith.constant 0 : index
    %c0_24 = arith.constant 0 : index
    %c0_25 = arith.constant 0 : index
    %c0_26 = arith.constant 0 : index
    %c0_27 = arith.constant 0 : index
    %105 = vector.load %arg4[%c0_23, %c0_24, %c0_25, %c0_26, %c0_27] : memref<2x2x1x32x128xf32, #tpu.memory_space<vmem>>, vector<1x1x1x32x128xf32>
    %106 = vector.shape_cast %105 : vector<1x1x1x32x128xf32> to vector<32x128xf32>
    %c0_28 = arith.constant 0 : index
    %c0_29 = arith.constant 0 : index
    %c0_30 = arith.constant 0 : index
    %c0_31 = arith.constant 0 : index
    %c0_32 = arith.constant 0 : index
    %107 = vector.load %arg14[%c0_28, %c0_29, %c0_30, %c0_31, %c0_32] : memref<2x2x1x32x128xf32, #tpu.memory_space<vmem>>, vector<1x1x1x32x128xf32>
    %108 = vector.shape_cast %107 : vector<1x1x1x32x128xf32> to vector<32x128xf32>
    %109 = vector.shape_cast %106 : vector<32x128xf32> to vector<1x1x1x32x128xf32>
    tpu.vector_store %arg14[%c0_28, %c0_29, %c0_30, %c0_31, %c0_32], %109 {strides = array<i32>} : memref<2x2x1x32x128xf32, #tpu.memory_space<vmem>>, vector<1x1x1x32x128xf32>,
    %c0_33 = arith.constant 0 : index
    %c1 = arith.constant 1 : index
    %c0_34 = arith.constant 0 : index
    %c0_35 = arith.constant 0 : index
    %c0_36 = arith.constant 0 : index
    %110 = vector.load %arg4[%c0_33, %c1, %c0_34, %c0_35, %c0_36] : memref<2x2x1x32x128xf32, #tpu.memory_space<vmem>>, vector<1x1x1x32x128xf32>
    %111 = vector.shape_cast %110 : vector<1x1x1x32x128xf32> to vector<32x128xf32>
    %c0_37 = arith.constant 0 : index
    %c1_38 = arith.constant 1 : index
    %c0_39 = arith.constant 0 : index
    %c0_40 = arith.constant 0 : index
    %c0_41 = arith.constant 0 : index
    %112 = vector.load %arg14[%c0_37, %c1_38, %c0_39, %c0_40, %c0_41] : memref<2x2x1x32x128xf32, #tpu.memory_space<vmem>>, vector<1x1x1x32x128xf32>
    %113 = vector.shape_cast %112 : vector<1x1x1x32x128xf32> to vector<32x128xf32>
    %114 = vector.shape_cast %111 : vector<32x128xf32> to vector<1x1x1x32x128xf32>
    tpu.vector_store %arg14[%c0_37, %c1_38, %c0_39, %c0_40, %c0_41], %114 {strides = array<i32>} : memref<2x2x1x32x128xf32, #tpu.memory_space<vmem>>, vector<1x1x1x32x128xf32>,
    %c0_i32 = arith.constant 0 : i32
    %c0_i32_42 = arith.constant 0 : i32
    %c0_i32_43 = arith.constant 0 : i32
    %c0_i32_44 = arith.constant 0 : i32
    %c0_i32_45 = arith.constant 0 : i32
    %115 = tpu.memref_slice %arg14[%c0_i32, %c0_i32_42, %c0_i32_43, %c0_i32_44, %c0_i32_45] : memref<2x2x1x32x128xf32, #tpu.memory_space<vmem>> -> memref<1x1x1x32x128xf32, #tpu.memory_space<vmem>>
    %116 = tpu.memref_squeeze %115 : memref<1x1x1x32x128xf32, #tpu.memory_space<vmem>> -> memref<32x128xf32, #tpu.memory_space<vmem>>
    %117 = arith.index_cast %0 : i32 to index
    %c0_46 = arith.constant 0 : index
    %118 = vector.load %116[%117, %c0_46] : memref<32x128xf32, #tpu.memory_space<vmem>>, vector<8x128xf32>
    tpu.vector_store %116[%117, %c0_46], %103 {strides = array<i32>} : memref<32x128xf32, #tpu.memory_space<vmem>>, vector<8x128xf32>,
    %c0_i32_47 = arith.constant 0 : i32
    %c1_i32 = arith.constant 1 : i32
    %c0_i32_48 = arith.constant 0 : i32
    %c0_i32_49 = arith.constant 0 : i32
    %c0_i32_50 = arith.constant 0 : i32
    %119 = tpu.memref_slice %arg14[%c0_i32_47, %c1_i32, %c0_i32_48, %c0_i32_49, %c0_i32_50] : memref<2x2x1x32x128xf32, #tpu.memory_space<vmem>> -> memref<1x1x1x32x128xf32, #tpu.memory_space<vmem>>
    %120 = tpu.memref_squeeze %119 : memref<1x1x1x32x128xf32, #tpu.memory_space<vmem>> -> memref<32x128xf32, #tpu.memory_space<vmem>>
    %121 = arith.index_cast %0 : i32 to index
    %c0_51 = arith.constant 0 : index
    %122 = vector.load %120[%121, %c0_51] : memref<32x128xf32, #tpu.memory_space<vmem>>, vector<8x128xf32>
    tpu.vector_store %120[%121, %c0_51], %104 {strides = array<i32>} : memref<32x128xf32, #tpu.memory_space<vmem>>, vector<8x128xf32>,
    %c0_52 = arith.constant 0 : index
    %c0_53 = arith.constant 0 : index
    %c0_54 = arith.constant 0 : index
    %c0_55 = arith.constant 0 : index
    %c0_56 = arith.constant 0 : index
    %123 = vector.load %arg14[%c0_52, %c0_53, %c0_54, %c0_55, %c0_56] : memref<2x2x1x32x128xf32, #tpu.memory_space<vmem>>, vector<1x1x1x32x128xf32>
    %124 = vector.shape_cast %123 : vector<1x1x1x32x128xf32> to vector<32x128xf32>
    %c0_57 = arith.constant 0 : index
    %c1_58 = arith.constant 1 : index
    %c0_59 = arith.constant 0 : index
    %c0_60 = arith.constant 0 : index
    %c0_61 = arith.constant 0 : index
    %125 = vector.load %arg14[%c0_57, %c1_58, %c0_59, %c0_60, %c0_61] : memref<2x2x1x32x128xf32, #tpu.memory_space<vmem>>, vector<1x1x1x32x128xf32>
    %126 = vector.shape_cast %125 : vector<1x1x1x32x128xf32> to vector<32x128xf32>
    %127 = vector.extract_strided_slice %124 {offsets = [0, 0], sizes = [32, 32], strides = [1, 1]} : vector<32x128xf32> to vector<32x32xf32>
    %128 = vector.extract_strided_slice %126 {offsets = [0, 0], sizes = [32, 32], strides = [1, 1]} : vector<32x128xf32> to vector<32x32xf32>
    %129 = arith.truncf %35 : vector<8x32xf32> to vector<8x32xbf16>
    %130 = arith.truncf %127 : vector<32x32xf32> to vector<32x32xbf16>
    %cst_62 = arith.constant dense<0.000000e+00> : vector<8x32xf32>
    %131 = tpu.matmul %129, %130, %cst_62 {dimension_numbers = #tpu.dot_dimension_numbers<[1], [1], [0], [0], [0, 0, 1, 0], [], []>} : vector<8x32xbf16>, vector<32x32xbf16>, vector<8x32xf32> -> vector<8x32xf32>
    %cst_63 = arith.constant 0.176776692 : f32
    %132 = vector.broadcast %cst_63 : f32 to vector<8x32xf32>
    %133 = arith.mulf %131, %132 : vector<8x32xf32>
    %cst_64 = arith.constant -1.000000e+30 : f32
    %134 = vector.broadcast %cst_64 : f32 to vector<8x32xf32>
    %135 = arith.select %8, %133, %134 : vector<8x32xi1>, vector<8x32xf32>
    %cst_65 = arith.constant dense<0xFF800000> : vector<8xf32>
    %136 = vector.multi_reduction <maximumf>, %135, %cst_65 [1] : vector<8x32xf32> to vector<8xf32>
    %137 = vector.shape_cast %136 : vector<8xf32> to vector<8x1xf32>
    %138 = vector.broadcast %137 : vector<8x1xf32> to vector<8x32xf32>
    %139 = arith.subf %135, %138 : vector<8x32xf32>
    %140 = math.exp %139 : vector<8x32xf32>
    %cst_66 = arith.constant dense<0.000000e+00> : vector<8xf32>
    %141 = vector.multi_reduction <add>, %140, %cst_66 [1] : vector<8x32xf32> to vector<8xf32>
    %142 = vector.shape_cast %141 : vector<8xf32> to vector<8x1xf32>
    %143 = tpu.reciprocal %142 {approx = true} : vector<8x1xf32> -> vector<8x1xf32>
    %144 = vector.broadcast %143 : vector<8x1xf32> to vector<8x32xf32>
    %145 = arith.mulf %140, %144 : vector<8x32xf32>
    %146 = arith.truncf %145 : vector<8x32xf32> to vector<8x32xbf16>
    %147 = arith.truncf %128 : vector<32x32xf32> to vector<32x32xbf16>
    %cst_67 = arith.constant dense<0.000000e+00> : vector<8x32xf32>
    %148 = tpu.matmul %146, %147, %cst_67 {dimension_numbers = #tpu.dot_dimension_numbers<[1], [0], [0], [1], [0, 0, 1, 1], [], []>} : vector<8x32xbf16>, vector<32x32xbf16>, vector<8x32xf32> -> vector<8x32xf32>
    %149 = vector.extract_strided_slice %124 {offsets = [0, 32], sizes = [32, 32], strides = [1, 1]} : vector<32x128xf32> to vector<32x32xf32>
    %150 = vector.extract_strided_slice %126 {offsets = [0, 32], sizes = [32, 32], strides = [1, 1]} : vector<32x128xf32> to vector<32x32xf32>
    %151 = arith.truncf %54 : vector<8x32xf32> to vector<8x32xbf16>
    %152 = arith.truncf %149 : vector<32x32xf32> to vector<32x32xbf16>
    %cst_68 = arith.constant dense<0.000000e+00> : vector<8x32xf32>
    %153 = tpu.matmul %151, %152, %cst_68 {dimension_numbers = #tpu.dot_dimension_numbers<[1], [1], [0], [0], [0, 0, 1, 0], [], []>} : vector<8x32xbf16>, vector<32x32xbf16>, vector<8x32xf32> -> vector<8x32xf32>
    %cst_69 = arith.constant 0.176776692 : f32
    %154 = vector.broadcast %cst_69 : f32 to vector<8x32xf32>
    %155 = arith.mulf %153, %154 : vector<8x32xf32>
    %cst_70 = arith.constant -1.000000e+30 : f32
    %156 = vector.broadcast %cst_70 : f32 to vector<8x32xf32>
    %157 = arith.select %8, %155, %156 : vector<8x32xi1>, vector<8x32xf32>
    %cst_71 = arith.constant dense<0xFF800000> : vector<8xf32>
    %158 = vector.multi_reduction <maximumf>, %157, %cst_71 [1] : vector<8x32xf32> to vector<8xf32>
    %159 = vector.shape_cast %158 : vector<8xf32> to vector<8x1xf32>
    %160 = vector.broadcast %159 : vector<8x1xf32> to vector<8x32xf32>
    %161 = arith.subf %157, %160 : vector<8x32xf32>
    %162 = math.exp %161 : vector<8x32xf32>
    %cst_72 = arith.constant dense<0.000000e+00> : vector<8xf32>
    %163 = vector.multi_reduction <add>, %162, %cst_72 [1] : vector<8x32xf32> to vector<8xf32>
    %164 = vector.shape_cast %163 : vector<8xf32> to vector<8x1xf32>
    %165 = tpu.reciprocal %164 {approx = true} : vector<8x1xf32> -> vector<8x1xf32>
    %166 = vector.broadcast %165 : vector<8x1xf32> to vector<8x32xf32>
    %167 = arith.mulf %162, %166 : vector<8x32xf32>
    %168 = arith.truncf %167 : vector<8x32xf32> to vector<8x32xbf16>
    %169 = arith.truncf %150 : vector<32x32xf32> to vector<32x32xbf16>
    %cst_73 = arith.constant dense<0.000000e+00> : vector<8x32xf32>
    %170 = tpu.matmul %168, %169, %cst_73 {dimension_numbers = #tpu.dot_dimension_numbers<[1], [0], [0], [1], [0, 0, 1, 1], [], []>} : vector<8x32xbf16>, vector<32x32xbf16>, vector<8x32xf32> -> vector<8x32xf32>
    %171 = vector.extract_strided_slice %124 {offsets = [0, 64], sizes = [32, 32], strides = [1, 1]} : vector<32x128xf32> to vector<32x32xf32>
    %172 = vector.extract_strided_slice %126 {offsets = [0, 64], sizes = [32, 32], strides = [1, 1]} : vector<32x128xf32> to vector<32x32xf32>
    %173 = arith.truncf %73 : vector<8x32xf32> to vector<8x32xbf16>
    %174 = arith.truncf %171 : vector<32x32xf32> to vector<32x32xbf16>
    %cst_74 = arith.constant dense<0.000000e+00> : vector<8x32xf32>
    %175 = tpu.matmul %173, %174, %cst_74 {dimension_numbers = #tpu.dot_dimension_numbers<[1], [1], [0], [0], [0, 0, 1, 0], [], []>} : vector<8x32xbf16>, vector<32x32xbf16>, vector<8x32xf32> -> vector<8x32xf32>
    %cst_75 = arith.constant 0.176776692 : f32
    %176 = vector.broadcast %cst_75 : f32 to vector<8x32xf32>
    %177 = arith.mulf %175, %176 : vector<8x32xf32>
    %cst_76 = arith.constant -1.000000e+30 : f32
    %178 = vector.broadcast %cst_76 : f32 to vector<8x32xf32>
    %179 = arith.select %8, %177, %178 : vector<8x32xi1>, vector<8x32xf32>
    %cst_77 = arith.constant dense<0xFF800000> : vector<8xf32>
    %180 = vector.multi_reduction <maximumf>, %179, %cst_77 [1] : vector<8x32xf32> to vector<8xf32>
    %181 = vector.shape_cast %180 : vector<8xf32> to vector<8x1xf32>
    %182 = vector.broadcast %181 : vector<8x1xf32> to vector<8x32xf32>
    %183 = arith.subf %179, %182 : vector<8x32xf32>
    %184 = math.exp %183 : vector<8x32xf32>
    %cst_78 = arith.constant dense<0.000000e+00> : vector<8xf32>
    %185 = vector.multi_reduction <add>, %184, %cst_78 [1] : vector<8x32xf32> to vector<8xf32>
    %186 = vector.shape_cast %185 : vector<8xf32> to vector<8x1xf32>
    %187 = tpu.reciprocal %186 {approx = true} : vector<8x1xf32> -> vector<8x1xf32>
    %188 = vector.broadcast %187 : vector<8x1xf32> to vector<8x32xf32>
    %189 = arith.mulf %184, %188 : vector<8x32xf32>
    %190 = arith.truncf %189 : vector<8x32xf32> to vector<8x32xbf16>
    %191 = arith.truncf %172 : vector<32x32xf32> to vector<32x32xbf16>
    %cst_79 = arith.constant dense<0.000000e+00> : vector<8x32xf32>
    %192 = tpu.matmul %190, %191, %cst_79 {dimension_numbers = #tpu.dot_dimension_numbers<[1], [0], [0], [1], [0, 0, 1, 1], [], []>} : vector<8x32xbf16>, vector<32x32xbf16>, vector<8x32xf32> -> vector<8x32xf32>
    %193 = vector.extract_strided_slice %124 {offsets = [0, 96], sizes = [32, 32], strides = [1, 1]} : vector<32x128xf32> to vector<32x32xf32>
    %194 = vector.extract_strided_slice %126 {offsets = [0, 96], sizes = [32, 32], strides = [1, 1]} : vector<32x128xf32> to vector<32x32xf32>
    %195 = arith.truncf %92 : vector<8x32xf32> to vector<8x32xbf16>
    %196 = arith.truncf %193 : vector<32x32xf32> to vector<32x32xbf16>
    %cst_80 = arith.constant dense<0.000000e+00> : vector<8x32xf32>
    %197 = tpu.matmul %195, %196, %cst_80 {dimension_numbers = #tpu.dot_dimension_numbers<[1], [1], [0], [0], [0, 0, 1, 0], [], []>} : vector<8x32xbf16>, vector<32x32xbf16>, vector<8x32xf32> -> vector<8x32xf32>
    %cst_81 = arith.constant 0.176776692 : f32
    %198 = vector.broadcast %cst_81 : f32 to vector<8x32xf32>
    %199 = arith.mulf %197, %198 : vector<8x32xf32>
    %cst_82 = arith.constant -1.000000e+30 : f32
    %200 = vector.broadcast %cst_82 : f32 to vector<8x32xf32>
    %201 = arith.select %8, %199, %200 : vector<8x32xi1>, vector<8x32xf32>
    %cst_83 = arith.constant dense<0xFF800000> : vector<8xf32>
    %202 = vector.multi_reduction <maximumf>, %201, %cst_83 [1] : vector<8x32xf32> to vector<8xf32>
    %203 = vector.shape_cast %202 : vector<8xf32> to vector<8x1xf32>
    %204 = vector.broadcast %203 : vector<8x1xf32> to vector<8x32xf32>
    %205 = arith.subf %201, %204 : vector<8x32xf32>
    %206 = math.exp %205 : vector<8x32xf32>
    %cst_84 = arith.constant dense<0.000000e+00> : vector<8xf32>
    %207 = vector.multi_reduction <add>, %206, %cst_84 [1] : vector<8x32xf32> to vector<8xf32>
    %208 = vector.shape_cast %207 : vector<8xf32> to vector<8x1xf32>
    %209 = tpu.reciprocal %208 {approx = true} : vector<8x1xf32> -> vector<8x1xf32>
    %210 = vector.broadcast %209 : vector<8x1xf32> to vector<8x32xf32>
    %211 = arith.mulf %206, %210 : vector<8x32xf32>
    %212 = arith.truncf %211 : vector<8x32xf32> to vector<8x32xbf16>
    %213 = arith.truncf %194 : vector<32x32xf32> to vector<32x32xbf16>
    %cst_85 = arith.constant dense<0.000000e+00> : vector<8x32xf32>
    %214 = tpu.matmul %212, %213, %cst_85 {dimension_numbers = #tpu.dot_dimension_numbers<[1], [0], [0], [1], [0, 0, 1, 1], [], []>} : vector<8x32xbf16>, vector<32x32xbf16>, vector<8x32xf32> -> vector<8x32xf32>
    %215 = tpu.concatenate %148, %170, %192, %214 in 1 : vector<8x32xf32>, vector<8x32xf32>, vector<8x32xf32>, vector<8x32xf32> -> vector<8x128xf32>
    %c0_86 = arith.constant 0 : index
    %c0_87 = arith.constant 0 : index
    %c0_88 = arith.constant 0 : index
    %216 = vector.load %arg7[%c0_86, %c0_87, %c0_88] : memref<2x128x128xbf16, #tpu.memory_space<vmem>>, vector<1x128x128xbf16>
    %217 = vector.shape_cast %216 : vector<1x128x128xbf16> to vector<128x128xbf16>
    %218 = arith.truncf %215 : vector<8x128xf32> to vector<8x128xbf16>
    %cst_89 = arith.constant dense<0.000000e+00> : vector<8x128xf32>
    %219 = tpu.matmul %218, %217, %cst_89 {dimension_numbers = #tpu.dot_dimension_numbers<[1], [0], [0], [1], [0, 0, 1, 1], [], []>} : vector<8x128xbf16>, vector<128x128xbf16>, vector<8x128xf32> -> vector<8x128xf32>
    %220 = arith.addf %3, %219 : vector<8x128xf32>
    %c0_90 = arith.constant 0 : index
    %c0_91 = arith.constant 0 : index
    %c0_92 = arith.constant 0 : index
    %221 = vector.load %arg8[%c0_90, %c0_91, %c0_92] : memref<2x1x128xf32, #tpu.memory_space<vmem>>, vector<1x1x128xf32>
    %222 = vector.shape_cast %221 : vector<1x1x128xf32> to vector<1x128xf32>
    %223 = arith.mulf %220, %220 : vector<8x128xf32>
    %cst_93 = arith.constant dense<0.000000e+00> : vector<8xf32>
    %224 = vector.multi_reduction <add>, %223, %cst_93 [1] : vector<8x128xf32> to vector<8xf32>
    %225 = vector.shape_cast %224 : vector<8xf32> to vector<8x1xf32>
    %cst_94 = arith.constant 1.280000e+02 : f32
    %226 = vector.broadcast %cst_94 : f32 to vector<8x1xf32>
    %227 = arith.divf %225, %226 : vector<8x1xf32>
    %cst_95 = arith.constant 9.99999997E-7 : f32
    %228 = vector.broadcast %cst_95 : f32 to vector<8x1xf32>
    %229 = arith.addf %227, %228 : vector<8x1xf32>
    %230 = math.rsqrt %229 : vector<8x1xf32>
    %231 = vector.broadcast %230 : vector<8x1xf32> to vector<8x128xf32>
    %232 = arith.mulf %220, %231 : vector<8x128xf32>
    %233 = vector.broadcast %222 : vector<1x128xf32> to vector<8x128xf32>
    %234 = arith.mulf %232, %233 : vector<8x128xf32>
    %c0_96 = arith.constant 0 : index
    %c0_97 = arith.constant 0 : index
    %c0_98 = arith.constant 0 : index
    %235 = vector.load %arg9[%c0_96, %c0_97, %c0_98] : memref<2x128x512xbf16, #tpu.memory_space<vmem>>, vector<1x128x512xbf16>
    %236 = vector.shape_cast %235 : vector<1x128x512xbf16> to vector<128x512xbf16>
    %237 = arith.truncf %234 : vector<8x128xf32> to vector<8x128xbf16>
    %cst_99 = arith.constant dense<0.000000e+00> : vector<8x512xf32>
    %238 = tpu.matmul %237, %236, %cst_99 {dimension_numbers = #tpu.dot_dimension_numbers<[1], [0], [0], [1], [0, 0, 1, 1], [], []>} : vector<8x128xbf16>, vector<128x512xbf16>, vector<8x512xf32> -> vector<8x512xf32>
    %239 = vector.extract_strided_slice %238 {offsets = [0, 0], sizes = [8, 256], strides = [1, 1]} : vector<8x512xf32> to vector<8x256xf32>
    %240 = vector.extract_strided_slice %238 {offsets = [0, 256], sizes = [8, 256], strides = [1, 1]} : vector<8x512xf32> to vector<8x256xf32>
    %241 = arith.negf %239 : vector<8x256xf32>
    %242 = math.exp %241 : vector<8x256xf32>
    %cst_100 = arith.constant 1.000000e+00 : f32
    %243 = vector.broadcast %cst_100 : f32 to vector<8x256xf32>
    %244 = arith.addf %243, %242 : vector<8x256xf32>
    %245 = arith.divf %243, %244 : vector<8x256xf32>
    %246 = arith.mulf %239, %245 : vector<8x256xf32>
    %247 = arith.mulf %246, %240 : vector<8x256xf32>
    %c0_101 = arith.constant 0 : index
    %c0_102 = arith.constant 0 : index
    %c0_103 = arith.constant 0 : index
    %248 = vector.load %arg10[%c0_101, %c0_102, %c0_103] : memref<2x256x128xbf16, #tpu.memory_space<vmem>>, vector<1x256x128xbf16>
    %249 = vector.shape_cast %248 : vector<1x256x128xbf16> to vector<256x128xbf16>
    %250 = arith.truncf %247 : vector<8x256xf32> to vector<8x256xbf16>
    %cst_104 = arith.constant dense<0.000000e+00> : vector<8x128xf32>
    %251 = tpu.matmul %250, %249, %cst_104 {dimension_numbers = #tpu.dot_dimension_numbers<[1], [0], [0], [1], [0, 0, 1, 1], [], []>} : vector<8x256xbf16>, vector<256x128xbf16>, vector<8x128xf32> -> vector<8x128xf32>
    %252 = arith.addf %220, %251 : vector<8x128xf32>
    %c1_105 = arith.constant 1 : index
    %c0_106 = arith.constant 0 : index
    %c0_107 = arith.constant 0 : index
    %253 = vector.load %arg5[%c1_105, %c0_106, %c0_107] : memref<2x1x128xf32, #tpu.memory_space<vmem>>, vector<1x1x128xf32>
    %254 = vector.shape_cast %253 : vector<1x1x128xf32> to vector<1x128xf32>
    %255 = arith.mulf %252, %252 : vector<8x128xf32>
    %cst_108 = arith.constant dense<0.000000e+00> : vector<8xf32>
    %256 = vector.multi_reduction <add>, %255, %cst_108 [1] : vector<8x128xf32> to vector<8xf32>
    %257 = vector.shape_cast %256 : vector<8xf32> to vector<8x1xf32>
    %cst_109 = arith.constant 1.280000e+02 : f32
    %258 = vector.broadcast %cst_109 : f32 to vector<8x1xf32>
    %259 = arith.divf %257, %258 : vector<8x1xf32>
    %cst_110 = arith.constant 9.99999997E-7 : f32
    %260 = vector.broadcast %cst_110 : f32 to vector<8x1xf32>
    %261 = arith.addf %259, %260 : vector<8x1xf32>
    %262 = math.rsqrt %261 : vector<8x1xf32>
    %263 = vector.broadcast %262 : vector<8x1xf32> to vector<8x128xf32>
    %264 = arith.mulf %252, %263 : vector<8x128xf32>
    %265 = vector.broadcast %254 : vector<1x128xf32> to vector<8x128xf32>
    %266 = arith.mulf %264, %265 : vector<8x128xf32>
    %c1_111 = arith.constant 1 : index
    %c0_112 = arith.constant 0 : index
    %c0_113 = arith.constant 0 : index
    %267 = vector.load %arg6[%c1_111, %c0_112, %c0_113] : memref<2x128x384xbf16, #tpu.memory_space<vmem>>, vector<1x128x384xbf16>
    %268 = vector.shape_cast %267 : vector<1x128x384xbf16> to vector<128x384xbf16>
    %269 = arith.truncf %266 : vector<8x128xf32> to vector<8x128xbf16>
    %cst_114 = arith.constant dense<0.000000e+00> : vector<8x384xf32>
    %270 = tpu.matmul %269, %268, %cst_114 {dimension_numbers = #tpu.dot_dimension_numbers<[1], [0], [0], [1], [0, 0, 1, 1], [], []>} : vector<8x128xbf16>, vector<128x384xbf16>, vector<8x384xf32> -> vector<8x384xf32>
    %271 = vector.extract_strided_slice %270 {offsets = [0, 0], sizes = [8, 32], strides = [1, 1]} : vector<8x384xf32> to vector<8x32xf32>
    %272 = vector.extract_strided_slice %271 {offsets = [0, 16], sizes = [8, 16], strides = [1, 1]} : vector<8x32xf32> to vector<8x16xf32>
    %cst_115 = arith.constant 0.000000e+00 : f32
    %273 = vector.broadcast %cst_115 : f32 to vector<8x16xf32>
    %274 = arith.subf %273, %272 : vector<8x16xf32>
    %275 = vector.extract_strided_slice %271 {offsets = [0, 0], sizes = [8, 16], strides = [1, 1]} : vector<8x32xf32> to vector<8x16xf32>
    %276 = tpu.concatenate %274, %275 in 1 : vector<8x16xf32>, vector<8x16xf32> -> vector<8x32xf32>
    %277 = arith.mulf %271, %1 : vector<8x32xf32>
    %278 = arith.mulf %276, %2 : vector<8x32xf32>
    %279 = arith.addf %277, %278 : vector<8x32xf32>
    %280 = vector.extract_strided_slice %270 {offsets = [0, 128], sizes = [8, 32], strides = [1, 1]} : vector<8x384xf32> to vector<8x32xf32>
    %281 = vector.extract_strided_slice %280 {offsets = [0, 16], sizes = [8, 16], strides = [1, 1]} : vector<8x32xf32> to vector<8x16xf32>
    %cst_116 = arith.constant 0.000000e+00 : f32
    %282 = vector.broadcast %cst_116 : f32 to vector<8x16xf32>
    %283 = arith.subf %282, %281 : vector<8x16xf32>
    %284 = vector.extract_strided_slice %280 {offsets = [0, 0], sizes = [8, 16], strides = [1, 1]} : vector<8x32xf32> to vector<8x16xf32>
    %285 = tpu.concatenate %283, %284 in 1 : vector<8x16xf32>, vector<8x16xf32> -> vector<8x32xf32>
    %286 = arith.mulf %280, %1 : vector<8x32xf32>
    %287 = arith.mulf %285, %2 : vector<8x32xf32>
    %288 = arith.addf %286, %287 : vector<8x32xf32>
    %289 = vector.extract_strided_slice %270 {offsets = [0, 256], sizes = [8, 32], strides = [1, 1]} : vector<8x384xf32> to vector<8x32xf32>
    %290 = vector.extract_strided_slice %270 {offsets = [0, 32], sizes = [8, 32], strides = [1, 1]} : vector<8x384xf32> to vector<8x32xf32>
    %291 = vector.extract_strided_slice %290 {offsets = [0, 16], sizes = [8, 16], strides = [1, 1]} : vector<8x32xf32> to vector<8x16xf32>
    %cst_117 = arith.constant 0.000000e+00 : f32
    %292 = vector.broadcast %cst_117 : f32 to vector<8x16xf32>
    %293 = arith.subf %292, %291 : vector<8x16xf32>
    %294 = vector.extract_strided_slice %290 {offsets = [0, 0], sizes = [8, 16], strides = [1, 1]} : vector<8x32xf32> to vector<8x16xf32>
    %295 = tpu.concatenate %293, %294 in 1 : vector<8x16xf32>, vector<8x16xf32> -> vector<8x32xf32>
    %296 = arith.mulf %290, %1 : vector<8x32xf32>
    %297 = arith.mulf %295, %2 : vector<8x32xf32>
    %298 = arith.addf %296, %297 : vector<8x32xf32>
    %299 = vector.extract_strided_slice %270 {offsets = [0, 160], sizes = [8, 32], strides = [1, 1]} : vector<8x384xf32> to vector<8x32xf32>
    %300 = vector.extract_strided_slice %299 {offsets = [0, 16], sizes = [8, 16], strides = [1, 1]} : vector<8x32xf32> to vector<8x16xf32>
    %cst_118 = arith.constant 0.000000e+00 : f32
    %301 = vector.broadcast %cst_118 : f32 to vector<8x16xf32>
    %302 = arith.subf %301, %300 : vector<8x16xf32>
    %303 = vector.extract_strided_slice %299 {offsets = [0, 0], sizes = [8, 16], strides = [1, 1]} : vector<8x32xf32> to vector<8x16xf32>
    %304 = tpu.concatenate %302, %303 in 1 : vector<8x16xf32>, vector<8x16xf32> -> vector<8x32xf32>
    %305 = arith.mulf %299, %1 : vector<8x32xf32>
    %306 = arith.mulf %304, %2 : vector<8x32xf32>
    %307 = arith.addf %305, %306 : vector<8x32xf32>
    %308 = vector.extract_strided_slice %270 {offsets = [0, 288], sizes = [8, 32], strides = [1, 1]} : vector<8x384xf32> to vector<8x32xf32>
    %309 = vector.extract_strided_slice %270 {offsets = [0, 64], sizes = [8, 32], strides = [1, 1]} : vector<8x384xf32> to vector<8x32xf32>
    %310 = vector.extract_strided_slice %309 {offsets = [0, 16], sizes = [8, 16], strides = [1, 1]} : vector<8x32xf32> to vector<8x16xf32>
    %cst_119 = arith.constant 0.000000e+00 : f32
    %311 = vector.broadcast %cst_119 : f32 to vector<8x16xf32>
    %312 = arith.subf %311, %310 : vector<8x16xf32>
    %313 = vector.extract_strided_slice %309 {offsets = [0, 0], sizes = [8, 16], strides = [1, 1]} : vector<8x32xf32> to vector<8x16xf32>
    %314 = tpu.concatenate %312, %313 in 1 : vector<8x16xf32>, vector<8x16xf32> -> vector<8x32xf32>
    %315 = arith.mulf %309, %1 : vector<8x32xf32>
    %316 = arith.mulf %314, %2 : vector<8x32xf32>
    %317 = arith.addf %315, %316 : vector<8x32xf32>
    %318 = vector.extract_strided_slice %270 {offsets = [0, 192], sizes = [8, 32], strides = [1, 1]} : vector<8x384xf32> to vector<8x32xf32>
    %319 = vector.extract_strided_slice %318 {offsets = [0, 16], sizes = [8, 16], strides = [1, 1]} : vector<8x32xf32> to vector<8x16xf32>
    %cst_120 = arith.constant 0.000000e+00 : f32
    %320 = vector.broadcast %cst_120 : f32 to vector<8x16xf32>
    %321 = arith.subf %320, %319 : vector<8x16xf32>
    %322 = vector.extract_strided_slice %318 {offsets = [0, 0], sizes = [8, 16], strides = [1, 1]} : vector<8x32xf32> to vector<8x16xf32>
    %323 = tpu.concatenate %321, %322 in 1 : vector<8x16xf32>, vector<8x16xf32> -> vector<8x32xf32>
    %324 = arith.mulf %318, %1 : vector<8x32xf32>
    %325 = arith.mulf %323, %2 : vector<8x32xf32>
    %326 = arith.addf %324, %325 : vector<8x32xf32>
    %327 = vector.extract_strided_slice %270 {offsets = [0, 320], sizes = [8, 32], strides = [1, 1]} : vector<8x384xf32> to vector<8x32xf32>
    %328 = vector.extract_strided_slice %270 {offsets = [0, 96], sizes = [8, 32], strides = [1, 1]} : vector<8x384xf32> to vector<8x32xf32>
    %329 = vector.extract_strided_slice %328 {offsets = [0, 16], sizes = [8, 16], strides = [1, 1]} : vector<8x32xf32> to vector<8x16xf32>
    %cst_121 = arith.constant 0.000000e+00 : f32
    %330 = vector.broadcast %cst_121 : f32 to vector<8x16xf32>
    %331 = arith.subf %330, %329 : vector<8x16xf32>
    %332 = vector.extract_strided_slice %328 {offsets = [0, 0], sizes = [8, 16], strides = [1, 1]} : vector<8x32xf32> to vector<8x16xf32>
    %333 = tpu.concatenate %331, %332 in 1 : vector<8x16xf32>, vector<8x16xf32> -> vector<8x32xf32>
    %334 = arith.mulf %328, %1 : vector<8x32xf32>
    %335 = arith.mulf %333, %2 : vector<8x32xf32>
    %336 = arith.addf %334, %335 : vector<8x32xf32>
    %337 = vector.extract_strided_slice %270 {offsets = [0, 224], sizes = [8, 32], strides = [1, 1]} : vector<8x384xf32> to vector<8x32xf32>
    %338 = vector.extract_strided_slice %337 {offsets = [0, 16], sizes = [8, 16], strides = [1, 1]} : vector<8x32xf32> to vector<8x16xf32>
    %cst_122 = arith.constant 0.000000e+00 : f32
    %339 = vector.broadcast %cst_122 : f32 to vector<8x16xf32>
    %340 = arith.subf %339, %338 : vector<8x16xf32>
    %341 = vector.extract_strided_slice %337 {offsets = [0, 0], sizes = [8, 16], strides = [1, 1]} : vector<8x32xf32> to vector<8x16xf32>
    %342 = tpu.concatenate %340, %341 in 1 : vector<8x16xf32>, vector<8x16xf32> -> vector<8x32xf32>
    %343 = arith.mulf %337, %1 : vector<8x32xf32>
    %344 = arith.mulf %342, %2 : vector<8x32xf32>
    %345 = arith.addf %343, %344 : vector<8x32xf32>
    %346 = vector.extract_strided_slice %270 {offsets = [0, 352], sizes = [8, 32], strides = [1, 1]} : vector<8x384xf32> to vector<8x32xf32>
    %347 = tpu.concatenate %288, %307, %326, %345 in 1 : vector<8x32xf32>, vector<8x32xf32>, vector<8x32xf32>, vector<8x32xf32> -> vector<8x128xf32>
    %348 = tpu.concatenate %289, %308, %327, %346 in 1 : vector<8x32xf32>, vector<8x32xf32>, vector<8x32xf32>, vector<8x32xf32> -> vector<8x128xf32>
    %c1_123 = arith.constant 1 : index
    %c0_124 = arith.constant 0 : index
    %c0_125 = arith.constant 0 : index
    %c0_126 = arith.constant 0 : index
    %c0_127 = arith.constant 0 : index
    %349 = vector.load %arg4[%c1_123, %c0_124, %c0_125, %c0_126, %c0_127] : memref<2x2x1x32x128xf32, #tpu.memory_space<vmem>>, vector<1x1x1x32x128xf32>
    %350 = vector.shape_cast %349 : vector<1x1x1x32x128xf32> to vector<32x128xf32>
    %c1_128 = arith.constant 1 : index
    %c0_129 = arith.constant 0 : index
    %c0_130 = arith.constant 0 : index
    %c0_131 = arith.constant 0 : index
    %c0_132 = arith.constant 0 : index
    %351 = vector.load %arg14[%c1_128, %c0_129, %c0_130, %c0_131, %c0_132] : memref<2x2x1x32x128xf32, #tpu.memory_space<vmem>>, vector<1x1x1x32x128xf32>
    %352 = vector.shape_cast %351 : vector<1x1x1x32x128xf32> to vector<32x128xf32>
    %353 = vector.shape_cast %350 : vector<32x128xf32> to vector<1x1x1x32x128xf32>
    tpu.vector_store %arg14[%c1_128, %c0_129, %c0_130, %c0_131, %c0_132], %353 {strides = array<i32>} : memref<2x2x1x32x128xf32, #tpu.memory_space<vmem>>, vector<1x1x1x32x128xf32>,
    %c1_133 = arith.constant 1 : index
    %c1_134 = arith.constant 1 : index
    %c0_135 = arith.constant 0 : index
    %c0_136 = arith.constant 0 : index
    %c0_137 = arith.constant 0 : index
    %354 = vector.load %arg4[%c1_133, %c1_134, %c0_135, %c0_136, %c0_137] : memref<2x2x1x32x128xf32, #tpu.memory_space<vmem>>, vector<1x1x1x32x128xf32>
    %355 = vector.shape_cast %354 : vector<1x1x1x32x128xf32> to vector<32x128xf32>
    %c1_138 = arith.constant 1 : index
    %c1_139 = arith.constant 1 : index
    %c0_140 = arith.constant 0 : index
    %c0_141 = arith.constant 0 : index
    %c0_142 = arith.constant 0 : index
    %356 = vector.load %arg14[%c1_138, %c1_139, %c0_140, %c0_141, %c0_142] : memref<2x2x1x32x128xf32, #tpu.memory_space<vmem>>, vector<1x1x1x32x128xf32>
    %357 = vector.shape_cast %356 : vector<1x1x1x32x128xf32> to vector<32x128xf32>
    %358 = vector.shape_cast %355 : vector<32x128xf32> to vector<1x1x1x32x128xf32>
    tpu.vector_store %arg14[%c1_138, %c1_139, %c0_140, %c0_141, %c0_142], %358 {strides = array<i32>} : memref<2x2x1x32x128xf32, #tpu.memory_space<vmem>>, vector<1x1x1x32x128xf32>,
    %c1_i32_143 = arith.constant 1 : i32
    %c0_i32_144 = arith.constant 0 : i32
    %c0_i32_145 = arith.constant 0 : i32
    %c0_i32_146 = arith.constant 0 : i32
    %c0_i32_147 = arith.constant 0 : i32
    %359 = tpu.memref_slice %arg14[%c1_i32_143, %c0_i32_144, %c0_i32_145, %c0_i32_146, %c0_i32_147] : memref<2x2x1x32x128xf32, #tpu.memory_space<vmem>> -> memref<1x1x1x32x128xf32, #tpu.memory_space<vmem>>
    %360 = tpu.memref_squeeze %359 : memref<1x1x1x32x128xf32, #tpu.memory_space<vmem>> -> memref<32x128xf32, #tpu.memory_space<vmem>>
    %361 = arith.index_cast %0 : i32 to index
    %c0_148 = arith.constant 0 : index
    %362 = vector.load %360[%361, %c0_148] : memref<32x128xf32, #tpu.memory_space<vmem>>, vector<8x128xf32>
    tpu.vector_store %360[%361, %c0_148], %347 {strides = array<i32>} : memref<32x128xf32, #tpu.memory_space<vmem>>, vector<8x128xf32>,
    %c1_i32_149 = arith.constant 1 : i32
    %c1_i32_150 = arith.constant 1 : i32
    %c0_i32_151 = arith.constant 0 : i32
    %c0_i32_152 = arith.constant 0 : i32
    %c0_i32_153 = arith.constant 0 : i32
    %363 = tpu.memref_slice %arg14[%c1_i32_149, %c1_i32_150, %c0_i32_151, %c0_i32_152, %c0_i32_153] : memref<2x2x1x32x128xf32, #tpu.memory_space<vmem>> -> memref<1x1x1x32x128xf32, #tpu.memory_space<vmem>>
    %364 = tpu.memref_squeeze %363 : memref<1x1x1x32x128xf32, #tpu.memory_space<vmem>> -> memref<32x128xf32, #tpu.memory_space<vmem>>
    %365 = arith.index_cast %0 : i32 to index
    %c0_154 = arith.constant 0 : index
    %366 = vector.load %364[%365, %c0_154] : memref<32x128xf32, #tpu.memory_space<vmem>>, vector<8x128xf32>
    tpu.vector_store %364[%365, %c0_154], %348 {strides = array<i32>} : memref<32x128xf32, #tpu.memory_space<vmem>>, vector<8x128xf32>,
    %c1_155 = arith.constant 1 : index
    %c0_156 = arith.constant 0 : index
    %c0_157 = arith.constant 0 : index
    %c0_158 = arith.constant 0 : index
    %c0_159 = arith.constant 0 : index
    %367 = vector.load %arg14[%c1_155, %c0_156, %c0_157, %c0_158, %c0_159] : memref<2x2x1x32x128xf32, #tpu.memory_space<vmem>>, vector<1x1x1x32x128xf32>
    %368 = vector.shape_cast %367 : vector<1x1x1x32x128xf32> to vector<32x128xf32>
    %c1_160 = arith.constant 1 : index
    %c1_161 = arith.constant 1 : index
    %c0_162 = arith.constant 0 : index
    %c0_163 = arith.constant 0 : index
    %c0_164 = arith.constant 0 : index
    %369 = vector.load %arg14[%c1_160, %c1_161, %c0_162, %c0_163, %c0_164] : memref<2x2x1x32x128xf32, #tpu.memory_space<vmem>>, vector<1x1x1x32x128xf32>
    %370 = vector.shape_cast %369 : vector<1x1x1x32x128xf32> to vector<32x128xf32>
    %371 = vector.extract_strided_slice %368 {offsets = [0, 0], sizes = [32, 32], strides = [1, 1]} : vector<32x128xf32> to vector<32x32xf32>
    %372 = vector.extract_strided_slice %370 {offsets = [0, 0], sizes = [32, 32], strides = [1, 1]} : vector<32x128xf32> to vector<32x32xf32>
    %373 = arith.truncf %279 : vector<8x32xf32> to vector<8x32xbf16>
    %374 = arith.truncf %371 : vector<32x32xf32> to vector<32x32xbf16>
    %cst_165 = arith.constant dense<0.000000e+00> : vector<8x32xf32>
    %375 = tpu.matmul %373, %374, %cst_165 {dimension_numbers = #tpu.dot_dimension_numbers<[1], [1], [0], [0], [0, 0, 1, 0], [], []>} : vector<8x32xbf16>, vector<32x32xbf16>, vector<8x32xf32> -> vector<8x32xf32>
    %cst_166 = arith.constant 0.176776692 : f32
    %376 = vector.broadcast %cst_166 : f32 to vector<8x32xf32>
    %377 = arith.mulf %375, %376 : vector<8x32xf32>
    %cst_167 = arith.constant -1.000000e+30 : f32
    %378 = vector.broadcast %cst_167 : f32 to vector<8x32xf32>
    %379 = arith.select %8, %377, %378 : vector<8x32xi1>, vector<8x32xf32>
    %cst_168 = arith.constant dense<0xFF800000> : vector<8xf32>
    %380 = vector.multi_reduction <maximumf>, %379, %cst_168 [1] : vector<8x32xf32> to vector<8xf32>
    %381 = vector.shape_cast %380 : vector<8xf32> to vector<8x1xf32>
    %382 = vector.broadcast %381 : vector<8x1xf32> to vector<8x32xf32>
    %383 = arith.subf %379, %382 : vector<8x32xf32>
    %384 = math.exp %383 : vector<8x32xf32>
    %cst_169 = arith.constant dense<0.000000e+00> : vector<8xf32>
    %385 = vector.multi_reduction <add>, %384, %cst_169 [1] : vector<8x32xf32> to vector<8xf32>
    %386 = vector.shape_cast %385 : vector<8xf32> to vector<8x1xf32>
    %387 = tpu.reciprocal %386 {approx = true} : vector<8x1xf32> -> vector<8x1xf32>
    %388 = vector.broadcast %387 : vector<8x1xf32> to vector<8x32xf32>
    %389 = arith.mulf %384, %388 : vector<8x32xf32>
    %390 = arith.truncf %389 : vector<8x32xf32> to vector<8x32xbf16>
    %391 = arith.truncf %372 : vector<32x32xf32> to vector<32x32xbf16>
    %cst_170 = arith.constant dense<0.000000e+00> : vector<8x32xf32>
    %392 = tpu.matmul %390, %391, %cst_170 {dimension_numbers = #tpu.dot_dimension_numbers<[1], [0], [0], [1], [0, 0, 1, 1], [], []>} : vector<8x32xbf16>, vector<32x32xbf16>, vector<8x32xf32> -> vector<8x32xf32>
    %393 = vector.extract_strided_slice %368 {offsets = [0, 32], sizes = [32, 32], strides = [1, 1]} : vector<32x128xf32> to vector<32x32xf32>
    %394 = vector.extract_strided_slice %370 {offsets = [0, 32], sizes = [32, 32], strides = [1, 1]} : vector<32x128xf32> to vector<32x32xf32>
    %395 = arith.truncf %298 : vector<8x32xf32> to vector<8x32xbf16>
    %396 = arith.truncf %393 : vector<32x32xf32> to vector<32x32xbf16>
    %cst_171 = arith.constant dense<0.000000e+00> : vector<8x32xf32>
    %397 = tpu.matmul %395, %396, %cst_171 {dimension_numbers = #tpu.dot_dimension_numbers<[1], [1], [0], [0], [0, 0, 1, 0], [], []>} : vector<8x32xbf16>, vector<32x32xbf16>, vector<8x32xf32> -> vector<8x32xf32>
    %cst_172 = arith.constant 0.176776692 : f32
    %398 = vector.broadcast %cst_172 : f32 to vector<8x32xf32>
    %399 = arith.mulf %397, %398 : vector<8x32xf32>
    %cst_173 = arith.constant -1.000000e+30 : f32
    %400 = vector.broadcast %cst_173 : f32 to vector<8x32xf32>
    %401 = arith.select %8, %399, %400 : vector<8x32xi1>, vector<8x32xf32>
    %cst_174 = arith.constant dense<0xFF800000> : vector<8xf32>
    %402 = vector.multi_reduction <maximumf>, %401, %cst_174 [1] : vector<8x32xf32> to vector<8xf32>
    %403 = vector.shape_cast %402 : vector<8xf32> to vector<8x1xf32>
    %404 = vector.broadcast %403 : vector<8x1xf32> to vector<8x32xf32>
    %405 = arith.subf %401, %404 : vector<8x32xf32>
    %406 = math.exp %405 : vector<8x32xf32>
    %cst_175 = arith.constant dense<0.000000e+00> : vector<8xf32>
    %407 = vector.multi_reduction <add>, %406, %cst_175 [1] : vector<8x32xf32> to vector<8xf32>
    %408 = vector.shape_cast %407 : vector<8xf32> to vector<8x1xf32>
    %409 = tpu.reciprocal %408 {approx = true} : vector<8x1xf32> -> vector<8x1xf32>
    %410 = vector.broadcast %409 : vector<8x1xf32> to vector<8x32xf32>
    %411 = arith.mulf %406, %410 : vector<8x32xf32>
    %412 = arith.truncf %411 : vector<8x32xf32> to vector<8x32xbf16>
    %413 = arith.truncf %394 : vector<32x32xf32> to vector<32x32xbf16>
    %cst_176 = arith.constant dense<0.000000e+00> : vector<8x32xf32>
    %414 = tpu.matmul %412, %413, %cst_176 {dimension_numbers = #tpu.dot_dimension_numbers<[1], [0], [0], [1], [0, 0, 1, 1], [], []>} : vector<8x32xbf16>, vector<32x32xbf16>, vector<8x32xf32> -> vector<8x32xf32>
    %415 = vector.extract_strided_slice %368 {offsets = [0, 64], sizes = [32, 32], strides = [1, 1]} : vector<32x128xf32> to vector<32x32xf32>
    %416 = vector.extract_strided_slice %370 {offsets = [0, 64], sizes = [32, 32], strides = [1, 1]} : vector<32x128xf32> to vector<32x32xf32>
    %417 = arith.truncf %317 : vector<8x32xf32> to vector<8x32xbf16>
    %418 = arith.truncf %415 : vector<32x32xf32> to vector<32x32xbf16>
    %cst_177 = arith.constant dense<0.000000e+00> : vector<8x32xf32>
    %419 = tpu.matmul %417, %418, %cst_177 {dimension_numbers = #tpu.dot_dimension_numbers<[1], [1], [0], [0], [0, 0, 1, 0], [], []>} : vector<8x32xbf16>, vector<32x32xbf16>, vector<8x32xf32> -> vector<8x32xf32>
    %cst_178 = arith.constant 0.176776692 : f32
    %420 = vector.broadcast %cst_178 : f32 to vector<8x32xf32>
    %421 = arith.mulf %419, %420 : vector<8x32xf32>
    %cst_179 = arith.constant -1.000000e+30 : f32
    %422 = vector.broadcast %cst_179 : f32 to vector<8x32xf32>
    %423 = arith.select %8, %421, %422 : vector<8x32xi1>, vector<8x32xf32>
    %cst_180 = arith.constant dense<0xFF800000> : vector<8xf32>
    %424 = vector.multi_reduction <maximumf>, %423, %cst_180 [1] : vector<8x32xf32> to vector<8xf32>
    %425 = vector.shape_cast %424 : vector<8xf32> to vector<8x1xf32>
    %426 = vector.broadcast %425 : vector<8x1xf32> to vector<8x32xf32>
    %427 = arith.subf %423, %426 : vector<8x32xf32>
    %428 = math.exp %427 : vector<8x32xf32>
    %cst_181 = arith.constant dense<0.000000e+00> : vector<8xf32>
    %429 = vector.multi_reduction <add>, %428, %cst_181 [1] : vector<8x32xf32> to vector<8xf32>
    %430 = vector.shape_cast %429 : vector<8xf32> to vector<8x1xf32>
    %431 = tpu.reciprocal %430 {approx = true} : vector<8x1xf32> -> vector<8x1xf32>
    %432 = vector.broadcast %431 : vector<8x1xf32> to vector<8x32xf32>
    %433 = arith.mulf %428, %432 : vector<8x32xf32>
    %434 = arith.truncf %433 : vector<8x32xf32> to vector<8x32xbf16>
    %435 = arith.truncf %416 : vector<32x32xf32> to vector<32x32xbf16>
    %cst_182 = arith.constant dense<0.000000e+00> : vector<8x32xf32>
    %436 = tpu.matmul %434, %435, %cst_182 {dimension_numbers = #tpu.dot_dimension_numbers<[1], [0], [0], [1], [0, 0, 1, 1], [], []>} : vector<8x32xbf16>, vector<32x32xbf16>, vector<8x32xf32> -> vector<8x32xf32>
    %437 = vector.extract_strided_slice %368 {offsets = [0, 96], sizes = [32, 32], strides = [1, 1]} : vector<32x128xf32> to vector<32x32xf32>
    %438 = vector.extract_strided_slice %370 {offsets = [0, 96], sizes = [32, 32], strides = [1, 1]} : vector<32x128xf32> to vector<32x32xf32>
    %439 = arith.truncf %336 : vector<8x32xf32> to vector<8x32xbf16>
    %440 = arith.truncf %437 : vector<32x32xf32> to vector<32x32xbf16>
    %cst_183 = arith.constant dense<0.000000e+00> : vector<8x32xf32>
    %441 = tpu.matmul %439, %440, %cst_183 {dimension_numbers = #tpu.dot_dimension_numbers<[1], [1], [0], [0], [0, 0, 1, 0], [], []>} : vector<8x32xbf16>, vector<32x32xbf16>, vector<8x32xf32> -> vector<8x32xf32>
    %cst_184 = arith.constant 0.176776692 : f32
    %442 = vector.broadcast %cst_184 : f32 to vector<8x32xf32>
    %443 = arith.mulf %441, %442 : vector<8x32xf32>
    %cst_185 = arith.constant -1.000000e+30 : f32
    %444 = vector.broadcast %cst_185 : f32 to vector<8x32xf32>
    %445 = arith.select %8, %443, %444 : vector<8x32xi1>, vector<8x32xf32>
    %cst_186 = arith.constant dense<0xFF800000> : vector<8xf32>
    %446 = vector.multi_reduction <maximumf>, %445, %cst_186 [1] : vector<8x32xf32> to vector<8xf32>
    %447 = vector.shape_cast %446 : vector<8xf32> to vector<8x1xf32>
    %448 = vector.broadcast %447 : vector<8x1xf32> to vector<8x32xf32>
    %449 = arith.subf %445, %448 : vector<8x32xf32>
    %450 = math.exp %449 : vector<8x32xf32>
    %cst_187 = arith.constant dense<0.000000e+00> : vector<8xf32>
    %451 = vector.multi_reduction <add>, %450, %cst_187 [1] : vector<8x32xf32> to vector<8xf32>
    %452 = vector.shape_cast %451 : vector<8xf32> to vector<8x1xf32>
    %453 = tpu.reciprocal %452 {approx = true} : vector<8x1xf32> -> vector<8x1xf32>
    %454 = vector.broadcast %453 : vector<8x1xf32> to vector<8x32xf32>
    %455 = arith.mulf %450, %454 : vector<8x32xf32>
    %456 = arith.truncf %455 : vector<8x32xf32> to vector<8x32xbf16>
    %457 = arith.truncf %438 : vector<32x32xf32> to vector<32x32xbf16>
    %cst_188 = arith.constant dense<0.000000e+00> : vector<8x32xf32>
    %458 = tpu.matmul %456, %457, %cst_188 {dimension_numbers = #tpu.dot_dimension_numbers<[1], [0], [0], [1], [0, 0, 1, 1], [], []>} : vector<8x32xbf16>, vector<32x32xbf16>, vector<8x32xf32> -> vector<8x32xf32>
    %459 = tpu.concatenate %392, %414, %436, %458 in 1 : vector<8x32xf32>, vector<8x32xf32>, vector<8x32xf32>, vector<8x32xf32> -> vector<8x128xf32>
    %c1_189 = arith.constant 1 : index
    %c0_190 = arith.constant 0 : index
    %c0_191 = arith.constant 0 : index
    %460 = vector.load %arg7[%c1_189, %c0_190, %c0_191] : memref<2x128x128xbf16, #tpu.memory_space<vmem>>, vector<1x128x128xbf16>
    %461 = vector.shape_cast %460 : vector<1x128x128xbf16> to vector<128x128xbf16>
    %462 = arith.truncf %459 : vector<8x128xf32> to vector<8x128xbf16>
    %cst_192 = arith.constant dense<0.000000e+00> : vector<8x128xf32>
    %463 = tpu.matmul %462, %461, %cst_192 {dimension_numbers = #tpu.dot_dimension_numbers<[1], [0], [0], [1], [0, 0, 1, 1], [], []>} : vector<8x128xbf16>, vector<128x128xbf16>, vector<8x128xf32> -> vector<8x128xf32>
    %464 = arith.addf %252, %463 : vector<8x128xf32>
    %c1_193 = arith.constant 1 : index
    %c0_194 = arith.constant 0 : index
    %c0_195 = arith.constant 0 : index
    %465 = vector.load %arg8[%c1_193, %c0_194, %c0_195] : memref<2x1x128xf32, #tpu.memory_space<vmem>>, vector<1x1x128xf32>
    %466 = vector.shape_cast %465 : vector<1x1x128xf32> to vector<1x128xf32>
    %467 = arith.mulf %464, %464 : vector<8x128xf32>
    %cst_196 = arith.constant dense<0.000000e+00> : vector<8xf32>
    %468 = vector.multi_reduction <add>, %467, %cst_196 [1] : vector<8x128xf32> to vector<8xf32>
    %469 = vector.shape_cast %468 : vector<8xf32> to vector<8x1xf32>
    %cst_197 = arith.constant 1.280000e+02 : f32
    %470 = vector.broadcast %cst_197 : f32 to vector<8x1xf32>
    %471 = arith.divf %469, %470 : vector<8x1xf32>
    %cst_198 = arith.constant 9.99999997E-7 : f32
    %472 = vector.broadcast %cst_198 : f32 to vector<8x1xf32>
    %473 = arith.addf %471, %472 : vector<8x1xf32>
    %474 = math.rsqrt %473 : vector<8x1xf32>
    %475 = vector.broadcast %474 : vector<8x1xf32> to vector<8x128xf32>
    %476 = arith.mulf %464, %475 : vector<8x128xf32>
    %477 = vector.broadcast %466 : vector<1x128xf32> to vector<8x128xf32>
    %478 = arith.mulf %476, %477 : vector<8x128xf32>
    %c1_199 = arith.constant 1 : index
    %c0_200 = arith.constant 0 : index
    %c0_201 = arith.constant 0 : index
    %479 = vector.load %arg9[%c1_199, %c0_200, %c0_201] : memref<2x128x512xbf16, #tpu.memory_space<vmem>>, vector<1x128x512xbf16>
    %480 = vector.shape_cast %479 : vector<1x128x512xbf16> to vector<128x512xbf16>
    %481 = arith.truncf %478 : vector<8x128xf32> to vector<8x128xbf16>
    %cst_202 = arith.constant dense<0.000000e+00> : vector<8x512xf32>
    %482 = tpu.matmul %481, %480, %cst_202 {dimension_numbers = #tpu.dot_dimension_numbers<[1], [0], [0], [1], [0, 0, 1, 1], [], []>} : vector<8x128xbf16>, vector<128x512xbf16>, vector<8x512xf32> -> vector<8x512xf32>
    %483 = vector.extract_strided_slice %482 {offsets = [0, 0], sizes = [8, 256], strides = [1, 1]} : vector<8x512xf32> to vector<8x256xf32>
    %484 = vector.extract_strided_slice %482 {offsets = [0, 256], sizes = [8, 256], strides = [1, 1]} : vector<8x512xf32> to vector<8x256xf32>
    %485 = arith.negf %483 : vector<8x256xf32>
    %486 = math.exp %485 : vector<8x256xf32>
    %cst_203 = arith.constant 1.000000e+00 : f32
    %487 = vector.broadcast %cst_203 : f32 to vector<8x256xf32>
    %488 = arith.addf %487, %486 : vector<8x256xf32>
    %489 = arith.divf %487, %488 : vector<8x256xf32>
    %490 = arith.mulf %483, %489 : vector<8x256xf32>
    %491 = arith.mulf %490, %484 : vector<8x256xf32>
    %c1_204 = arith.constant 1 : index
    %c0_205 = arith.constant 0 : index
    %c0_206 = arith.constant 0 : index
    %492 = vector.load %arg10[%c1_204, %c0_205, %c0_206] : memref<2x256x128xbf16, #tpu.memory_space<vmem>>, vector<1x256x128xbf16>
    %493 = vector.shape_cast %492 : vector<1x256x128xbf16> to vector<256x128xbf16>
    %494 = arith.truncf %491 : vector<8x256xf32> to vector<8x256xbf16>
    %cst_207 = arith.constant dense<0.000000e+00> : vector<8x128xf32>
    %495 = tpu.matmul %494, %493, %cst_207 {dimension_numbers = #tpu.dot_dimension_numbers<[1], [0], [0], [1], [0, 0, 1, 1], [], []>} : vector<8x256xbf16>, vector<256x128xbf16>, vector<8x128xf32> -> vector<8x128xf32>
    %496 = arith.addf %464, %495 : vector<8x128xf32>
    %c0_208 = arith.constant 0 : index
    %c0_209 = arith.constant 0 : index
    %497 = vector.load %arg11[%c0_208, %c0_209] : memref<1x128xf32, #tpu.memory_space<vmem>>, vector<1x128xf32>
    %498 = arith.mulf %496, %496 : vector<8x128xf32>
    %cst_210 = arith.constant dense<0.000000e+00> : vector<8xf32>
    %499 = vector.multi_reduction <add>, %498, %cst_210 [1] : vector<8x128xf32> to vector<8xf32>
    %500 = vector.shape_cast %499 : vector<8xf32> to vector<8x1xf32>
    %cst_211 = arith.constant 1.280000e+02 : f32
    %501 = vector.broadcast %cst_211 : f32 to vector<8x1xf32>
    %502 = arith.divf %500, %501 : vector<8x1xf32>
    %cst_212 = arith.constant 9.99999997E-7 : f32
    %503 = vector.broadcast %cst_212 : f32 to vector<8x1xf32>
    %504 = arith.addf %502, %503 : vector<8x1xf32>
    %505 = math.rsqrt %504 : vector<8x1xf32>
    %506 = vector.broadcast %505 : vector<8x1xf32> to vector<8x128xf32>
    %507 = arith.mulf %496, %506 : vector<8x128xf32>
    %508 = vector.broadcast %497 : vector<1x128xf32> to vector<8x128xf32>
    %509 = arith.mulf %507, %508 : vector<8x128xf32>
    %c0_213 = arith.constant 0 : index
    %c0_214 = arith.constant 0 : index
    %510 = vector.load %arg12[%c0_213, %c0_214] : memref<128x256xbf16, #tpu.memory_space<vmem>>, vector<128x256xbf16>
    %511 = arith.truncf %509 : vector<8x128xf32> to vector<8x128xbf16>
    %cst_215 = arith.constant dense<0.000000e+00> : vector<8x256xf32>
    %512 = tpu.matmul %511, %510, %cst_215 {dimension_numbers = #tpu.dot_dimension_numbers<[1], [0], [0], [1], [0, 0, 1, 1], [], []>} : vector<8x128xbf16>, vector<128x256xbf16>, vector<8x256xf32> -> vector<8x256xf32>
    %c0_216 = arith.constant 0 : index
    %c0_217 = arith.constant 0 : index
    %513 = vector.load %arg13[%c0_216, %c0_217] : memref<8x256xf32, #tpu.memory_space<vmem>>, vector<8x256xf32>
    tpu.vector_store %arg13[%c0_216, %c0_217], %512 {strides = array<i32>} : memref<8x256xf32, #tpu.memory_space<vmem>>, vector<8x256xf32>,
    return
  }
}

</mosaic_0001>

<llo_original>
// kernel: forward.1
$region0: #{forward.1}
  #allocation0 [shape = 'u32[]', space=smem, size = 0x4, offset = 0x4, fixed_abs, tag = 'smem constant byte address 0x4 - core index']
  #allocation1 [shape = 'u32[144,128]{1,0:T(1,128)}', space=vmem, size = 0x12000, scoped, tag = 'internal scratch']
  %s0 = inlined_call_operand.vmem [shape: s32[8], index: 0, kind: input, shape index: {}]
  %s1 = inlined_call_operand.vmem [shape: f32[8,128], index: 1, kind: input, shape index: {}]
  %s2 = inlined_call_operand.vmem [shape: f32[8,32], index: 2, kind: input, shape index: {}]
  %s3 = inlined_call_operand.vmem [shape: f32[8,32], index: 3, kind: input, shape index: {}]
  %s4 = inlined_call_operand.vmem [shape: f32[2,2,1,32,128], index: 4, kind: input, shape index: {}]
  %s5 = inlined_call_operand.vmem [shape: f32[2,1,128], index: 5, kind: input, shape index: {}]
  %s6 = inlined_call_operand.hbm [shape: bf16[2,128,384], index: 6, kind: input, shape index: {}]
  %s7 = inlined_call_operand.hbm [shape: bf16[2,128,128], index: 7, kind: input, shape index: {}]
  %s8 = inlined_call_operand.vmem [shape: f32[2,1,128], index: 8, kind: input, shape index: {}]
  %s9 = inlined_call_operand.hbm [shape: bf16[2,128,512], index: 9, kind: input, shape index: {}]
  %s10 = inlined_call_operand.hbm [shape: bf16[2,256,128], index: 10, kind: input, shape index: {}]
  %s11 = inlined_call_operand.vmem [shape: f32[1,128], index: 11, kind: input, shape index: {}]
  %s12 = inlined_call_operand.hbm [shape: bf16[128,256], index: 12, kind: input, shape index: {}]
  %s13 = inlined_call_operand.hbm [shape: f32[8,256], index: 13, kind: output, shape index: {0}]
  %s14 = inlined_call_operand.hbm [shape: f32[2,2,1,32,128], index: 14, kind: output, shape index: {1}]
  %15 = xla_tuple %s13, %s14
  %s16 = sld [smem:[#allocation0]]
  $region94: #{forward.1} parent=0
    _
  %s18 = ssub.s32 1, %s16
  %s19 = scalar_select 0, %s18, %s16
  $region1: #{forward.1} parent=0
    #allocation2 [shape = 'u8[512]{0}', space=smem, size = 0x200, scoped, tag = 'input window, operand 0, single buffered']
    #allocation3 [shape = 's32[1]{0}', space=sflag, size = 0x4, scoped, tag = 'scoped memory for forward.1']
    #allocation4 [shape = 's32[1]{0}', space=sflag, size = 0x4, scoped, tag = 'scoped memory for forward.1']
    #allocation5 [shape = 's32[1]{0}', space=sflag, size = 0x4, scoped, tag = 'scoped memory for forward.1']
    #allocation6 [shape = 'u8[196608]{0}', space=vmem, size = 0x30000, scoped, tag = 'input window, operand 6, single buffered']
    #allocation7 [shape = 'u8[65536]{0}', space=vmem, size = 0x10000, scoped, tag = 'input window, operand 7, single buffered']
    #allocation8 [shape = 's32[1]{0}', space=sflag, size = 0x4, scoped, tag = 'scoped memory for forward.1']
    #allocation9 [shape = 'u8[262144]{0}', space=vmem, size = 0x40000, scoped, tag = 'input window, operand 9, single buffered']
    #allocation10 [shape = 'u8[131072]{0}', space=vmem, size = 0x20000, scoped, tag = 'input window, operand 10, single buffered']
    #allocation11 [shape = 's32[1]{0}', space=sflag, size = 0x4, scoped, tag = 'scoped memory for forward.1']
    #allocation12 [shape = 'u8[65536]{0}', space=vmem, size = 0x10000, scoped, tag = 'input window, operand 12, single buffered']
    #allocation13 [shape = 'u8[8192]{0}', space=vmem, size = 0x2000, scoped, tag = 'output window, operand 0, single buffered']
    #allocation14 [shape = 'u8[65536]{0}', space=vmem, size = 0x10000, scoped, tag = 'output window, operand 1, single buffered']
    #allocation15 [shape = 's32[1]{0}', space=sflag, size = 0x4, scoped, tag = 'scoped memory for forward.1']
    %20 = vsyncpa [#allocation5], 0
    %21 = vsyncpa [#allocation3], 0
    %22 = vsyncpa [#allocation8], 0
    %23 = vsyncpa [#allocation11], 0
    %24 = vsyncpa [#allocation4], 0
    %25 = vsyncpa [#allocation15], 0
    // Predicated region
    $region2: #{forward.1} parent=1 // pred_check
      _
    $region3: #{forward.1} parent=1 // pred_check_branch
      %27 = sbr.rel (0) target = $region5
    $region4: #{forward.1} parent=1 // pred_region
      %s29 = ssub.s32 16, 16
      %30 = vsyncadd [#allocation5], %s29
      %s32 = sshll.u32 %s0, 4
      %s33 = int_to_ptr.vmem [resolvable:$true] %s32
      %35 = dma.vmem_to_smem %s33, 16, [#allocation2], [#allocation5]
    $region5: #{forward.1} parent=1 // pred_fallthru
      _
    // Predicated region
    $region6: #{forward.1} parent=1 // pred_check
      _
    $region7: #{forward.1} parent=1 // pred_check_branch
      %37 = sbr.rel (0) target = $region9
    $region8: #{forward.1} parent=1 // pred_region
      _
    $region9: #{forward.1} parent=1 // pred_fallthru
      _
    // Predicated region
    $region10: #{forward.1} parent=1 // pred_check
      _
    $region11: #{forward.1} parent=1 // pred_check_branch
      %39 = sbr.rel (0) target = $region13
    $region12: #{forward.1} parent=1 // pred_region
      _
    $region13: #{forward.1} parent=1 // pred_fallthru
      _
    // Predicated region
    $region14: #{forward.1} parent=1 // pred_check
      _
    $region15: #{forward.1} parent=1 // pred_check_branch
      %41 = sbr.rel (0) target = $region17
    $region16: #{forward.1} parent=1 // pred_region
      _
    $region17: #{forward.1} parent=1 // pred_fallthru
      _
    // Predicated region
    $region18: #{forward.1} parent=1 // pred_check
      _
    $region19: #{forward.1} parent=1 // pred_check_branch
      %43 = sbr.rel (0) target = $region21
    $region20: #{forward.1} parent=1 // pred_region
      _
    $region21: #{forward.1} parent=1 // pred_fallthru
      _
    // Predicated region
    $region22: #{forward.1} parent=1 // pred_check
      _
    $region23: #{forward.1} parent=1 // pred_check_branch
      %45 = sbr.rel (0) target = $region25
    $region24: #{forward.1} parent=1 // pred_region
      _
    $region25: #{forward.1} parent=1 // pred_fallthru
      _
    // Predicated region
    $region26: #{forward.1} parent=1 // pred_check
      _
    $region27: #{forward.1} parent=1 // pred_check_branch
      %47 = sbr.rel (0) target = $region29
    $region28: #{forward.1} parent=1 // pred_region
      %s49 = ssub.s32 6144, 6144
      %50 = vsyncadd [#allocation3], %s49
      %s51 = sshll.u32 [#allocation6], 4
      %s52 = int_to_ptr.vmem [resolvable:$true] %s51
      %57 = dma.hbm_to_vmem [thread:$0]  %s6, 6144, %s52, [#allocation3], 192, 192, 12
    $region29: #{forward.1} parent=1 // pred_fallthru
      _
    // Predicated region
    $region30: #{forward.1} parent=1 // pred_check
      _
    $region31: #{forward.1} parent=1 // pred_check_branch
      %59 = sbr.rel (0) target = $region33
    $region32: #{forward.1} parent=1 // pred_region
      %s61 = ssub.s32 2048, 2048
      %62 = vsyncadd [#allocation8], %s61
      %s63 = sshll.u32 [#allocation7], 4
      %s64 = int_to_ptr.vmem [resolvable:$true] %s63
      %69 = dma.hbm_to_vmem [thread:$0]  %s7, 2048, %s64, [#allocation8], 64, 64, 4
    $region33: #{forward.1} parent=1 // pred_fallthru
      _
    // Predicated region
    $region34: #{forward.1} parent=1 // pred_check
      _
    $region35: #{forward.1} parent=1 // pred_check_branch
      %71 = sbr.rel (0) target = $region37
    $region36: #{forward.1} parent=1 // pred_region
      _
    $region37: #{forward.1} parent=1 // pred_fallthru
      _
    // Predicated region
    $region38: #{forward.1} parent=1 // pred_check
      _
    $region39: #{forward.1} parent=1 // pred_check_branch
      %73 = sbr.rel (0) target = $region41
    $region40: #{forward.1} parent=1 // pred_region
      %s75 = ssub.s32 8192, 8192
      %76 = vsyncadd [#allocation8], %s75
      %s77 = sshll.u32 [#allocation9], 4
      %s78 = int_to_ptr.vmem [resolvable:$true] %s77
      %83 = dma.hbm_to_vmem [thread:$0]  %s9, 8192, %s78, [#allocation8], 256, 256, 16
    $region41: #{forward.1} parent=1 // pred_fallthru
      _
    // Predicated region
    $region42: #{forward.1} parent=1 // pred_check
      _
    $region43: #{forward.1} parent=1 // pred_check_branch
      %85 = sbr.rel (0) target = $region45
    $region44: #{forward.1} parent=1 // pred_region
      %s87 = ssub.s32 4096, 4096
      %88 = vsyncadd [#allocation11], %s87
      %s89 = sshll.u32 [#allocation10], 4
      %s90 = int_to_ptr.vmem [resolvable:$true] %s89
      %95 = dma.hbm_to_vmem [thread:$0]  %s10, 4096, %s90, [#allocation11], 64, 64, 4
    $region45: #{forward.1} parent=1 // pred_fallthru
      _
    // Predicated region
    $region46: #{forward.1} parent=1 // pred_check
      _
    $region47: #{forward.1} parent=1 // pred_check_branch
      %97 = sbr.rel (0) target = $region49
    $region48: #{forward.1} parent=1 // pred_region
      _
    $region49: #{forward.1} parent=1 // pred_fallthru
      _
    // Predicated region
    $region50: #{forward.1} parent=1 // pred_check
      _
    $region51: #{forward.1} parent=1 // pred_check_branch
      %99 = sbr.rel (0) target = $region53
    $region52: #{forward.1} parent=1 // pred_region
      %s101 = ssub.s32 2048, 2048
      %102 = vsyncadd [#allocation11], %s101
      %s103 = sshll.u32 [#allocation12], 4
      %s104 = int_to_ptr.vmem [resolvable:$true] %s103
      %109 = dma.hbm_to_vmem [thread:$0]  %s12, 2048, %s104, [#allocation11], 128, 128, 8
    $region53: #{forward.1} parent=1 // pred_fallthru
      _
    // Predicated region
    $region54: #{forward.1} parent=1 // pred_check
      _
    $region55: #{forward.1} parent=1 // pred_check_branch
      %111 = sbr.rel (0) target = $region57
    $region56: #{forward.1} parent=1 // pred_region
      %112 = dma.done [#allocation5], 16
    $region57: #{forward.1} parent=1 // pred_fallthru
      _
    // Predicated region
    $region58: #{forward.1} parent=1 // pred_check
      _
    $region59: #{forward.1} parent=1 // pred_check_branch
      %114 = sbr.rel (0) target = $region61
    $region60: #{forward.1} parent=1 // pred_region
      %115 = dma.done [#allocation3], 6144
    $region61: #{forward.1} parent=1 // pred_fallthru
      _
    // Predicated region
    $region62: #{forward.1} parent=1 // pred_check
      _
    $region63: #{forward.1} parent=1 // pred_check_branch
      %117 = sbr.rel (0) target = $region65
    $region64: #{forward.1} parent=1 // pred_region
      %118 = dma.done [#allocation8], 2048
    $region65: #{forward.1} parent=1 // pred_fallthru
      _
    // Predicated region
    $region66: #{forward.1} parent=1 // pred_check
      _
    $region67: #{forward.1} parent=1 // pred_check_branch
      %120 = sbr.rel (0) target = $region69
    $region68: #{forward.1} parent=1 // pred_region
      %121 = dma.done [#allocation8], 8192
    $region69: #{forward.1} parent=1 // pred_fallthru
      _
    // Predicated region
    $region70: #{forward.1} parent=1 // pred_check
      _
    $region71: #{forward.1} parent=1 // pred_check_branch
      %123 = sbr.rel (0) target = $region73
    $region72: #{forward.1} parent=1 // pred_region
      %124 = dma.done [#allocation11], 4096
    $region73: #{forward.1} parent=1 // pred_fallthru
      _
    // Predicated region
    $region74: #{forward.1} parent=1 // pred_check
      _
    $region75: #{forward.1} parent=1 // pred_check_branch
      %126 = sbr.rel (0) target = $region77
    $region76: #{forward.1} parent=1 // pred_region
      %127 = dma.done [#allocation11], 2048
    $region77: #{forward.1} parent=1 // pred_fallthru
      _
    %128 = sfence
    %s130 = sld [smem:[#allocation2]]
    %v131 = vld [vmem:[%s2] sm:$0xff]
    %v132 = vld [vmem:[%s3] sm:$0xff]
    %v133 = vld [vmem:[%s1] sm:$0xff]
    %v134 = vlaneseq
    %v135 = vshrl.u32 %v134, 7
    %v136 = vlaneseq
    %v137 = vand.u32 %v136, 127
    %v138 = vstv %s130
    %v139 = vadd.s32 %v138, %v135
    %vm140 = vcmp.le.s32.totalorder %v137, %v139
    %v141 = vld [vmem:[%s5] sm:$0x1]
    %v142 = vmul.f32 %v133, %v133
    %143 = vadd.xlane.f32.xlu0 %v142
    %v144 = vpop.xlane.xlu0 %143
    %v145 = vrcp.pop 128.0
    %v146 = vmul.f32 %v144, %v145
    %v147 = vadd.f32 %v146, 1e-06
    %v148 = vrsqrt.pop %v147
    %v149 = vmul.f32 %v133, %v148
    %v151 = vlaneseq
    %v152 = vshrl.u32 %v151, 7
    %v153 = vsub.s32 0, %v152
    %v154 = vrot.slane %v141, %v153
    %v156 = vmul.f32 %v149, %v154
    %v157 = vld [vmem:[#allocation6] sm:$0xff]
    %v158 = vld [vmem:[#allocation6 + $0x8] sm:$0xf]
    %v159 = vld [vmem:[#allocation6 + $0xc] sm:$0xff]
    %v160 = vld [vmem:[#allocation6 + $0x14] sm:$0xf]
    %v161 = vld [vmem:[#allocation6 + $0x18] sm:$0xff]
    %v162 = vld [vmem:[#allocation6 + $0x20] sm:$0xf]
    %v163 = vld [vmem:[#allocation6 + $0x24] sm:$0xff]
    %v164 = vld [vmem:[#allocation6 + $0x2c] sm:$0xf]
    %v165 = vld [vmem:[#allocation6 + $0x30] sm:$0xff]
    %v166 = vld [vmem:[#allocation6 + $0x38] sm:$0xf]
    %v167 = vld [vmem:[#allocation6 + $0x3c] sm:$0xff]
    %v168 = vld [vmem:[#allocation6 + $0x44] sm:$0xf]
    %v169 = vld [vmem:[#allocation6 + $0x48] sm:$0xff]
    %v170 = vld [vmem:[#allocation6 + $0x50] sm:$0xf]
    %v171 = vld [vmem:[#allocation6 + $0x54] sm:$0xff]
    %v172 = vld [vmem:[#allocation6 + $0x5c] sm:$0xf]
    %v173 = vld [vmem:[#allocation6 + $0x60] sm:$0xff]
    %v174 = vld [vmem:[#allocation6 + $0x68] sm:$0xf]
    %v175 = vld [vmem:[#allocation6 + $0x6c] sm:$0xff]
    %v176 = vld [vmem:[#allocation6 + $0x74] sm:$0xf]
    %v177 = vld [vmem:[#allocation6 + $0x78] sm:$0xff]
    %v178 = vld [vmem:[#allocation6 + $0x80] sm:$0xf]
    %v179 = vld [vmem:[#allocation6 + $0x84] sm:$0xff]
    %v180 = vld [vmem:[#allocation6 + $0x8c] sm:$0xf]
    %v181 = vld [vmem:[#allocation6 + $0x90] sm:$0xff]
    %v182 = vld [vmem:[#allocation6 + $0x98] sm:$0xf]
    %v183 = vld [vmem:[#allocation6 + $0x9c] sm:$0xff]
    %v184 = vld [vmem:[#allocation6 + $0xa4] sm:$0xf]
    %v185 = vld [vmem:[#allocation6 + $0xa8] sm:$0xff]
    %v186 = vld [vmem:[#allocation6 + $0xb0] sm:$0xf]
    %v187 = vld [vmem:[#allocation6 + $0xb4] sm:$0xff]
    %v188 = vld [vmem:[#allocation6 + $0xbc] sm:$0xf]
    %v189 = vpack.c.bf16 %v156, %v156
    %v222 = vunpack.c.l.b16 %v157
    %v223 = vunpack.c.h.b16 %v157
    %v224 = vunpack.c.l.b16 %v158
    %v225 = vunpack.c.l.b16 %v159
    %v226 = vunpack.c.h.b16 %v159
    %v227 = vunpack.c.l.b16 %v160
    %v228 = vunpack.c.l.b16 %v161
    %v229 = vunpack.c.h.b16 %v161
    %v230 = vunpack.c.l.b16 %v162
    %v231 = vunpack.c.l.b16 %v163
    %v232 = vunpack.c.h.b16 %v163
    %v233 = vunpack.c.l.b16 %v164
    %v234 = vunpack.c.l.b16 %v165
    %v235 = vunpack.c.h.b16 %v165
    %v236 = vunpack.c.l.b16 %v166
    %v237 = vunpack.c.l.b16 %v167
    %v238 = vunpack.c.h.b16 %v167
    %v239 = vunpack.c.l.b16 %v168
    %v240 = vunpack.c.l.b16 %v169
    %v241 = vunpack.c.h.b16 %v169
    %v242 = vunpack.c.l.b16 %v170
    %v243 = vunpack.c.l.b16 %v171
    %v244 = vunpack.c.h.b16 %v171
    %v245 = vunpack.c.l.b16 %v172
    %v246 = vunpack.c.l.b16 %v173
    %v247 = vunpack.c.h.b16 %v173
    %v248 = vunpack.c.l.b16 %v174
    %v249 = vunpack.c.l.b16 %v175
    %v250 = vunpack.c.h.b16 %v175
    %v251 = vunpack.c.l.b16 %v176
    %v252 = vunpack.c.l.b16 %v177
    %v253 = vunpack.c.h.b16 %v177
    %v254 = vunpack.c.l.b16 %v178
    %v255 = vunpack.c.l.b16 %v179
    %v256 = vunpack.c.h.b16 %v179
    %v257 = vunpack.c.l.b16 %v180
    %v258 = vunpack.c.l.b16 %v181
    %v259 = vunpack.c.h.b16 %v181
    %v260 = vunpack.c.l.b16 %v182
    %v261 = vunpack.c.l.b16 %v183
    %v262 = vunpack.c.h.b16 %v183
    %v263 = vunpack.c.l.b16 %v184
    %v264 = vunpack.c.l.b16 %v185
    %v265 = vunpack.c.h.b16 %v185
    %v266 = vunpack.c.l.b16 %v186
    %v267 = vunpack.c.l.b16 %v187
    %v268 = vunpack.c.h.b16 %v187
    %v269 = vunpack.c.l.b16 %v188
    %v270 = vpack.c.b16 %v225, %v222
    %v271 = vpack.c.b16 %v226, %v223
    %v272 = vpack.c.b16 %v227, %v224
    %v273 = vpack.c.b16 %v231, %v228
    %v274 = vpack.c.b16 %v232, %v229
    %v275 = vpack.c.b16 %v233, %v230
    %v276 = vpack.c.b16 %v237, %v234
    %v277 = vpack.c.b16 %v238, %v235
    %v278 = vpack.c.b16 %v239, %v236
    %v279 = vpack.c.b16 %v243, %v240
    %v280 = vpack.c.b16 %v244, %v241
    %v281 = vpack.c.b16 %v245, %v242
    %v282 = vpack.c.b16 %v249, %v246
    %v283 = vpack.c.b16 %v250, %v247
    %v284 = vpack.c.b16 %v251, %v248
    %v285 = vpack.c.b16 %v255, %v252
    %v286 = vpack.c.b16 %v256, %v253
    %v287 = vpack.c.b16 %v257, %v254
    %v288 = vpack.c.b16 %v261, %v258
    %v289 = vpack.c.b16 %v262, %v259
    %v290 = vpack.c.b16 %v263, %v260
    %v291 = vpack.c.b16 %v267, %v264
    %v292 = vpack.c.b16 %v268, %v265
    %v293 = vpack.c.b16 %v269, %v266
    %318 = vmatprep.subr.bf16.mxu0 %v292
    %319 = vmatpush1.bf16.msra.mxu0 %v291
    %320 = vmatprep.subr.bf16.mxu0 %v289
    %321 = vmatpush1.bf16.msra.mxu0 %v288
    %322 = vmatprep.subr.bf16.mxu0 %v286
    %323 = vmatpush1.bf16.msra.mxu0 %v285
    %324 = vmatprep.subr.bf16.mxu0 %v283
    %325 = vmatpush1.bf16.msra.mxu0 %v282
    %326 = vmatprep.subr.bf16.mxu0 %v280
    %327 = vmatpush1.bf16.msra.mxu0 %v279
    %328 = vmatprep.subr.bf16.mxu0 %v277
    %329 = vmatpush1.bf16.msra.mxu0 %v276
    %330 = vmatprep.subr.bf16.mxu0 %v274
    %331 = vmatpush1.bf16.msra.mxu0 %v273
    %332 = vmatprep.subr.bf16.mxu0 %v271
    %333 = vmatpush1.bf16.msra.mxu0 %v270
    %334 = vmatprep.subr.bf16.mxu0 0
    %335 = vmatpush2.bf16.msra.mxu0 0
    %336 = vmatprep.subr.bf16.mxu0 0
    %337 = vmatpush2.bf16.msra.mxu0 0
    %338 = vmatprep.subr.bf16.mxu0 0
    %339 = vmatpush2.bf16.msra.mxu0 0
    %340 = vmatprep.subr.bf16.mxu0 0
    %341 = vmatpush2.bf16.msra.mxu0 0
    %342 = vmatprep.subr.bf16.mxu0 0
    %343 = vmatpush2.bf16.msra.mxu0 0
    %344 = vmatprep.subr.bf16.mxu0 0
    %345 = vmatpush2.bf16.msra.mxu0 0
    %346 = vmatprep.subr.bf16.mxu0 0
    %347 = vmatpush2.bf16.msra.mxu0 0
    %348 = vmatprep.subr.bf16.mxu0 0
    %349 = vmatpush2.bf16.msra.mxu0 0
    %350 = vmatprep.mubr.bf16.mxu0 0
    %351 = vmatmul.mubr.bf16.gmra.mxu0 %v189
    %v352 = vpop.f32.mrf.mxu0
    %v353 = vadd.f32 0.0, %v352
    %v354 = vpop.f32.mrf.mxu0
    %v355 = vadd.f32 0.0, %v354
    %v356 = vpop.f32.mrf.mxu0
    %v357 = vpop.f32.mrf.mxu0
    %358 = vdwg.mxu0
    %359 = vmatprep.subr.bf16.mxu0 0
    %360 = vmatpush1.bf16.msra.mxu0 %v293
    %361 = vmatprep.subr.bf16.mxu0 0
    %362 = vmatpush1.bf16.msra.mxu0 %v290
    %363 = vmatprep.subr.bf16.mxu0 0
    %364 = vmatpush1.bf16.msra.mxu0 %v287
    %365 = vmatprep.subr.bf16.mxu0 0
    %366 = vmatpush1.bf16.msra.mxu0 %v284
    %367 = vmatprep.subr.bf16.mxu0 0
    %368 = vmatpush1.bf16.msra.mxu0 %v281
    %369 = vmatprep.subr.bf16.mxu0 0
    %370 = vmatpush1.bf16.msra.mxu0 %v278
    %371 = vmatprep.subr.bf16.mxu0 0
    %372 = vmatpush1.bf16.msra.mxu0 %v275
    %373 = vmatprep.subr.bf16.mxu0 0
    %374 = vmatpush1.bf16.msra.mxu0 %v272
    %375 = vmatprep.subr.bf16.mxu0 0
    %376 = vmatpush2.bf16.msra.mxu0 0
    %377 = vmatprep.subr.bf16.mxu0 0
    %378 = vmatpush2.bf16.msra.mxu0 0
    %379 = vmatprep.subr.bf16.mxu0 0
    %380 = vmatpush2.bf16.msra.mxu0 0
    %381 = vmatprep.subr.bf16.mxu0 0
    %382 = vmatpush2.bf16.msra.mxu0 0
    %383 = vmatprep.subr.bf16.mxu0 0
    %384 = vmatpush2.bf16.msra.mxu0 0
    %385 = vmatprep.subr.bf16.mxu0 0
    %386 = vmatpush2.bf16.msra.mxu0 0
    %387 = vmatprep.subr.bf16.mxu0 0
    %388 = vmatpush2.bf16.msra.mxu0 0
    %389 = vmatprep.subr.bf16.mxu0 0
    %390 = vmatpush2.bf16.msra.mxu0 0
    %391 = vmatprep.mubr.bf16.mxu0 0
    %392 = vmatmul.mubr.bf16.gmra.mxu0 %v189
    %v393 = vpop.f32.mrf.mxu0
    %v394 = vadd.f32 0.0, %v393
    %v395 = vpop.f32.mrf.mxu0
    %v396 = vpop.f32.mrf.mxu0
    %v397 = vpop.f32.mrf.mxu0
    %398 = vdwg.mxu0
    %v399 = vsub.f32 0.0, %v353
    %401 = vrot.lane.b32.xlu0 %v399, 112
    %v402 = vpop.permute.xlu0 %401
    %405 = vrot.lane.b32.xlu0 %v353, 16
    %v406 = vpop.permute.xlu0 %405
    %vm408 = vcmask 130048
    %v409 = vsel %vm408, %v402, %v406
    %v410 = vmul.f32 %v353, %v131
    %v411 = vmul.f32 %v409, %v132
    %v412 = vadd.f32 %v410, %v411
    %v413 = vsub.f32 0.0, %v355
    %415 = vrot.lane.b32.xlu0 %v413, 112
    %v416 = vpop.permute.xlu0 %415
    %419 = vrot.lane.b32.xlu0 %v355, 16
    %v420 = vpop.permute.xlu0 %419
    %v422 = vsel %vm408, %v416, %v420
    %v423 = vmul.f32 %v355, %v131
    %v424 = vmul.f32 %v422, %v132
    %v425 = vadd.f32 %v423, %v424
    %426 = vrot.lane.b32.xlu0 %v399, 80
    %v427 = vpop.permute.xlu0 %426
    %429 = vrot.lane.b32.xlu0 %v353, 112
    %v430 = vpop.permute.xlu0 %429
    %v432 = vsel %vm408, %v427, %v430
    %434 = vrot.lane.b32.xlu0 %v131, 32
    %v435 = vpop.permute.xlu0 %434
    %v437 = vmul.f32 %v353, %v435
    %v438 = vmul.f32 %v432, %v132
    %440 = vrot.lane.b32.xlu0 %v438, 32
    %v441 = vpop.permute.xlu0 %440
    %v443 = vadd.f32 %v437, %v441
    %444 = vrot.lane.b32.xlu0 %v413, 80
    %v445 = vpop.permute.xlu0 %444
    %447 = vrot.lane.b32.xlu0 %v355, 112
    %v448 = vpop.permute.xlu0 %447
    %v450 = vsel %vm408, %v445, %v448
    %v451 = vmul.f32 %v355, %v435
    %v452 = vmul.f32 %v450, %v132
    %454 = vrot.lane.b32.xlu0 %v452, 32
    %v455 = vpop.permute.xlu0 %454
    %v457 = vadd.f32 %v451, %v455
    %458 = vrot.lane.b32.xlu0 %v399, 48
    %v459 = vpop.permute.xlu0 %458
    %461 = vrot.lane.b32.xlu0 %v353, 80
    %v462 = vpop.permute.xlu0 %461
    %v464 = vsel %vm408, %v459, %v462
    %465 = vrot.lane.b32.xlu0 %v131, 64
    %v466 = vpop.permute.xlu0 %465
    %v468 = vmul.f32 %v353, %v466
    %v469 = vmul.f32 %v464, %v132
    %471 = vrot.lane.b32.xlu0 %v469, 64
    %v472 = vpop.permute.xlu0 %471
    %v474 = vadd.f32 %v468, %v472
    %475 = vrot.lane.b32.xlu0 %v413, 48
    %v476 = vpop.permute.xlu0 %475
    %478 = vrot.lane.b32.xlu0 %v355, 80
    %v479 = vpop.permute.xlu0 %478
    %v481 = vsel %vm408, %v476, %v479
    %v482 = vmul.f32 %v355, %v466
    %v483 = vmul.f32 %v481, %v132
    %485 = vrot.lane.b32.xlu0 %v483, 64
    %v486 = vpop.permute.xlu0 %485
    %v488 = vadd.f32 %v482, %v486
    %489 = vrot.lane.b32.xlu0 %v399, 16
    %v490 = vpop.permute.xlu0 %489
    %492 = vrot.lane.b32.xlu0 %v353, 48
    %v493 = vpop.permute.xlu0 %492
    %v495 = vsel %vm408, %v490, %v493
    %496 = vrot.lane.b32.xlu0 %v131, 96
    %v497 = vpop.permute.xlu0 %496
    %v499 = vmul.f32 %v353, %v497
    %v500 = vmul.f32 %v495, %v132
    %502 = vrot.lane.b32.xlu0 %v500, 96
    %v503 = vpop.permute.xlu0 %502
    %v505 = vadd.f32 %v499, %v503
    %506 = vrot.lane.b32.xlu0 %v413, 16
    %v507 = vpop.permute.xlu0 %506
    %509 = vrot.lane.b32.xlu0 %v355, 48
    %v510 = vpop.permute.xlu0 %509
    %v512 = vsel %vm408, %v507, %v510
    %v513 = vmul.f32 %v355, %v497
    %v514 = vmul.f32 %v512, %v132
    %516 = vrot.lane.b32.xlu0 %v514, 96
    %v517 = vpop.permute.xlu0 %516
    %v519 = vadd.f32 %v513, %v517
    %vm520 = vcmask 261120
    %v521 = vsel %vm520, %v425, %v457
    %vm522 = vcmask 523264
    %v523 = vsel %vm522, %v521, %v488
    %vm524 = vcmask 785408
    %v525 = vsel %vm524, %v523, %v519
    %v526 = vld [vmem:[%s4] sm:$0xff]
    %v527 = vld [vmem:[%s4 + $0x8] sm:$0xff]
    %v528 = vld [vmem:[%s4 + $0x10] sm:$0xff]
    %v529 = vld [vmem:[%s4 + $0x18] sm:$0xff]
    %530 = vst [vmem:[#allocation14] sm:$0xff] %v526
    %531 = vst [vmem:[#allocation14 + $0x8] sm:$0xff] %v527
    %532 = vst [vmem:[#allocation14 + $0x10] sm:$0xff] %v528
    %533 = vst [vmem:[#allocation14 + $0x18] sm:$0xff] %v529
    %s534 = scalar_lea.vmem %s4, 32
    %v535 = vld [vmem:[%s534] sm:$0xff]
    %v536 = vld [vmem:[%s534 + $0x8] sm:$0xff]
    %v537 = vld [vmem:[%s534 + $0x10] sm:$0xff]
    %v538 = vld [vmem:[%s534 + $0x18] sm:$0xff]
    %s539 = scalar_lea.vmem [#allocation14], 32
    %540 = vst [vmem:[%s539] sm:$0xff] %v535
    %541 = vst [vmem:[%s539 + $0x8] sm:$0xff] %v536
    %542 = vst [vmem:[%s539 + $0x10] sm:$0xff] %v537
    %543 = vst [vmem:[%s539 + $0x18] sm:$0xff] %v538
    %s544 = scalar_lea.vmem [#allocation14], %s130
    %545 = vst [vmem:[%s544] sm:$0xff] %v525
    %s546 = scalar_lea.vmem %s539, %s130 [#allocation14]
    %547 = vst [vmem:[%s546] sm:$0xff] %v394
    %v548 = vld [vmem:[#allocation14] sm:$0xff]
    %v549 = vld [vmem:[#allocation14 + $0x8] sm:$0xff]
    %v550 = vld [vmem:[#allocation14 + $0x10] sm:$0xff]
    %v551 = vld [vmem:[#allocation14 + $0x18] sm:$0xff]
    %v552 = vld [vmem:[%s539] sm:$0xff]
    %v553 = vld [vmem:[%s539 + $0x8] sm:$0xff]
    %v554 = vld [vmem:[%s539 + $0x10] sm:$0xff]
    %v555 = vld [vmem:[%s539 + $0x18] sm:$0xff]
    %v556 = vpack.c.bf16 %v412, %v412
    %v557 = vpack.c.bf16 %v549, %v548
    %v558 = vpack.c.bf16 %v551, %v550
    %v560 = vsel %vm520, %v556, 0
    %v563 = vsel %vm520, %v557, 0
    %v566 = vsel %vm520, %v558, 0
    %568 = vmatprep.subr.bf16.mxu0 0
    %569 = vmatpush1.bf16.xpose.msra.mxu0 0
    %570 = vmatprep.subr.bf16.mxu0 0
    %571 = vmatpush1.bf16.xpose.msra.mxu0 0
    %572 = vmatprep.subr.bf16.mxu0 0
    %573 = vmatpush1.bf16.xpose.msra.mxu0 0
    %574 = vmatprep.subr.bf16.mxu0 0
    %575 = vmatpush1.bf16.xpose.msra.mxu0 0
    %576 = vmatprep.subr.bf16.mxu0 0
    %577 = vmatpush1.bf16.xpose.msra.mxu0 0
    %578 = vmatprep.subr.bf16.mxu0 0
    %579 = vmatpush1.bf16.xpose.msra.mxu0 0
    %580 = vmatprep.subr.bf16.mxu0 0
    %581 = vmatpush1.bf16.xpose.msra.mxu0 %v566
    %582 = vmatprep.subr.bf16.mxu0 0
    %583 = vmatpush1.bf16.xpose.msra.mxu0 %v563
    %584 = vmatprep.subr.bf16.mxu0 0
    %585 = vmatpush2.bf16.xpose.msra.mxu0 0
    %586 = vmatprep.subr.bf16.mxu0 0
    %587 = vmatpush2.bf16.xpose.msra.mxu0 0
    %588 = vmatprep.subr.bf16.mxu0 0
    %589 = vmatpush2.bf16.xpose.msra.mxu0 0
    %590 = vmatprep.subr.bf16.mxu0 0
    %591 = vmatpush2.bf16.xpose.msra.mxu0 0
    %592 = vmatprep.subr.bf16.mxu0 0
    %593 = vmatpush2.bf16.xpose.msra.mxu0 0
    %594 = vmatprep.subr.bf16.mxu0 0
    %595 = vmatpush2.bf16.xpose.msra.mxu0 0
    %596 = vmatprep.subr.bf16.mxu0 0
    %597 = vmatpush2.bf16.xpose.msra.mxu0 0
    %598 = vmatprep.subr.bf16.mxu0 0
    %599 = vmatpush2.bf16.xpose.msra.mxu0 0
    %600 = vmatprep.mubr.bf16.mxu0 0
    %601 = vmatmul.mubr.bf16.gmra.mxu0 %v560
    %v602 = vpop.f32.mrf.mxu0
    %v603 = vadd.f32 0.0, %v602
    %v604 = vpop.f32.mrf.mxu0
    %v605 = vpop.f32.mrf.mxu0
    %v606 = vpop.f32.mrf.mxu0
    %607 = vdwg.mxu0
    %v608 = vmul.f32 %v603, 0.17677669
    %v609 = vsel %vm140, %v608, -1e+30
    %v610 = vsel %vm520, %v609, -inf
    %611 = vmax.xlane.f32.xlu0 %v610
    %v612 = vpop.xlane.xlu0 %611
    %v613 = vsub.f32 %v609, %v612
    %v614 = vmul.f32 %v613, 1.442695
    %v615 = vpow.pop %v614
    %v616 = vsel %vm520, %v615, 0.0
    %617 = vadd.xlane.f32.xlu0 %v616
    %v618 = vpop.xlane.xlu0 %617
    %v619 = vrcp.pop %v618
    %v620 = vmul.f32 %v615, %v619
    %v621 = vpack.c.bf16 %v620, %v620
    %v622 = vpack.c.bf16 %v553, %v552
    %v623 = vpack.c.bf16 %v555, %v554
    %v625 = vsel %vm520, %v621, 0
    %627 = vmatprep.subr.bf16.mxu0 0
    %628 = vmatpush1.bf16.msra.mxu0 0
    %629 = vmatprep.subr.bf16.mxu0 0
    %630 = vmatpush1.bf16.msra.mxu0 0
    %631 = vmatprep.subr.bf16.mxu0 0
    %632 = vmatpush1.bf16.msra.mxu0 0
    %633 = vmatprep.subr.bf16.mxu0 0
    %634 = vmatpush1.bf16.msra.mxu0 0
    %635 = vmatprep.subr.bf16.mxu0 0
    %636 = vmatpush1.bf16.msra.mxu0 0
    %637 = vmatprep.subr.bf16.mxu0 0
    %638 = vmatpush1.bf16.msra.mxu0 0
    %639 = vmatprep.subr.bf16.mxu0 0
    %640 = vmatpush1.bf16.msra.mxu0 %v623
    %641 = vmatprep.subr.bf16.mxu0 0
    %642 = vmatpush1.bf16.msra.mxu0 %v622
    %643 = vmatprep.subr.bf16.mxu0 0
    %644 = vmatpush2.bf16.msra.mxu0 0
    %645 = vmatprep.subr.bf16.mxu0 0
    %646 = vmatpush2.bf16.msra.mxu0 0
    %647 = vmatprep.subr.bf16.mxu0 0
    %648 = vmatpush2.bf16.msra.mxu0 0
    %649 = vmatprep.subr.bf16.mxu0 0
    %650 = vmatpush2.bf16.msra.mxu0 0
    %651 = vmatprep.subr.bf16.mxu0 0
    %652 = vmatpush2.bf16.msra.mxu0 0
    %653 = vmatprep.subr.bf16.mxu0 0
    %654 = vmatpush2.bf16.msra.mxu0 0
    %655 = vmatprep.subr.bf16.mxu0 0
    %656 = vmatpush2.bf16.msra.mxu0 0
    %657 = vmatprep.subr.bf16.mxu0 0
    %658 = vmatpush2.bf16.msra.mxu0 0
    %659 = vmatprep.mubr.bf16.mxu0 0
    %660 = vmatmul.mubr.bf16.gmra.mxu0 %v625
    %v661 = vpop.f32.mrf.mxu0
    %v662 = vadd.f32 0.0, %v661
    %v663 = vpop.f32.mrf.mxu0
    %v664 = vpop.f32.mrf.mxu0
    %v665 = vpop.f32.mrf.mxu0
    %666 = vdwg.mxu0
    %v667 = vpack.c.bf16 %v443, %v443
    %669 = vrot.lane.b32.xlu0 %v667, 96
    %v670 = vpop.permute.xlu0 %669
    %673 = vrot.lane.b32.xlu0 %v557, 96
    %v674 = vpop.permute.xlu0 %673
    %675 = vrot.lane.b32.xlu0 %v558, 96
    %v676 = vpop.permute.xlu0 %675
    %v678 = vsel %vm520, %v670, 0
    %v681 = vsel %vm520, %v674, 0
    %v684 = vsel %vm520, %v676, 0
    %686 = vmatprep.subr.bf16.mxu0 0
    %687 = vmatpush1.bf16.xpose.msra.mxu0 0
    %688 = vmatprep.subr.bf16.mxu0 0
    %689 = vmatpush1.bf16.xpose.msra.mxu0 0
    %690 = vmatprep.subr.bf16.mxu0 0
    %691 = vmatpush1.bf16.xpose.msra.mxu0 0
    %692 = vmatprep.subr.bf16.mxu0 0
    %693 = vmatpush1.bf16.xpose.msra.mxu0 0
    %694 = vmatprep.subr.bf16.mxu0 0
    %695 = vmatpush1.bf16.xpose.msra.mxu0 0
    %696 = vmatprep.subr.bf16.mxu0 0
    %697 = vmatpush1.bf16.xpose.msra.mxu0 0
    %698 = vmatprep.subr.bf16.mxu0 0
    %699 = vmatpush1.bf16.xpose.msra.mxu0 %v684
    %700 = vmatprep.subr.bf16.mxu0 0
    %701 = vmatpush1.bf16.xpose.msra.mxu0 %v681
    %702 = vmatprep.subr.bf16.mxu0 0
    %703 = vmatpush2.bf16.xpose.msra.mxu0 0
    %704 = vmatprep.subr.bf16.mxu0 0
    %705 = vmatpush2.bf16.xpose.msra.mxu0 0
    %706 = vmatprep.subr.bf16.mxu0 0
    %707 = vmatpush2.bf16.xpose.msra.mxu0 0
    %708 = vmatprep.subr.bf16.mxu0 0
    %709 = vmatpush2.bf16.xpose.msra.mxu0 0
    %710 = vmatprep.subr.bf16.mxu0 0
    %711 = vmatpush2.bf16.xpose.msra.mxu0 0
    %712 = vmatprep.subr.bf16.mxu0 0
    %713 = vmatpush2.bf16.xpose.msra.mxu0 0
    %714 = vmatprep.subr.bf16.mxu0 0
    %715 = vmatpush2.bf16.xpose.msra.mxu0 0
    %716 = vmatprep.subr.bf16.mxu0 0
    %717 = vmatpush2.bf16.xpose.msra.mxu0 0
    %718 = vmatprep.mubr.bf16.mxu0 0
    %719 = vmatmul.mubr.bf16.gmra.mxu0 %v678
    %v720 = vpop.f32.mrf.mxu0
    %v721 = vadd.f32 0.0, %v720
    %v722 = vpop.f32.mrf.mxu0
    %v723 = vpop.f32.mrf.mxu0
    %v724 = vpop.f32.mrf.mxu0
    %725 = vdwg.mxu0
    %v726 = vmul.f32 %v721, 0.17677669
    %v727 = vsel %vm140, %v726, -1e+30
    %v728 = vsel %vm520, %v727, -inf
    %729 = vmax.xlane.f32.xlu0 %v728
    %v730 = vpop.xlane.xlu0 %729
    %v731 = vsub.f32 %v727, %v730
    %v732 = vmul.f32 %v731, 1.442695
    %v733 = vpow.pop %v732
    %v734 = vsel %vm520, %v733, 0.0
    %735 = vadd.xlane.f32.xlu0 %v734
    %v736 = vpop.xlane.xlu0 %735
    %v737 = vrcp.pop %v736
    %v738 = vmul.f32 %v733, %v737
    %v739 = vpack.c.bf16 %v738, %v738
    %742 = vrot.lane.b32.xlu0 %v622, 96
    %v743 = vpop.permute.xlu0 %742
    %744 = vrot.lane.b32.xlu0 %v623, 96
    %v745 = vpop.permute.xlu0 %744
    %v749 = vsel %vm520, %v739, 0
    %751 = vmatprep.subr.bf16.mxu0 0
    %752 = vmatpush1.bf16.msra.mxu0 0
    %753 = vmatprep.subr.bf16.mxu0 0
    %754 = vmatpush1.bf16.msra.mxu0 0
    %755 = vmatprep.subr.bf16.mxu0 0
    %756 = vmatpush1.bf16.msra.mxu0 0
    %757 = vmatprep.subr.bf16.mxu0 0
    %758 = vmatpush1.bf16.msra.mxu0 0
    %759 = vmatprep.subr.bf16.mxu0 0
    %760 = vmatpush1.bf16.msra.mxu0 0
    %761 = vmatprep.subr.bf16.mxu0 0
    %762 = vmatpush1.bf16.msra.mxu0 0
    %763 = vmatprep.subr.bf16.mxu0 0
    %764 = vmatpush1.bf16.msra.mxu0 %v745
    %765 = vmatprep.subr.bf16.mxu0 0
    %766 = vmatpush1.bf16.msra.mxu0 %v743
    %767 = vmatprep.subr.bf16.mxu0 0
    %768 = vmatpush2.bf16.msra.mxu0 0
    %769 = vmatprep.subr.bf16.mxu0 0
    %770 = vmatpush2.bf16.msra.mxu0 0
    %771 = vmatprep.subr.bf16.mxu0 0
    %772 = vmatpush2.bf16.msra.mxu0 0
    %773 = vmatprep.subr.bf16.mxu0 0
    %774 = vmatpush2.bf16.msra.mxu0 0
    %775 = vmatprep.subr.bf16.mxu0 0
    %776 = vmatpush2.bf16.msra.mxu0 0
    %777 = vmatprep.subr.bf16.mxu0 0
    %778 = vmatpush2.bf16.msra.mxu0 0
    %779 = vmatprep.subr.bf16.mxu0 0
    %780 = vmatpush2.bf16.msra.mxu0 0
    %781 = vmatprep.subr.bf16.mxu0 0
    %782 = vmatpush2.bf16.msra.mxu0 0
    %783 = vmatprep.mubr.bf16.mxu0 0
    %784 = vmatmul.mubr.bf16.gmra.mxu0 %v749
    %v785 = vpop.f32.mrf.mxu0
    %v786 = vadd.f32 0.0, %v785
    %v787 = vpop.f32.mrf.mxu0
    %v788 = vpop.f32.mrf.mxu0
    %v789 = vpop.f32.mrf.mxu0
    %790 = vdwg.mxu0
    %v791 = vpack.c.bf16 %v474, %v474
    %793 = vrot.lane.b32.xlu0 %v791, 64
    %v794 = vpop.permute.xlu0 %793
    %795 = vrot.lane.b32.xlu0 %v557, 64
    %v796 = vpop.permute.xlu0 %795
    %797 = vrot.lane.b32.xlu0 %v558, 64
    %v798 = vpop.permute.xlu0 %797
    %v800 = vsel %vm520, %v794, 0
    %v803 = vsel %vm520, %v796, 0
    %v806 = vsel %vm520, %v798, 0
    %808 = vmatprep.subr.bf16.mxu0 0
    %809 = vmatpush1.bf16.xpose.msra.mxu0 0
    %810 = vmatprep.subr.bf16.mxu0 0
    %811 = vmatpush1.bf16.xpose.msra.mxu0 0
    %812 = vmatprep.subr.bf16.mxu0 0
    %813 = vmatpush1.bf16.xpose.msra.mxu0 0
    %814 = vmatprep.subr.bf16.mxu0 0
    %815 = vmatpush1.bf16.xpose.msra.mxu0 0
    %816 = vmatprep.subr.bf16.mxu0 0
    %817 = vmatpush1.bf16.xpose.msra.mxu0 0
    %818 = vmatprep.subr.bf16.mxu0 0
    %819 = vmatpush1.bf16.xpose.msra.mxu0 0
    %820 = vmatprep.subr.bf16.mxu0 0
    %821 = vmatpush1.bf16.xpose.msra.mxu0 %v806
    %822 = vmatprep.subr.bf16.mxu0 0
    %823 = vmatpush1.bf16.xpose.msra.mxu0 %v803
    %824 = vmatprep.subr.bf16.mxu0 0
    %825 = vmatpush2.bf16.xpose.msra.mxu0 0
    %826 = vmatprep.subr.bf16.mxu0 0
    %827 = vmatpush2.bf16.xpose.msra.mxu0 0
    %828 = vmatprep.subr.bf16.mxu0 0
    %829 = vmatpush2.bf16.xpose.msra.mxu0 0
    %830 = vmatprep.subr.bf16.mxu0 0
    %831 = vmatpush2.bf16.xpose.msra.mxu0 0
    %832 = vmatprep.subr.bf16.mxu0 0
    %833 = vmatpush2.bf16.xpose.msra.mxu0 0
    %834 = vmatprep.subr.bf16.mxu0 0
    %835 = vmatpush2.bf16.xpose.msra.mxu0 0
    %836 = vmatprep.subr.bf16.mxu0 0
    %837 = vmatpush2.bf16.xpose.msra.mxu0 0
    %838 = vmatprep.subr.bf16.mxu0 0
    %839 = vmatpush2.bf16.xpose.msra.mxu0 0
    %840 = vmatprep.mubr.bf16.mxu0 0
    %841 = vmatmul.mubr.bf16.gmra.mxu0 %v800
    %v842 = vpop.f32.mrf.mxu0
    %v843 = vadd.f32 0.0, %v842
    %v844 = vpop.f32.mrf.mxu0
    %v845 = vpop.f32.mrf.mxu0
    %v846 = vpop.f32.mrf.mxu0
    %847 = vdwg.mxu0
    %v848 = vmul.f32 %v843, 0.17677669
    %v849 = vsel %vm140, %v848, -1e+30
    %v850 = vsel %vm520, %v849, -inf
    %851 = vmax.xlane.f32.xlu0 %v850
    %v852 = vpop.xlane.xlu0 %851
    %v853 = vsub.f32 %v849, %v852
    %v854 = vmul.f32 %v853, 1.442695
    %v855 = vpow.pop %v854
    %v856 = vsel %vm520, %v855, 0.0
    %857 = vadd.xlane.f32.xlu0 %v856
    %v858 = vpop.xlane.xlu0 %857
    %v859 = vrcp.pop %v858
    %v860 = vmul.f32 %v855, %v859
    %v861 = vpack.c.bf16 %v860, %v860
    %862 = vrot.lane.b32.xlu0 %v622, 64
    %v863 = vpop.permute.xlu0 %862
    %864 = vrot.lane.b32.xlu0 %v623, 64
    %v865 = vpop.permute.xlu0 %864
    %v869 = vsel %vm520, %v861, 0
    %871 = vmatprep.subr.bf16.mxu0 0
    %872 = vmatpush1.bf16.msra.mxu0 0
    %873 = vmatprep.subr.bf16.mxu0 0
    %874 = vmatpush1.bf16.msra.mxu0 0
    %875 = vmatprep.subr.bf16.mxu0 0
    %876 = vmatpush1.bf16.msra.mxu0 0
    %877 = vmatprep.subr.bf16.mxu0 0
    %878 = vmatpush1.bf16.msra.mxu0 0
    %879 = vmatprep.subr.bf16.mxu0 0
    %880 = vmatpush1.bf16.msra.mxu0 0
    %881 = vmatprep.subr.bf16.mxu0 0
    %882 = vmatpush1.bf16.msra.mxu0 0
    %883 = vmatprep.subr.bf16.mxu0 0
    %884 = vmatpush1.bf16.msra.mxu0 %v865
    %885 = vmatprep.subr.bf16.mxu0 0
    %886 = vmatpush1.bf16.msra.mxu0 %v863
    %887 = vmatprep.subr.bf16.mxu0 0
    %888 = vmatpush2.bf16.msra.mxu0 0
    %889 = vmatprep.subr.bf16.mxu0 0
    %890 = vmatpush2.bf16.msra.mxu0 0
    %891 = vmatprep.subr.bf16.mxu0 0
    %892 = vmatpush2.bf16.msra.mxu0 0
    %893 = vmatprep.subr.bf16.mxu0 0
    %894 = vmatpush2.bf16.msra.mxu0 0
    %895 = vmatprep.subr.bf16.mxu0 0
    %896 = vmatpush2.bf16.msra.mxu0 0
    %897 = vmatprep.subr.bf16.mxu0 0
    %898 = vmatpush2.bf16.msra.mxu0 0
    %899 = vmatprep.subr.bf16.mxu0 0
    %900 = vmatpush2.bf16.msra.mxu0 0
    %901 = vmatprep.subr.bf16.mxu0 0
    %902 = vmatpush2.bf16.msra.mxu0 0
    %903 = vmatprep.mubr.bf16.mxu0 0
    %904 = vmatmul.mubr.bf16.gmra.mxu0 %v869
    %v905 = vpop.f32.mrf.mxu0
    %v906 = vadd.f32 0.0, %v905
    %v907 = vpop.f32.mrf.mxu0
    %v908 = vpop.f32.mrf.mxu0
    %v909 = vpop.f32.mrf.mxu0
    %910 = vdwg.mxu0
    %v911 = vpack.c.bf16 %v505, %v505
    %913 = vrot.lane.b32.xlu0 %v911, 32
    %v914 = vpop.permute.xlu0 %913
    %915 = vrot.lane.b32.xlu0 %v557, 32
    %v916 = vpop.permute.xlu0 %915
    %917 = vrot.lane.b32.xlu0 %v558, 32
    %v918 = vpop.permute.xlu0 %917
    %v920 = vsel %vm520, %v914, 0
    %v923 = vsel %vm520, %v916, 0
    %v926 = vsel %vm520, %v918, 0
    %928 = vmatprep.subr.bf16.mxu0 0
    %929 = vmatpush1.bf16.xpose.msra.mxu0 0
    %930 = vmatprep.subr.bf16.mxu0 0
    %931 = vmatpush1.bf16.xpose.msra.mxu0 0
    %932 = vmatprep.subr.bf16.mxu0 0
    %933 = vmatpush1.bf16.xpose.msra.mxu0 0
    %934 = vmatprep.subr.bf16.mxu0 0
    %935 = vmatpush1.bf16.xpose.msra.mxu0 0
    %936 = vmatprep.subr.bf16.mxu0 0
    %937 = vmatpush1.bf16.xpose.msra.mxu0 0
    %938 = vmatprep.subr.bf16.mxu0 0
    %939 = vmatpush1.bf16.xpose.msra.mxu0 0
    %940 = vmatprep.subr.bf16.mxu0 0
    %941 = vmatpush1.bf16.xpose.msra.mxu0 %v926
    %942 = vmatprep.subr.bf16.mxu0 0
    %943 = vmatpush1.bf16.xpose.msra.mxu0 %v923
    %944 = vmatprep.subr.bf16.mxu0 0
    %945 = vmatpush2.bf16.xpose.msra.mxu0 0
    %946 = vmatprep.subr.bf16.mxu0 0
    %947 = vmatpush2.bf16.xpose.msra.mxu0 0
    %948 = vmatprep.subr.bf16.mxu0 0
    %949 = vmatpush2.bf16.xpose.msra.mxu0 0
    %950 = vmatprep.subr.bf16.mxu0 0
    %951 = vmatpush2.bf16.xpose.msra.mxu0 0
    %952 = vmatprep.subr.bf16.mxu0 0
    %953 = vmatpush2.bf16.xpose.msra.mxu0 0
    %954 = vmatprep.subr.bf16.mxu0 0
    %955 = vmatpush2.bf16.xpose.msra.mxu0 0
    %956 = vmatprep.subr.bf16.mxu0 0
    %957 = vmatpush2.bf16.xpose.msra.mxu0 0
    %958 = vmatprep.subr.bf16.mxu0 0
    %959 = vmatpush2.bf16.xpose.msra.mxu0 0
    %960 = vmatprep.mubr.bf16.mxu0 0
    %961 = vmatmul.mubr.bf16.gmra.mxu0 %v920
    %v962 = vpop.f32.mrf.mxu0
    %v963 = vadd.f32 0.0, %v962
    %v964 = vpop.f32.mrf.mxu0
    %v965 = vpop.f32.mrf.mxu0
    %v966 = vpop.f32.mrf.mxu0
    %967 = vdwg.mxu0
    %v968 = vmul.f32 %v963, 0.17677669
    %v969 = vsel %vm140, %v968, -1e+30
    %v970 = vsel %vm520, %v969, -inf
    %971 = vmax.xlane.f32.xlu0 %v970
    %v972 = vpop.xlane.xlu0 %971
    %v973 = vsub.f32 %v969, %v972
    %v974 = vmul.f32 %v973, 1.442695
    %v975 = vpow.pop %v974
    %v976 = vsel %vm520, %v975, 0.0
    %977 = vadd.xlane.f32.xlu0 %v976
    %v978 = vpop.xlane.xlu0 %977
    %v979 = vrcp.pop %v978
    %v980 = vmul.f32 %v975, %v979
    %v981 = vpack.c.bf16 %v980, %v980
    %982 = vrot.lane.b32.xlu0 %v622, 32
    %v983 = vpop.permute.xlu0 %982
    %984 = vrot.lane.b32.xlu0 %v623, 32
    %v985 = vpop.permute.xlu0 %984
    %v989 = vsel %vm520, %v981, 0
    %991 = vmatprep.subr.bf16.mxu0 0
    %992 = vmatpush1.bf16.msra.mxu0 0
    %993 = vmatprep.subr.bf16.mxu0 0
    %994 = vmatpush1.bf16.msra.mxu0 0
    %995 = vmatprep.subr.bf16.mxu0 0
    %996 = vmatpush1.bf16.msra.mxu0 0
    %997 = vmatprep.subr.bf16.mxu0 0
    %998 = vmatpush1.bf16.msra.mxu0 0
    %999 = vmatprep.subr.bf16.mxu0 0
    %1000 = vmatpush1.bf16.msra.mxu0 0
    %1001 = vmatprep.subr.bf16.mxu0 0
    %1002 = vmatpush1.bf16.msra.mxu0 0
    %1003 = vmatprep.subr.bf16.mxu0 0
    %1004 = vmatpush1.bf16.msra.mxu0 %v985
    %1005 = vmatprep.subr.bf16.mxu0 0
    %1006 = vmatpush1.bf16.msra.mxu0 %v983
    %1007 = vmatprep.subr.bf16.mxu0 0
    %1008 = vmatpush2.bf16.msra.mxu0 0
    %1009 = vmatprep.subr.bf16.mxu0 0
    %1010 = vmatpush2.bf16.msra.mxu0 0
    %1011 = vmatprep.subr.bf16.mxu0 0
    %1012 = vmatpush2.bf16.msra.mxu0 0
    %1013 = vmatprep.subr.bf16.mxu0 0
    %1014 = vmatpush2.bf16.msra.mxu0 0
    %1015 = vmatprep.subr.bf16.mxu0 0
    %1016 = vmatpush2.bf16.msra.mxu0 0
    %1017 = vmatprep.subr.bf16.mxu0 0
    %1018 = vmatpush2.bf16.msra.mxu0 0
    %1019 = vmatprep.subr.bf16.mxu0 0
    %1020 = vmatpush2.bf16.msra.mxu0 0
    %1021 = vmatprep.subr.bf16.mxu0 0
    %1022 = vmatpush2.bf16.msra.mxu0 0
    %1023 = vmatprep.mubr.bf16.mxu0 0
    %1024 = vmatmul.mubr.bf16.gmra.mxu0 %v989
    %v1025 = vpop.f32.mrf.mxu0
    %v1026 = vadd.f32 0.0, %v1025
    %v1027 = vpop.f32.mrf.mxu0
    %v1028 = vpop.f32.mrf.mxu0
    %v1029 = vpop.f32.mrf.mxu0
    %1030 = vdwg.mxu0
    %1032 = vrot.lane.b32.xlu0 %v786, 32
    %v1033 = vpop.permute.xlu0 %1032
    %1036 = vrot.lane.b32.xlu0 %v906, 64
    %v1037 = vpop.permute.xlu0 %1036
    %1040 = vrot.lane.b32.xlu0 %v1026, 96
    %v1041 = vpop.permute.xlu0 %1040
    %v1043 = vsel %vm520, %v662, %v1033
    %v1044 = vsel %vm522, %v1043, %v1037
    %v1045 = vsel %vm524, %v1044, %v1041
    %v1046 = vld [vmem:[#allocation7] sm:$0xf]
    %v1047 = vld [vmem:[#allocation7 + $0x4] sm:$0xf]
    %v1048 = vld [vmem:[#allocation7 + $0x8] sm:$0xf]
    %v1049 = vld [vmem:[#allocation7 + $0xc] sm:$0xf]
    %v1050 = vld [vmem:[#allocation7 + $0x10] sm:$0xf]
    %v1051 = vld [vmem:[#allocation7 + $0x14] sm:$0xf]
    %v1052 = vld [vmem:[#allocation7 + $0x18] sm:$0xf]
    %v1053 = vld [vmem:[#allocation7 + $0x1c] sm:$0xf]
    %v1054 = vld [vmem:[#allocation7 + $0x20] sm:$0xf]
    %v1055 = vld [vmem:[#allocation7 + $0x24] sm:$0xf]
    %v1056 = vld [vmem:[#allocation7 + $0x28] sm:$0xf]
    %v1057 = vld [vmem:[#allocation7 + $0x2c] sm:$0xf]
    %v1058 = vld [vmem:[#allocation7 + $0x30] sm:$0xf]
    %v1059 = vld [vmem:[#allocation7 + $0x34] sm:$0xf]
    %v1060 = vld [vmem:[#allocation7 + $0x38] sm:$0xf]
    %v1061 = vld [vmem:[#allocation7 + $0x3c] sm:$0xf]
    %v1062 = vpack.c.bf16 %v1045, %v1045
    %v1079 = vunpack.c.l.b16 %v1046
    %v1080 = vunpack.c.l.b16 %v1047
    %v1081 = vunpack.c.l.b16 %v1048
    %v1082 = vunpack.c.l.b16 %v1049
    %v1083 = vunpack.c.l.b16 %v1050
    %v1084 = vunpack.c.l.b16 %v1051
    %v1085 = vunpack.c.l.b16 %v1052
    %v1086 = vunpack.c.l.b16 %v1053
    %v1087 = vunpack.c.l.b16 %v1054
    %v1088 = vunpack.c.l.b16 %v1055
    %v1089 = vunpack.c.l.b16 %v1056
    %v1090 = vunpack.c.l.b16 %v1057
    %v1091 = vunpack.c.l.b16 %v1058
    %v1092 = vunpack.c.l.b16 %v1059
    %v1093 = vunpack.c.l.b16 %v1060
    %v1094 = vunpack.c.l.b16 %v1061
    %v1095 = vpack.c.b16 %v1080, %v1079
    %v1096 = vpack.c.b16 %v1082, %v1081
    %v1097 = vpack.c.b16 %v1084, %v1083
    %v1098 = vpack.c.b16 %v1086, %v1085
    %v1099 = vpack.c.b16 %v1088, %v1087
    %v1100 = vpack.c.b16 %v1090, %v1089
    %v1101 = vpack.c.b16 %v1092, %v1091
    %v1102 = vpack.c.b16 %v1094, %v1093
    %1111 = vmatprep.subr.bf16.mxu0 0
    %1112 = vmatpush1.bf16.msra.mxu0 %v1102
    %1113 = vmatprep.subr.bf16.mxu0 0
    %1114 = vmatpush1.bf16.msra.mxu0 %v1101
    %1115 = vmatprep.subr.bf16.mxu0 0
    %1116 = vmatpush1.bf16.msra.mxu0 %v1100
    %1117 = vmatprep.subr.bf16.mxu0 0
    %1118 = vmatpush1.bf16.msra.mxu0 %v1099
    %1119 = vmatprep.subr.bf16.mxu0 0
    %1120 = vmatpush1.bf16.msra.mxu0 %v1098
    %1121 = vmatprep.subr.bf16.mxu0 0
    %1122 = vmatpush1.bf16.msra.mxu0 %v1097
    %1123 = vmatprep.subr.bf16.mxu0 0
    %1124 = vmatpush1.bf16.msra.mxu0 %v1096
    %1125 = vmatprep.subr.bf16.mxu0 0
    %1126 = vmatpush1.bf16.msra.mxu0 %v1095
    %1127 = vmatprep.subr.bf16.mxu0 0
    %1128 = vmatpush2.bf16.msra.mxu0 0
    %1129 = vmatprep.subr.bf16.mxu0 0
    %1130 = vmatpush2.bf16.msra.mxu0 0
    %1131 = vmatprep.subr.bf16.mxu0 0
    %1132 = vmatpush2.bf16.msra.mxu0 0
    %1133 = vmatprep.subr.bf16.mxu0 0
    %1134 = vmatpush2.bf16.msra.mxu0 0
    %1135 = vmatprep.subr.bf16.mxu0 0
    %1136 = vmatpush2.bf16.msra.mxu0 0
    %1137 = vmatprep.subr.bf16.mxu0 0
    %1138 = vmatpush2.bf16.msra.mxu0 0
    %1139 = vmatprep.subr.bf16.mxu0 0
    %1140 = vmatpush2.bf16.msra.mxu0 0
    %1141 = vmatprep.subr.bf16.mxu0 0
    %1142 = vmatpush2.bf16.msra.mxu0 0
    %1143 = vmatprep.mubr.bf16.mxu0 0
    %1144 = vmatmul.mubr.bf16.gmra.mxu0 %v1062
    %v1145 = vpop.f32.mrf.mxu0
    %v1146 = vadd.f32 0.0, %v1145
    %v1147 = vpop.f32.mrf.mxu0
    %v1148 = vpop.f32.mrf.mxu0
    %v1149 = vpop.f32.mrf.mxu0
    %1150 = vdwg.mxu0
    %v1151 = vadd.f32 %v133, %v1146
    %v1152 = vld [vmem:[%s8] sm:$0x1]
    %v1153 = vmul.f32 %v1151, %v1151
    %1154 = vadd.xlane.f32.xlu0 %v1153
    %v1155 = vpop.xlane.xlu0 %1154
    %v1156 = vmul.f32 %v1155, %v145
    %v1157 = vadd.f32 %v1156, 1e-06
    %v1158 = vrsqrt.pop %v1157
    %v1159 = vmul.f32 %v1151, %v1158
    %v1161 = vlaneseq
    %v1162 = vshrl.u32 %v1161, 7
    %v1163 = vsub.s32 0, %v1162
    %v1164 = vrot.slane %v1152, %v1163
    %v1166 = vmul.f32 %v1159, %v1164
    %v1167 = vld [vmem:[#allocation9] sm:$0xff]
    %v1168 = vld [vmem:[#allocation9 + $0x8] sm:$0xff]
    %v1169 = vld [vmem:[#allocation9 + $0x10] sm:$0xff]
    %v1170 = vld [vmem:[#allocation9 + $0x18] sm:$0xff]
    %v1171 = vld [vmem:[#allocation9 + $0x20] sm:$0xff]
    %v1172 = vld [vmem:[#allocation9 + $0x28] sm:$0xff]
    %v1173 = vld [vmem:[#allocation9 + $0x30] sm:$0xff]
    %v1174 = vld [vmem:[#allocation9 + $0x38] sm:$0xff]
    %v1175 = vld [vmem:[#allocation9 + $0x40] sm:$0xff]
    %v1176 = vld [vmem:[#allocation9 + $0x48] sm:$0xff]
    %v1177 = vld [vmem:[#allocation9 + $0x50] sm:$0xff]
    %v1178 = vld [vmem:[#allocation9 + $0x58] sm:$0xff]
    %v1179 = vld [vmem:[#allocation9 + $0x60] sm:$0xff]
    %v1180 = vld [vmem:[#allocation9 + $0x68] sm:$0xff]
    %v1181 = vld [vmem:[#allocation9 + $0x70] sm:$0xff]
    %v1182 = vld [vmem:[#allocation9 + $0x78] sm:$0xff]
    %v1183 = vld [vmem:[#allocation9 + $0x80] sm:$0xff]
    %v1184 = vld [vmem:[#allocation9 + $0x88] sm:$0xff]
    %v1185 = vld [vmem:[#allocation9 + $0x90] sm:$0xff]
    %v1186 = vld [vmem:[#allocation9 + $0x98] sm:$0xff]
    %v1187 = vld [vmem:[#allocation9 + $0xa0] sm:$0xff]
    %v1188 = vld [vmem:[#allocation9 + $0xa8] sm:$0xff]
    %v1189 = vld [vmem:[#allocation9 + $0xb0] sm:$0xff]
    %v1190 = vld [vmem:[#allocation9 + $0xb8] sm:$0xff]
    %v1191 = vld [vmem:[#allocation9 + $0xc0] sm:$0xff]
    %v1192 = vld [vmem:[#allocation9 + $0xc8] sm:$0xff]
    %v1193 = vld [vmem:[#allocation9 + $0xd0] sm:$0xff]
    %v1194 = vld [vmem:[#allocation9 + $0xd8] sm:$0xff]
    %v1195 = vld [vmem:[#allocation9 + $0xe0] sm:$0xff]
    %v1196 = vld [vmem:[#allocation9 + $0xe8] sm:$0xff]
    %v1197 = vld [vmem:[#allocation9 + $0xf0] sm:$0xff]
    %v1198 = vld [vmem:[#allocation9 + $0xf8] sm:$0xff]
    %v1199 = vpack.c.bf16 %v1166, %v1166
    %v1232 = vunpack.c.l.b16 %v1167
    %v1233 = vunpack.c.h.b16 %v1167
    %v1234 = vunpack.c.l.b16 %v1168
    %v1235 = vunpack.c.h.b16 %v1168
    %v1236 = vunpack.c.l.b16 %v1169
    %v1237 = vunpack.c.h.b16 %v1169
    %v1238 = vunpack.c.l.b16 %v1170
    %v1239 = vunpack.c.h.b16 %v1170
    %v1240 = vunpack.c.l.b16 %v1171
    %v1241 = vunpack.c.h.b16 %v1171
    %v1242 = vunpack.c.l.b16 %v1172
    %v1243 = vunpack.c.h.b16 %v1172
    %v1244 = vunpack.c.l.b16 %v1173
    %v1245 = vunpack.c.h.b16 %v1173
    %v1246 = vunpack.c.l.b16 %v1174
    %v1247 = vunpack.c.h.b16 %v1174
    %v1248 = vunpack.c.l.b16 %v1175
    %v1249 = vunpack.c.h.b16 %v1175
    %v1250 = vunpack.c.l.b16 %v1176
    %v1251 = vunpack.c.h.b16 %v1176
    %v1252 = vunpack.c.l.b16 %v1177
    %v1253 = vunpack.c.h.b16 %v1177
    %v1254 = vunpack.c.l.b16 %v1178
    %v1255 = vunpack.c.h.b16 %v1178
    %v1256 = vunpack.c.l.b16 %v1179
    %v1257 = vunpack.c.h.b16 %v1179
    %v1258 = vunpack.c.l.b16 %v1180
    %v1259 = vunpack.c.h.b16 %v1180
    %v1260 = vunpack.c.l.b16 %v1181
    %v1261 = vunpack.c.h.b16 %v1181
    %v1262 = vunpack.c.l.b16 %v1182
    %v1263 = vunpack.c.h.b16 %v1182
    %v1264 = vunpack.c.l.b16 %v1183
    %v1265 = vunpack.c.h.b16 %v1183
    %v1266 = vunpack.c.l.b16 %v1184
    %v1267 = vunpack.c.h.b16 %v1184
    %v1268 = vunpack.c.l.b16 %v1185
    %v1269 = vunpack.c.h.b16 %v1185
    %v1270 = vunpack.c.l.b16 %v1186
    %v1271 = vunpack.c.h.b16 %v1186
    %v1272 = vunpack.c.l.b16 %v1187
    %v1273 = vunpack.c.h.b16 %v1187
    %v1274 = vunpack.c.l.b16 %v1188
    %v1275 = vunpack.c.h.b16 %v1188
    %v1276 = vunpack.c.l.b16 %v1189
    %v1277 = vunpack.c.h.b16 %v1189
    %v1278 = vunpack.c.l.b16 %v1190
    %v1279 = vunpack.c.h.b16 %v1190
    %v1280 = vunpack.c.l.b16 %v1191
    %v1281 = vunpack.c.h.b16 %v1191
    %v1282 = vunpack.c.l.b16 %v1192
    %v1283 = vunpack.c.h.b16 %v1192
    %v1284 = vunpack.c.l.b16 %v1193
    %v1285 = vunpack.c.h.b16 %v1193
    %v1286 = vunpack.c.l.b16 %v1194
    %v1287 = vunpack.c.h.b16 %v1194
    %v1288 = vunpack.c.l.b16 %v1195
    %v1289 = vunpack.c.h.b16 %v1195
    %v1290 = vunpack.c.l.b16 %v1196
    %v1291 = vunpack.c.h.b16 %v1196
    %v1292 = vunpack.c.l.b16 %v1197
    %v1293 = vunpack.c.h.b16 %v1197
    %v1294 = vunpack.c.l.b16 %v1198
    %v1295 = vunpack.c.h.b16 %v1198
    %v1296 = vpack.c.b16 %v1236, %v1232
    %v1297 = vpack.c.b16 %v1237, %v1233
    %v1298 = vpack.c.b16 %v1238, %v1234
    %v1299 = vpack.c.b16 %v1239, %v1235
    %v1300 = vpack.c.b16 %v1244, %v1240
    %v1301 = vpack.c.b16 %v1245, %v1241
    %v1302 = vpack.c.b16 %v1246, %v1242
    %v1303 = vpack.c.b16 %v1247, %v1243
    %v1304 = vpack.c.b16 %v1252, %v1248
    %v1305 = vpack.c.b16 %v1253, %v1249
    %v1306 = vpack.c.b16 %v1254, %v1250
    %v1307 = vpack.c.b16 %v1255, %v1251
    %v1308 = vpack.c.b16 %v1260, %v1256
    %v1309 = vpack.c.b16 %v1261, %v1257
    %v1310 = vpack.c.b16 %v1262, %v1258
    %v1311 = vpack.c.b16 %v1263, %v1259
    %v1312 = vpack.c.b16 %v1268, %v1264
    %v1313 = vpack.c.b16 %v1269, %v1265
    %v1314 = vpack.c.b16 %v1270, %v1266
    %v1315 = vpack.c.b16 %v1271, %v1267
    %v1316 = vpack.c.b16 %v1276, %v1272
    %v1317 = vpack.c.b16 %v1277, %v1273
    %v1318 = vpack.c.b16 %v1278, %v1274
    %v1319 = vpack.c.b16 %v1279, %v1275
    %v1320 = vpack.c.b16 %v1284, %v1280
    %v1321 = vpack.c.b16 %v1285, %v1281
    %v1322 = vpack.c.b16 %v1286, %v1282
    %v1323 = vpack.c.b16 %v1287, %v1283
    %v1324 = vpack.c.b16 %v1292, %v1288
    %v1325 = vpack.c.b16 %v1293, %v1289
    %v1326 = vpack.c.b16 %v1294, %v1290
    %v1327 = vpack.c.b16 %v1295, %v1291
    %1360 = vmatprep.subr.bf16.mxu0 %v1325
    %1361 = vmatpush1.bf16.msra.mxu0 %v1324
    %1362 = vmatprep.subr.bf16.mxu0 %v1321
    %1363 = vmatpush1.bf16.msra.mxu0 %v1320
    %1364 = vmatprep.subr.bf16.mxu0 %v1317
    %1365 = vmatpush1.bf16.msra.mxu0 %v1316
    %1366 = vmatprep.subr.bf16.mxu0 %v1313
    %1367 = vmatpush1.bf16.msra.mxu0 %v1312
    %1368 = vmatprep.subr.bf16.mxu0 %v1309
    %1369 = vmatpush1.bf16.msra.mxu0 %v1308
    %1370 = vmatprep.subr.bf16.mxu0 %v1305
    %1371 = vmatpush1.bf16.msra.mxu0 %v1304
    %1372 = vmatprep.subr.bf16.mxu0 %v1301
    %1373 = vmatpush1.bf16.msra.mxu0 %v1300
    %1374 = vmatprep.subr.bf16.mxu0 %v1297
    %1375 = vmatpush1.bf16.msra.mxu0 %v1296
    %1376 = vmatprep.subr.bf16.mxu0 0
    %1377 = vmatpush2.bf16.msra.mxu0 0
    %1378 = vmatprep.subr.bf16.mxu0 0
    %1379 = vmatpush2.bf16.msra.mxu0 0
    %1380 = vmatprep.subr.bf16.mxu0 0
    %1381 = vmatpush2.bf16.msra.mxu0 0
    %1382 = vmatprep.subr.bf16.mxu0 0
    %1383 = vmatpush2.bf16.msra.mxu0 0
    %1384 = vmatprep.subr.bf16.mxu0 0
    %1385 = vmatpush2.bf16.msra.mxu0 0
    %1386 = vmatprep.subr.bf16.mxu0 0
    %1387 = vmatpush2.bf16.msra.mxu0 0
    %1388 = vmatprep.subr.bf16.mxu0 0
    %1389 = vmatpush2.bf16.msra.mxu0 0
    %1390 = vmatprep.subr.bf16.mxu0 0
    %1391 = vmatpush2.bf16.msra.mxu0 0
    %1392 = vmatprep.mubr.bf16.mxu0 0
    %1393 = vmatmul.mubr.bf16.gmra.mxu0 %v1199
    %v1394 = vpop.f32.mrf.mxu0
    %v1395 = vadd.f32 0.0, %v1394
    %v1396 = vpop.f32.mrf.mxu0
    %v1397 = vadd.f32 0.0, %v1396
    %v1398 = vpop.f32.mrf.mxu0
    %v1399 = vpop.f32.mrf.mxu0
    %1400 = vdwg.mxu0
    %1401 = vmatprep.subr.bf16.mxu0 %v1327
    %1402 = vmatpush1.bf16.msra.mxu0 %v1326
    %1403 = vmatprep.subr.bf16.mxu0 %v1323
    %1404 = vmatpush1.bf16.msra.mxu0 %v1322
    %1405 = vmatprep.subr.bf16.mxu0 %v1319
    %1406 = vmatpush1.bf16.msra.mxu0 %v1318
    %1407 = vmatprep.subr.bf16.mxu0 %v1315
    %1408 = vmatpush1.bf16.msra.mxu0 %v1314
    %1409 = vmatprep.subr.bf16.mxu0 %v1311
    %1410 = vmatpush1.bf16.msra.mxu0 %v1310
    %1411 = vmatprep.subr.bf16.mxu0 %v1307
    %1412 = vmatpush1.bf16.msra.mxu0 %v1306
    %1413 = vmatprep.subr.bf16.mxu0 %v1303
    %1414 = vmatpush1.bf16.msra.mxu0 %v1302
    %1415 = vmatprep.subr.bf16.mxu0 %v1299
    %1416 = vmatpush1.bf16.msra.mxu0 %v1298
    %1417 = vmatprep.subr.bf16.mxu0 0
    %1418 = vmatpush2.bf16.msra.mxu0 0
    %1419 = vmatprep.subr.bf16.mxu0 0
    %1420 = vmatpush2.bf16.msra.mxu0 0
    %1421 = vmatprep.subr.bf16.mxu0 0
    %1422 = vmatpush2.bf16.msra.mxu0 0
    %1423 = vmatprep.subr.bf16.mxu0 0
    %1424 = vmatpush2.bf16.msra.mxu0 0
    %1425 = vmatprep.subr.bf16.mxu0 0
    %1426 = vmatpush2.bf16.msra.mxu0 0
    %1427 = vmatprep.subr.bf16.mxu0 0
    %1428 = vmatpush2.bf16.msra.mxu0 0
    %1429 = vmatprep.subr.bf16.mxu0 0
    %1430 = vmatpush2.bf16.msra.mxu0 0
    %1431 = vmatprep.subr.bf16.mxu0 0
    %1432 = vmatpush2.bf16.msra.mxu0 0
    %1433 = vmatprep.mubr.bf16.mxu0 0
    %1434 = vmatmul.mubr.bf16.gmra.mxu0 %v1199
    %v1435 = vpop.f32.mrf.mxu0
    %v1436 = vadd.f32 0.0, %v1435
    %v1437 = vpop.f32.mrf.mxu0
    %v1438 = vadd.f32 0.0, %v1437
    %v1439 = vpop.f32.mrf.mxu0
    %v1440 = vpop.f32.mrf.mxu0
    %1441 = vdwg.mxu0
    %v1442 = vxor.u32 %v1395, 2147483648
    %v1443 = vxor.u32 %v1397, 2147483648
    %v1444 = vmul.f32 %v1442, 1.442695
    %v1445 = vpow.pop %v1444
    %v1446 = vmul.f32 %v1443, 1.442695
    %v1447 = vpow.pop %v1446
    %v1448 = vadd.f32 %v1445, 1.0
    %v1449 = vadd.f32 %v1447, 1.0
    %v1450 = vrcp.pop %v1448
    %v1451 = vmul.f32 1.0, %v1450
    %v1452 = vrcp.pop %v1449
    %v1453 = vmul.f32 1.0, %v1452
    %v1454 = vmul.f32 %v1395, %v1451
    %v1455 = vmul.f32 %v1397, %v1453
    %v1456 = vmul.f32 %v1454, %v1436
    %v1457 = vmul.f32 %v1455, %v1438
    %v1458 = vld [vmem:[#allocation10] sm:$0xf]
    %v1459 = vld [vmem:[#allocation10 + $0x4] sm:$0xf]
    %v1460 = vld [vmem:[#allocation10 + $0x8] sm:$0xf]
    %v1461 = vld [vmem:[#allocation10 + $0xc] sm:$0xf]
    %v1462 = vld [vmem:[#allocation10 + $0x10] sm:$0xf]
    %v1463 = vld [vmem:[#allocation10 + $0x14] sm:$0xf]
    %v1464 = vld [vmem:[#allocation10 + $0x18] sm:$0xf]
    %v1465 = vld [vmem:[#allocation10 + $0x1c] sm:$0xf]
    %v1466 = vld [vmem:[#allocation10 + $0x20] sm:$0xf]
    %v1467 = vld [vmem:[#allocation10 + $0x24] sm:$0xf]
    %v1468 = vld [vmem:[#allocation10 + $0x28] sm:$0xf]
    %v1469 = vld [vmem:[#allocation10 + $0x2c] sm:$0xf]
    %v1470 = vld [vmem:[#allocation10 + $0x30] sm:$0xf]
    %v1471 = vld [vmem:[#allocation10 + $0x34] sm:$0xf]
    %v1472 = vld [vmem:[#allocation10 + $0x38] sm:$0xf]
    %v1473 = vld [vmem:[#allocation10 + $0x3c] sm:$0xf]
    %v1474 = vld [vmem:[#allocation10 + $0x40] sm:$0xf]
    %v1475 = vld [vmem:[#allocation10 + $0x44] sm:$0xf]
    %v1476 = vld [vmem:[#allocation10 + $0x48] sm:$0xf]
    %v1477 = vld [vmem:[#allocation10 + $0x4c] sm:$0xf]
    %v1478 = vld [vmem:[#allocation10 + $0x50] sm:$0xf]
    %v1479 = vld [vmem:[#allocation10 + $0x54] sm:$0xf]
    %v1480 = vld [vmem:[#allocation10 + $0x58] sm:$0xf]
    %v1481 = vld [vmem:[#allocation10 + $0x5c] sm:$0xf]
    %v1482 = vld [vmem:[#allocation10 + $0x60] sm:$0xf]
    %v1483 = vld [vmem:[#allocation10 + $0x64] sm:$0xf]
    %v1484 = vld [vmem:[#allocation10 + $0x68] sm:$0xf]
    %v1485 = vld [vmem:[#allocation10 + $0x6c] sm:$0xf]
    %v1486 = vld [vmem:[#allocation10 + $0x70] sm:$0xf]
    %v1487 = vld [vmem:[#allocation10 + $0x74] sm:$0xf]
    %v1488 = vld [vmem:[#allocation10 + $0x78] sm:$0xf]
    %v1489 = vld [vmem:[#allocation10 + $0x7c] sm:$0xf]
    %v1490 = vpack.c.bf16 %v1456, %v1456
    %v1491 = vpack.c.bf16 %v1457, %v1457
    %v1524 = vunpack.c.l.b16 %v1458
    %v1525 = vunpack.c.l.b16 %v1459
    %v1526 = vunpack.c.l.b16 %v1460
    %v1527 = vunpack.c.l.b16 %v1461
    %v1528 = vunpack.c.l.b16 %v1462
    %v1529 = vunpack.c.l.b16 %v1463
    %v1530 = vunpack.c.l.b16 %v1464
    %v1531 = vunpack.c.l.b16 %v1465
    %v1532 = vunpack.c.l.b16 %v1466
    %v1533 = vunpack.c.l.b16 %v1467
    %v1534 = vunpack.c.l.b16 %v1468
    %v1535 = vunpack.c.l.b16 %v1469
    %v1536 = vunpack.c.l.b16 %v1470
    %v1537 = vunpack.c.l.b16 %v1471
    %v1538 = vunpack.c.l.b16 %v1472
    %v1539 = vunpack.c.l.b16 %v1473
    %v1540 = vunpack.c.l.b16 %v1474
    %v1541 = vunpack.c.l.b16 %v1475
    %v1542 = vunpack.c.l.b16 %v1476
    %v1543 = vunpack.c.l.b16 %v1477
    %v1544 = vunpack.c.l.b16 %v1478
    %v1545 = vunpack.c.l.b16 %v1479
    %v1546 = vunpack.c.l.b16 %v1480
    %v1547 = vunpack.c.l.b16 %v1481
    %v1548 = vunpack.c.l.b16 %v1482
    %v1549 = vunpack.c.l.b16 %v1483
    %v1550 = vunpack.c.l.b16 %v1484
    %v1551 = vunpack.c.l.b16 %v1485
    %v1552 = vunpack.c.l.b16 %v1486
    %v1553 = vunpack.c.l.b16 %v1487
    %v1554 = vunpack.c.l.b16 %v1488
    %v1555 = vunpack.c.l.b16 %v1489
    %v1556 = vpack.c.b16 %v1525, %v1524
    %v1557 = vpack.c.b16 %v1527, %v1526
    %v1558 = vpack.c.b16 %v1529, %v1528
    %v1559 = vpack.c.b16 %v1531, %v1530
    %v1560 = vpack.c.b16 %v1533, %v1532
    %v1561 = vpack.c.b16 %v1535, %v1534
    %v1562 = vpack.c.b16 %v1537, %v1536
    %v1563 = vpack.c.b16 %v1539, %v1538
    %v1564 = vpack.c.b16 %v1541, %v1540
    %v1565 = vpack.c.b16 %v1543, %v1542
    %v1566 = vpack.c.b16 %v1545, %v1544
    %v1567 = vpack.c.b16 %v1547, %v1546
    %v1568 = vpack.c.b16 %v1549, %v1548
    %v1569 = vpack.c.b16 %v1551, %v1550
    %v1570 = vpack.c.b16 %v1553, %v1552
    %v1571 = vpack.c.b16 %v1555, %v1554
    %1588 = vmatprep.subr.bf16.mxu0 0
    %1589 = vmatpush1.bf16.msra.mxu0 %v1563
    %1590 = vmatprep.subr.bf16.mxu0 0
    %1591 = vmatpush1.bf16.msra.mxu0 %v1562
    %1592 = vmatprep.subr.bf16.mxu0 0
    %1593 = vmatpush1.bf16.msra.mxu0 %v1561
    %1594 = vmatprep.subr.bf16.mxu0 0
    %1595 = vmatpush1.bf16.msra.mxu0 %v1560
    %1596 = vmatprep.subr.bf16.mxu0 0
    %1597 = vmatpush1.bf16.msra.mxu0 %v1559
    %1598 = vmatprep.subr.bf16.mxu0 0
    %1599 = vmatpush1.bf16.msra.mxu0 %v1558
    %1600 = vmatprep.subr.bf16.mxu0 0
    %1601 = vmatpush1.bf16.msra.mxu0 %v1557
    %1602 = vmatprep.subr.bf16.mxu0 0
    %1603 = vmatpush1.bf16.msra.mxu0 %v1556
    %1604 = vmatprep.subr.bf16.mxu0 0
    %1605 = vmatpush2.bf16.msra.mxu0 %v1571
    %1606 = vmatprep.subr.bf16.mxu0 0
    %1607 = vmatpush2.bf16.msra.mxu0 %v1570
    %1608 = vmatprep.subr.bf16.mxu0 0
    %1609 = vmatpush2.bf16.msra.mxu0 %v1569
    %1610 = vmatprep.subr.bf16.mxu0 0
    %1611 = vmatpush2.bf16.msra.mxu0 %v1568
    %1612 = vmatprep.subr.bf16.mxu0 0
    %1613 = vmatpush2.bf16.msra.mxu0 %v1567
    %1614 = vmatprep.subr.bf16.mxu0 0
    %1615 = vmatpush2.bf16.msra.mxu0 %v1566
    %1616 = vmatprep.subr.bf16.mxu0 0
    %1617 = vmatpush2.bf16.msra.mxu0 %v1565
    %1618 = vmatprep.subr.bf16.mxu0 0
    %1619 = vmatpush2.bf16.msra.mxu0 %v1564
    %1620 = vmatprep.mubr.bf16.mxu0 %v1491
    %1621 = vmatmul.mubr.bf16.gmra.mxu0 %v1490
    %v1622 = vpop.f32.mrf.mxu0
    %v1623 = vadd.f32 0.0, %v1622
    %v1624 = vpop.f32.mrf.mxu0
    %v1625 = vpop.f32.mrf.mxu0
    %v1626 = vpop.f32.mrf.mxu0
    %1627 = vdwg.mxu0
    %v1628 = vadd.f32 %v1151, %v1623
    %s1629 = scalar_lea.vmem %s5, 1
    %v1630 = vld [vmem:[%s1629] sm:$0x1]
    %v1631 = vmul.f32 %v1628, %v1628
    %1632 = vadd.xlane.f32.xlu0 %v1631
    %v1633 = vpop.xlane.xlu0 %1632
    %v1634 = vmul.f32 %v1633, %v145
    %v1635 = vadd.f32 %v1634, 1e-06
    %v1636 = vrsqrt.pop %v1635
    %v1637 = vmul.f32 %v1628, %v1636
    %v1639 = vlaneseq
    %v1640 = vshrl.u32 %v1639, 7
    %v1641 = vsub.s32 0, %v1640
    %v1642 = vrot.slane %v1630, %v1641
    %v1644 = vmul.f32 %v1637, %v1642
    %s1645 = scalar_lea.vmem [#allocation6], 192
    %v1646 = vld [vmem:[%s1645] sm:$0xff]
    %v1647 = vld [vmem:[%s1645 + $0x8] sm:$0xf]
    %v1648 = vld [vmem:[%s1645 + $0xc] sm:$0xff]
    %v1649 = vld [vmem:[%s1645 + $0x14] sm:$0xf]
    %v1650 = vld [vmem:[%s1645 + $0x18] sm:$0xff]
    %v1651 = vld [vmem:[%s1645 + $0x20] sm:$0xf]
    %v1652 = vld [vmem:[%s1645 + $0x24] sm:$0xff]
    %v1653 = vld [vmem:[%s1645 + $0x2c] sm:$0xf]
    %v1654 = vld [vmem:[%s1645 + $0x30] sm:$0xff]
    %v1655 = vld [vmem:[%s1645 + $0x38] sm:$0xf]
    %v1656 = vld [vmem:[%s1645 + $0x3c] sm:$0xff]
    %v1657 = vld [vmem:[%s1645 + $0x44] sm:$0xf]
    %v1658 = vld [vmem:[%s1645 + $0x48] sm:$0xff]
    %v1659 = vld [vmem:[%s1645 + $0x50] sm:$0xf]
    %v1660 = vld [vmem:[%s1645 + $0x54] sm:$0xff]
    %v1661 = vld [vmem:[%s1645 + $0x5c] sm:$0xf]
    %v1662 = vld [vmem:[%s1645 + $0x60] sm:$0xff]
    %v1663 = vld [vmem:[%s1645 + $0x68] sm:$0xf]
    %v1664 = vld [vmem:[%s1645 + $0x6c] sm:$0xff]
    %v1665 = vld [vmem:[%s1645 + $0x74] sm:$0xf]
    %v1666 = vld [vmem:[%s1645 + $0x78] sm:$0xff]
    %v1667 = vld [vmem:[%s1645 + $0x80] sm:$0xf]
    %v1668 = vld [vmem:[%s1645 + $0x84] sm:$0xff]
    %v1669 = vld [vmem:[%s1645 + $0x8c] sm:$0xf]
    %v1670 = vld [vmem:[%s1645 + $0x90] sm:$0xff]
    %v1671 = vld [vmem:[%s1645 + $0x98] sm:$0xf]
    %v1672 = vld [vmem:[%s1645 + $0x9c] sm:$0xff]
    %v1673 = vld [vmem:[%s1645 + $0xa4] sm:$0xf]
    %v1674 = vld [vmem:[%s1645 + $0xa8] sm:$0xff]
    %v1675 = vld [vmem:[%s1645 + $0xb0] sm:$0xf]
    %v1676 = vld [vmem:[%s1645 + $0xb4] sm:$0xff]
    %v1677 = vld [vmem:[%s1645 + $0xbc] sm:$0xf]
    %v1678 = vpack.c.bf16 %v1644, %v1644
    %v1711 = vunpack.c.l.b16 %v1646
    %v1712 = vunpack.c.h.b16 %v1646
    %v1713 = vunpack.c.l.b16 %v1647
    %v1714 = vunpack.c.l.b16 %v1648
    %v1715 = vunpack.c.h.b16 %v1648
    %v1716 = vunpack.c.l.b16 %v1649
    %v1717 = vunpack.c.l.b16 %v1650
    %v1718 = vunpack.c.h.b16 %v1650
    %v1719 = vunpack.c.l.b16 %v1651
    %v1720 = vunpack.c.l.b16 %v1652
    %v1721 = vunpack.c.h.b16 %v1652
    %v1722 = vunpack.c.l.b16 %v1653
    %v1723 = vunpack.c.l.b16 %v1654
    %v1724 = vunpack.c.h.b16 %v1654
    %v1725 = vunpack.c.l.b16 %v1655
    %v1726 = vunpack.c.l.b16 %v1656
    %v1727 = vunpack.c.h.b16 %v1656
    %v1728 = vunpack.c.l.b16 %v1657
    %v1729 = vunpack.c.l.b16 %v1658
    %v1730 = vunpack.c.h.b16 %v1658
    %v1731 = vunpack.c.l.b16 %v1659
    %v1732 = vunpack.c.l.b16 %v1660
    %v1733 = vunpack.c.h.b16 %v1660
    %v1734 = vunpack.c.l.b16 %v1661
    %v1735 = vunpack.c.l.b16 %v1662
    %v1736 = vunpack.c.h.b16 %v1662
    %v1737 = vunpack.c.l.b16 %v1663
    %v1738 = vunpack.c.l.b16 %v1664
    %v1739 = vunpack.c.h.b16 %v1664
    %v1740 = vunpack.c.l.b16 %v1665
    %v1741 = vunpack.c.l.b16 %v1666
    %v1742 = vunpack.c.h.b16 %v1666
    %v1743 = vunpack.c.l.b16 %v1667
    %v1744 = vunpack.c.l.b16 %v1668
    %v1745 = vunpack.c.h.b16 %v1668
    %v1746 = vunpack.c.l.b16 %v1669
    %v1747 = vunpack.c.l.b16 %v1670
    %v1748 = vunpack.c.h.b16 %v1670
    %v1749 = vunpack.c.l.b16 %v1671
    %v1750 = vunpack.c.l.b16 %v1672
    %v1751 = vunpack.c.h.b16 %v1672
    %v1752 = vunpack.c.l.b16 %v1673
    %v1753 = vunpack.c.l.b16 %v1674
    %v1754 = vunpack.c.h.b16 %v1674
    %v1755 = vunpack.c.l.b16 %v1675
    %v1756 = vunpack.c.l.b16 %v1676
    %v1757 = vunpack.c.h.b16 %v1676
    %v1758 = vunpack.c.l.b16 %v1677
    %v1759 = vpack.c.b16 %v1714, %v1711
    %v1760 = vpack.c.b16 %v1715, %v1712
    %v1761 = vpack.c.b16 %v1716, %v1713
    %v1762 = vpack.c.b16 %v1720, %v1717
    %v1763 = vpack.c.b16 %v1721, %v1718
    %v1764 = vpack.c.b16 %v1722, %v1719
    %v1765 = vpack.c.b16 %v1726, %v1723
    %v1766 = vpack.c.b16 %v1727, %v1724
    %v1767 = vpack.c.b16 %v1728, %v1725
    %v1768 = vpack.c.b16 %v1732, %v1729
    %v1769 = vpack.c.b16 %v1733, %v1730
    %v1770 = vpack.c.b16 %v1734, %v1731
    %v1771 = vpack.c.b16 %v1738, %v1735
    %v1772 = vpack.c.b16 %v1739, %v1736
    %v1773 = vpack.c.b16 %v1740, %v1737
    %v1774 = vpack.c.b16 %v1744, %v1741
    %v1775 = vpack.c.b16 %v1745, %v1742
    %v1776 = vpack.c.b16 %v1746, %v1743
    %v1777 = vpack.c.b16 %v1750, %v1747
    %v1778 = vpack.c.b16 %v1751, %v1748
    %v1779 = vpack.c.b16 %v1752, %v1749
    %v1780 = vpack.c.b16 %v1756, %v1753
    %v1781 = vpack.c.b16 %v1757, %v1754
    %v1782 = vpack.c.b16 %v1758, %v1755
    %1807 = vmatprep.subr.bf16.mxu0 %v1781
    %1808 = vmatpush1.bf16.msra.mxu0 %v1780
    %1809 = vmatprep.subr.bf16.mxu0 %v1778
    %1810 = vmatpush1.bf16.msra.mxu0 %v1777
    %1811 = vmatprep.subr.bf16.mxu0 %v1775
    %1812 = vmatpush1.bf16.msra.mxu0 %v1774
    %1813 = vmatprep.subr.bf16.mxu0 %v1772
    %1814 = vmatpush1.bf16.msra.mxu0 %v1771
    %1815 = vmatprep.subr.bf16.mxu0 %v1769
    %1816 = vmatpush1.bf16.msra.mxu0 %v1768
    %1817 = vmatprep.subr.bf16.mxu0 %v1766
    %1818 = vmatpush1.bf16.msra.mxu0 %v1765
    %1819 = vmatprep.subr.bf16.mxu0 %v1763
    %1820 = vmatpush1.bf16.msra.mxu0 %v1762
    %1821 = vmatprep.subr.bf16.mxu0 %v1760
    %1822 = vmatpush1.bf16.msra.mxu0 %v1759
    %1823 = vmatprep.subr.bf16.mxu0 0
    %1824 = vmatpush2.bf16.msra.mxu0 0
    %1825 = vmatprep.subr.bf16.mxu0 0
    %1826 = vmatpush2.bf16.msra.mxu0 0
    %1827 = vmatprep.subr.bf16.mxu0 0
    %1828 = vmatpush2.bf16.msra.mxu0 0
    %1829 = vmatprep.subr.bf16.mxu0 0
    %1830 = vmatpush2.bf16.msra.mxu0 0
    %1831 = vmatprep.subr.bf16.mxu0 0
    %1832 = vmatpush2.bf16.msra.mxu0 0
    %1833 = vmatprep.subr.bf16.mxu0 0
    %1834 = vmatpush2.bf16.msra.mxu0 0
    %1835 = vmatprep.subr.bf16.mxu0 0
    %1836 = vmatpush2.bf16.msra.mxu0 0
    %1837 = vmatprep.subr.bf16.mxu0 0
    %1838 = vmatpush2.bf16.msra.mxu0 0
    %1839 = vmatprep.mubr.bf16.mxu0 0
    %1840 = vmatmul.mubr.bf16.gmra.mxu0 %v1678
    %v1841 = vpop.f32.mrf.mxu0
    %v1842 = vadd.f32 0.0, %v1841
    %v1843 = vpop.f32.mrf.mxu0
    %v1844 = vadd.f32 0.0, %v1843
    %v1845 = vpop.f32.mrf.mxu0
    %v1846 = vpop.f32.mrf.mxu0
    %1847 = vdwg.mxu0
    %1848 = vmatprep.subr.bf16.mxu0 0
    %1849 = vmatpush1.bf16.msra.mxu0 %v1782
    %1850 = vmatprep.subr.bf16.mxu0 0
    %1851 = vmatpush1.bf16.msra.mxu0 %v1779
    %1852 = vmatprep.subr.bf16.mxu0 0
    %1853 = vmatpush1.bf16.msra.mxu0 %v1776
    %1854 = vmatprep.subr.bf16.mxu0 0
    %1855 = vmatpush1.bf16.msra.mxu0 %v1773
    %1856 = vmatprep.subr.bf16.mxu0 0
    %1857 = vmatpush1.bf16.msra.mxu0 %v1770
    %1858 = vmatprep.subr.bf16.mxu0 0
    %1859 = vmatpush1.bf16.msra.mxu0 %v1767
    %1860 = vmatprep.subr.bf16.mxu0 0
    %1861 = vmatpush1.bf16.msra.mxu0 %v1764
    %1862 = vmatprep.subr.bf16.mxu0 0
    %1863 = vmatpush1.bf16.msra.mxu0 %v1761
    %1864 = vmatprep.subr.bf16.mxu0 0
    %1865 = vmatpush2.bf16.msra.mxu0 0
    %1866 = vmatprep.subr.bf16.mxu0 0
    %1867 = vmatpush2.bf16.msra.mxu0 0
    %1868 = vmatprep.subr.bf16.mxu0 0
    %1869 = vmatpush2.bf16.msra.mxu0 0
    %1870 = vmatprep.subr.bf16.mxu0 0
    %1871 = vmatpush2.bf16.msra.mxu0 0
    %1872 = vmatprep.subr.bf16.mxu0 0
    %1873 = vmatpush2.bf16.msra.mxu0 0
    %1874 = vmatprep.subr.bf16.mxu0 0
    %1875 = vmatpush2.bf16.msra.mxu0 0
    %1876 = vmatprep.subr.bf16.mxu0 0
    %1877 = vmatpush2.bf16.msra.mxu0 0
    %1878 = vmatprep.subr.bf16.mxu0 0
    %1879 = vmatpush2.bf16.msra.mxu0 0
    %1880 = vmatprep.mubr.bf16.mxu0 0
    %1881 = vmatmul.mubr.bf16.gmra.mxu0 %v1678
    %v1882 = vpop.f32.mrf.mxu0
    %v1883 = vadd.f32 0.0, %v1882
    %v1884 = vpop.f32.mrf.mxu0
    %v1885 = vpop.f32.mrf.mxu0
    %v1886 = vpop.f32.mrf.mxu0
    %1887 = vdwg.mxu0
    %v1888 = vsub.f32 0.0, %v1842
    %1890 = vrot.lane.b32.xlu0 %v1888, 112
    %v1891 = vpop.permute.xlu0 %1890
    %1894 = vrot.lane.b32.xlu0 %v1842, 16
    %v1895 = vpop.permute.xlu0 %1894
    %v1897 = vsel %vm408, %v1891, %v1895
    %v1898 = vmul.f32 %v1842, %v131
    %v1899 = vmul.f32 %v1897, %v132
    %v1900 = vadd.f32 %v1898, %v1899
    %v1901 = vsub.f32 0.0, %v1844
    %1903 = vrot.lane.b32.xlu0 %v1901, 112
    %v1904 = vpop.permute.xlu0 %1903
    %1907 = vrot.lane.b32.xlu0 %v1844, 16
    %v1908 = vpop.permute.xlu0 %1907
    %v1910 = vsel %vm408, %v1904, %v1908
    %v1911 = vmul.f32 %v1844, %v131
    %v1912 = vmul.f32 %v1910, %v132
    %v1913 = vadd.f32 %v1911, %v1912
    %1914 = vrot.lane.b32.xlu0 %v1888, 80
    %v1915 = vpop.permute.xlu0 %1914
    %1917 = vrot.lane.b32.xlu0 %v1842, 112
    %v1918 = vpop.permute.xlu0 %1917
    %v1920 = vsel %vm408, %v1915, %v1918
    %v1921 = vmul.f32 %v1842, %v435
    %v1922 = vmul.f32 %v1920, %v132
    %1924 = vrot.lane.b32.xlu0 %v1922, 32
    %v1925 = vpop.permute.xlu0 %1924
    %v1927 = vadd.f32 %v1921, %v1925
    %1928 = vrot.lane.b32.xlu0 %v1901, 80
    %v1929 = vpop.permute.xlu0 %1928
    %1931 = vrot.lane.b32.xlu0 %v1844, 112
    %v1932 = vpop.permute.xlu0 %1931
    %v1934 = vsel %vm408, %v1929, %v1932
    %v1935 = vmul.f32 %v1844, %v435
    %v1936 = vmul.f32 %v1934, %v132
    %1938 = vrot.lane.b32.xlu0 %v1936, 32
    %v1939 = vpop.permute.xlu0 %1938
    %v1941 = vadd.f32 %v1935, %v1939
    %1942 = vrot.lane.b32.xlu0 %v1888, 48
    %v1943 = vpop.permute.xlu0 %1942
    %1945 = vrot.lane.b32.xlu0 %v1842, 80
    %v1946 = vpop.permute.xlu0 %1945
    %v1948 = vsel %vm408, %v1943, %v1946
    %v1949 = vmul.f32 %v1842, %v466
    %v1950 = vmul.f32 %v1948, %v132
    %1952 = vrot.lane.b32.xlu0 %v1950, 64
    %v1953 = vpop.permute.xlu0 %1952
    %v1955 = vadd.f32 %v1949, %v1953
    %1956 = vrot.lane.b32.xlu0 %v1901, 48
    %v1957 = vpop.permute.xlu0 %1956
    %1959 = vrot.lane.b32.xlu0 %v1844, 80
    %v1960 = vpop.permute.xlu0 %1959
    %v1962 = vsel %vm408, %v1957, %v1960
    %v1963 = vmul.f32 %v1844, %v466
    %v1964 = vmul.f32 %v1962, %v132
    %1966 = vrot.lane.b32.xlu0 %v1964, 64
    %v1967 = vpop.permute.xlu0 %1966
    %v1969 = vadd.f32 %v1963, %v1967
    %1970 = vrot.lane.b32.xlu0 %v1888, 16
    %v1971 = vpop.permute.xlu0 %1970
    %1973 = vrot.lane.b32.xlu0 %v1842, 48
    %v1974 = vpop.permute.xlu0 %1973
    %v1976 = vsel %vm408, %v1971, %v1974
    %v1977 = vmul.f32 %v1842, %v497
    %v1978 = vmul.f32 %v1976, %v132
    %1980 = vrot.lane.b32.xlu0 %v1978, 96
    %v1981 = vpop.permute.xlu0 %1980
    %v1983 = vadd.f32 %v1977, %v1981
    %1984 = vrot.lane.b32.xlu0 %v1901, 16
    %v1985 = vpop.permute.xlu0 %1984
    %1987 = vrot.lane.b32.xlu0 %v1844, 48
    %v1988 = vpop.permute.xlu0 %1987
    %v1990 = vsel %vm408, %v1985, %v1988
    %v1991 = vmul.f32 %v1844, %v497
    %v1992 = vmul.f32 %v1990, %v132
    %1994 = vrot.lane.b32.xlu0 %v1992, 96
    %v1995 = vpop.permute.xlu0 %1994
    %v1997 = vadd.f32 %v1991, %v1995
    %v1998 = vsel %vm520, %v1913, %v1941
    %v1999 = vsel %vm522, %v1998, %v1969
    %v2000 = vsel %vm524, %v1999, %v1997
    %s2001 = scalar_lea.vmem %s4, 64
    %v2002 = vld [vmem:[%s2001] sm:$0xff]
    %v2003 = vld [vmem:[%s2001 + $0x8] sm:$0xff]
    %v2004 = vld [vmem:[%s2001 + $0x10] sm:$0xff]
    %v2005 = vld [vmem:[%s2001 + $0x18] sm:$0xff]
    %s2006 = scalar_lea.vmem [#allocation14], 64
    %2007 = vst [vmem:[%s2006] sm:$0xff] %v2002
    %2008 = vst [vmem:[%s2006 + $0x8] sm:$0xff] %v2003
    %2009 = vst [vmem:[%s2006 + $0x10] sm:$0xff] %v2004
    %2010 = vst [vmem:[%s2006 + $0x18] sm:$0xff] %v2005
    %s2011 = scalar_lea.vmem %s4, 96
    %v2012 = vld [vmem:[%s2011] sm:$0xff]
    %v2013 = vld [vmem:[%s2011 + $0x8] sm:$0xff]
    %v2014 = vld [vmem:[%s2011 + $0x10] sm:$0xff]
    %v2015 = vld [vmem:[%s2011 + $0x18] sm:$0xff]
    %s2016 = scalar_lea.vmem [#allocation14], 96
    %2017 = vst [vmem:[%s2016] sm:$0xff] %v2012
    %2018 = vst [vmem:[%s2016 + $0x8] sm:$0xff] %v2013
    %2019 = vst [vmem:[%s2016 + $0x10] sm:$0xff] %v2014
    %2020 = vst [vmem:[%s2016 + $0x18] sm:$0xff] %v2015
    %s2021 = scalar_lea.vmem %s2006, %s130 [#allocation14]
    %2022 = vst [vmem:[%s2021] sm:$0xff] %v2000
    %s2023 = scalar_lea.vmem %s2016, %s130 [#allocation14]
    %2024 = vst [vmem:[%s2023] sm:$0xff] %v1883
    %v2025 = vld [vmem:[%s2006] sm:$0xff]
    %v2026 = vld [vmem:[%s2006 + $0x8] sm:$0xff]
    %v2027 = vld [vmem:[%s2006 + $0x10] sm:$0xff]
    %v2028 = vld [vmem:[%s2006 + $0x18] sm:$0xff]
    %v2029 = vld [vmem:[%s2016] sm:$0xff]
    %v2030 = vld [vmem:[%s2016 + $0x8] sm:$0xff]
    %v2031 = vld [vmem:[%s2016 + $0x10] sm:$0xff]
    %v2032 = vld [vmem:[%s2016 + $0x18] sm:$0xff]
    %v2033 = vpack.c.bf16 %v1900, %v1900
    %v2034 = vpack.c.bf16 %v2026, %v2025
    %v2035 = vpack.c.bf16 %v2028, %v2027
    %v2037 = vsel %vm520, %v2033, 0
    %v2040 = vsel %vm520, %v2034, 0
    %v2043 = vsel %vm520, %v2035, 0
    %2045 = vmatprep.subr.bf16.mxu0 0
    %2046 = vmatpush1.bf16.xpose.msra.mxu0 0
    %2047 = vmatprep.subr.bf16.mxu0 0
    %2048 = vmatpush1.bf16.xpose.msra.mxu0 0
    %2049 = vmatprep.subr.bf16.mxu0 0
    %2050 = vmatpush1.bf16.xpose.msra.mxu0 0
    %2051 = vmatprep.subr.bf16.mxu0 0
    %2052 = vmatpush1.bf16.xpose.msra.mxu0 0
    %2053 = vmatprep.subr.bf16.mxu0 0
    %2054 = vmatpush1.bf16.xpose.msra.mxu0 0
    %2055 = vmatprep.subr.bf16.mxu0 0
    %2056 = vmatpush1.bf16.xpose.msra.mxu0 0
    %2057 = vmatprep.subr.bf16.mxu0 0
    %2058 = vmatpush1.bf16.xpose.msra.mxu0 %v2043
    %2059 = vmatprep.subr.bf16.mxu0 0
    %2060 = vmatpush1.bf16.xpose.msra.mxu0 %v2040
    %2061 = vmatprep.subr.bf16.mxu0 0
    %2062 = vmatpush2.bf16.xpose.msra.mxu0 0
    %2063 = vmatprep.subr.bf16.mxu0 0
    %2064 = vmatpush2.bf16.xpose.msra.mxu0 0
    %2065 = vmatprep.subr.bf16.mxu0 0
    %2066 = vmatpush2.bf16.xpose.msra.mxu0 0
    %2067 = vmatprep.subr.bf16.mxu0 0
    %2068 = vmatpush2.bf16.xpose.msra.mxu0 0
    %2069 = vmatprep.subr.bf16.mxu0 0
    %2070 = vmatpush2.bf16.xpose.msra.mxu0 0
    %2071 = vmatprep.subr.bf16.mxu0 0
    %2072 = vmatpush2.bf16.xpose.msra.mxu0 0
    %2073 = vmatprep.subr.bf16.mxu0 0
    %2074 = vmatpush2.bf16.xpose.msra.mxu0 0
    %2075 = vmatprep.subr.bf16.mxu0 0
    %2076 = vmatpush2.bf16.xpose.msra.mxu0 0
    %2077 = vmatprep.mubr.bf16.mxu0 0
    %2078 = vmatmul.mubr.bf16.gmra.mxu0 %v2037
    %v2079 = vpop.f32.mrf.mxu0
    %v2080 = vadd.f32 0.0, %v2079
    %v2081 = vpop.f32.mrf.mxu0
    %v2082 = vpop.f32.mrf.mxu0
    %v2083 = vpop.f32.mrf.mxu0
    %2084 = vdwg.mxu0
    %v2085 = vmul.f32 %v2080, 0.17677669
    %v2086 = vsel %vm140, %v2085, -1e+30
    %v2087 = vsel %vm520, %v2086, -inf
    %2088 = vmax.xlane.f32.xlu0 %v2087
    %v2089 = vpop.xlane.xlu0 %2088
    %v2090 = vsub.f32 %v2086, %v2089
    %v2091 = vmul.f32 %v2090, 1.442695
    %v2092 = vpow.pop %v2091
    %v2093 = vsel %vm520, %v2092, 0.0
    %2094 = vadd.xlane.f32.xlu0 %v2093
    %v2095 = vpop.xlane.xlu0 %2094
    %v2096 = vrcp.pop %v2095
    %v2097 = vmul.f32 %v2092, %v2096
    %v2098 = vpack.c.bf16 %v2097, %v2097
    %v2099 = vpack.c.bf16 %v2030, %v2029
    %v2100 = vpack.c.bf16 %v2032, %v2031
    %v2102 = vsel %vm520, %v2098, 0
    %2104 = vmatprep.subr.bf16.mxu0 0
    %2105 = vmatpush1.bf16.msra.mxu0 0
    %2106 = vmatprep.subr.bf16.mxu0 0
    %2107 = vmatpush1.bf16.msra.mxu0 0
    %2108 = vmatprep.subr.bf16.mxu0 0
    %2109 = vmatpush1.bf16.msra.mxu0 0
    %2110 = vmatprep.subr.bf16.mxu0 0
    %2111 = vmatpush1.bf16.msra.mxu0 0
    %2112 = vmatprep.subr.bf16.mxu0 0
    %2113 = vmatpush1.bf16.msra.mxu0 0
    %2114 = vmatprep.subr.bf16.mxu0 0
    %2115 = vmatpush1.bf16.msra.mxu0 0
    %2116 = vmatprep.subr.bf16.mxu0 0
    %2117 = vmatpush1.bf16.msra.mxu0 %v2100
    %2118 = vmatprep.subr.bf16.mxu0 0
    %2119 = vmatpush1.bf16.msra.mxu0 %v2099
    %2120 = vmatprep.subr.bf16.mxu0 0
    %2121 = vmatpush2.bf16.msra.mxu0 0
    %2122 = vmatprep.subr.bf16.mxu0 0
    %2123 = vmatpush2.bf16.msra.mxu0 0
    %2124 = vmatprep.subr.bf16.mxu0 0
    %2125 = vmatpush2.bf16.msra.mxu0 0
    %2126 = vmatprep.subr.bf16.mxu0 0
    %2127 = vmatpush2.bf16.msra.mxu0 0
    %2128 = vmatprep.subr.bf16.mxu0 0
    %2129 = vmatpush2.bf16.msra.mxu0 0
    %2130 = vmatprep.subr.bf16.mxu0 0
    %2131 = vmatpush2.bf16.msra.mxu0 0
    %2132 = vmatprep.subr.bf16.mxu0 0
    %2133 = vmatpush2.bf16.msra.mxu0 0
    %2134 = vmatprep.subr.bf16.mxu0 0
    %2135 = vmatpush2.bf16.msra.mxu0 0
    %2136 = vmatprep.mubr.bf16.mxu0 0
    %2137 = vmatmul.mubr.bf16.gmra.mxu0 %v2102
    %v2138 = vpop.f32.mrf.mxu0
    %v2139 = vadd.f32 0.0, %v2138
    %v2140 = vpop.f32.mrf.mxu0
    %v2141 = vpop.f32.mrf.mxu0
    %v2142 = vpop.f32.mrf.mxu0
    %2143 = vdwg.mxu0
    %v2144 = vpack.c.bf16 %v1927, %v1927
    %2146 = vrot.lane.b32.xlu0 %v2144, 96
    %v2147 = vpop.permute.xlu0 %2146
    %2150 = vrot.lane.b32.xlu0 %v2034, 96
    %v2151 = vpop.permute.xlu0 %2150
    %2152 = vrot.lane.b32.xlu0 %v2035, 96
    %v2153 = vpop.permute.xlu0 %2152
    %v2155 = vsel %vm520, %v2147, 0
    %v2158 = vsel %vm520, %v2151, 0
    %v2161 = vsel %vm520, %v2153, 0
    %2163 = vmatprep.subr.bf16.mxu0 0
    %2164 = vmatpush1.bf16.xpose.msra.mxu0 0
    %2165 = vmatprep.subr.bf16.mxu0 0
    %2166 = vmatpush1.bf16.xpose.msra.mxu0 0
    %2167 = vmatprep.subr.bf16.mxu0 0
    %2168 = vmatpush1.bf16.xpose.msra.mxu0 0
    %2169 = vmatprep.subr.bf16.mxu0 0
    %2170 = vmatpush1.bf16.xpose.msra.mxu0 0
    %2171 = vmatprep.subr.bf16.mxu0 0
    %2172 = vmatpush1.bf16.xpose.msra.mxu0 0
    %2173 = vmatprep.subr.bf16.mxu0 0
    %2174 = vmatpush1.bf16.xpose.msra.mxu0 0
    %2175 = vmatprep.subr.bf16.mxu0 0
    %2176 = vmatpush1.bf16.xpose.msra.mxu0 %v2161
    %2177 = vmatprep.subr.bf16.mxu0 0
    %2178 = vmatpush1.bf16.xpose.msra.mxu0 %v2158
    %2179 = vmatprep.subr.bf16.mxu0 0
    %2180 = vmatpush2.bf16.xpose.msra.mxu0 0
    %2181 = vmatprep.subr.bf16.mxu0 0
    %2182 = vmatpush2.bf16.xpose.msra.mxu0 0
    %2183 = vmatprep.subr.bf16.mxu0 0
    %2184 = vmatpush2.bf16.xpose.msra.mxu0 0
    %2185 = vmatprep.subr.bf16.mxu0 0
    %2186 = vmatpush2.bf16.xpose.msra.mxu0 0
    %2187 = vmatprep.subr.bf16.mxu0 0
    %2188 = vmatpush2.bf16.xpose.msra.mxu0 0
    %2189 = vmatprep.subr.bf16.mxu0 0
    %2190 = vmatpush2.bf16.xpose.msra.mxu0 0
    %2191 = vmatprep.subr.bf16.mxu0 0
    %2192 = vmatpush2.bf16.xpose.msra.mxu0 0
    %2193 = vmatprep.subr.bf16.mxu0 0
    %2194 = vmatpush2.bf16.xpose.msra.mxu0 0
    %2195 = vmatprep.mubr.bf16.mxu0 0
    %2196 = vmatmul.mubr.bf16.gmra.mxu0 %v2155
    %v2197 = vpop.f32.mrf.mxu0
    %v2198 = vadd.f32 0.0, %v2197
    %v2199 = vpop.f32.mrf.mxu0
    %v2200 = vpop.f32.mrf.mxu0
    %v2201 = vpop.f32.mrf.mxu0
    %2202 = vdwg.mxu0
    %v2203 = vmul.f32 %v2198, 0.17677669
    %v2204 = vsel %vm140, %v2203, -1e+30
    %v2205 = vsel %vm520, %v2204, -inf
    %2206 = vmax.xlane.f32.xlu0 %v2205
    %v2207 = vpop.xlane.xlu0 %2206
    %v2208 = vsub.f32 %v2204, %v2207
    %v2209 = vmul.f32 %v2208, 1.442695
    %v2210 = vpow.pop %v2209
    %v2211 = vsel %vm520, %v2210, 0.0
    %2212 = vadd.xlane.f32.xlu0 %v2211
    %v2213 = vpop.xlane.xlu0 %2212
    %v2214 = vrcp.pop %v2213
    %v2215 = vmul.f32 %v2210, %v2214
    %v2216 = vpack.c.bf16 %v2215, %v2215
    %2219 = vrot.lane.b32.xlu0 %v2099, 96
    %v2220 = vpop.permute.xlu0 %2219
    %2221 = vrot.lane.b32.xlu0 %v2100, 96
    %v2222 = vpop.permute.xlu0 %2221
    %v2226 = vsel %vm520, %v2216, 0
    %2228 = vmatprep.subr.bf16.mxu0 0
    %2229 = vmatpush1.bf16.msra.mxu0 0
    %2230 = vmatprep.subr.bf16.mxu0 0
    %2231 = vmatpush1.bf16.msra.mxu0 0
    %2232 = vmatprep.subr.bf16.mxu0 0
    %2233 = vmatpush1.bf16.msra.mxu0 0
    %2234 = vmatprep.subr.bf16.mxu0 0
    %2235 = vmatpush1.bf16.msra.mxu0 0
    %2236 = vmatprep.subr.bf16.mxu0 0
    %2237 = vmatpush1.bf16.msra.mxu0 0
    %2238 = vmatprep.subr.bf16.mxu0 0
    %2239 = vmatpush1.bf16.msra.mxu0 0
    %2240 = vmatprep.subr.bf16.mxu0 0
    %2241 = vmatpush1.bf16.msra.mxu0 %v2222
    %2242 = vmatprep.subr.bf16.mxu0 0
    %2243 = vmatpush1.bf16.msra.mxu0 %v2220
    %2244 = vmatprep.subr.bf16.mxu0 0
    %2245 = vmatpush2.bf16.msra.mxu0 0
    %2246 = vmatprep.subr.bf16.mxu0 0
    %2247 = vmatpush2.bf16.msra.mxu0 0
    %2248 = vmatprep.subr.bf16.mxu0 0
    %2249 = vmatpush2.bf16.msra.mxu0 0
    %2250 = vmatprep.subr.bf16.mxu0 0
    %2251 = vmatpush2.bf16.msra.mxu0 0
    %2252 = vmatprep.subr.bf16.mxu0 0
    %2253 = vmatpush2.bf16.msra.mxu0 0
    %2254 = vmatprep.subr.bf16.mxu0 0
    %2255 = vmatpush2.bf16.msra.mxu0 0
    %2256 = vmatprep.subr.bf16.mxu0 0
    %2257 = vmatpush2.bf16.msra.mxu0 0
    %2258 = vmatprep.subr.bf16.mxu0 0
    %2259 = vmatpush2.bf16.msra.mxu0 0
    %2260 = vmatprep.mubr.bf16.mxu0 0
    %2261 = vmatmul.mubr.bf16.gmra.mxu0 %v2226
    %v2262 = vpop.f32.mrf.mxu0
    %v2263 = vadd.f32 0.0, %v2262
    %v2264 = vpop.f32.mrf.mxu0
    %v2265 = vpop.f32.mrf.mxu0
    %v2266 = vpop.f32.mrf.mxu0
    %2267 = vdwg.mxu0
    %v2268 = vpack.c.bf16 %v1955, %v1955
    %2270 = vrot.lane.b32.xlu0 %v2268, 64
    %v2271 = vpop.permute.xlu0 %2270
    %2272 = vrot.lane.b32.xlu0 %v2034, 64
    %v2273 = vpop.permute.xlu0 %2272
    %2274 = vrot.lane.b32.xlu0 %v2035, 64
    %v2275 = vpop.permute.xlu0 %2274
    %v2277 = vsel %vm520, %v2271, 0
    %v2280 = vsel %vm520, %v2273, 0
    %v2283 = vsel %vm520, %v2275, 0
    %2285 = vmatprep.subr.bf16.mxu0 0
    %2286 = vmatpush1.bf16.xpose.msra.mxu0 0
    %2287 = vmatprep.subr.bf16.mxu0 0
    %2288 = vmatpush1.bf16.xpose.msra.mxu0 0
    %2289 = vmatprep.subr.bf16.mxu0 0
    %2290 = vmatpush1.bf16.xpose.msra.mxu0 0
    %2291 = vmatprep.subr.bf16.mxu0 0
    %2292 = vmatpush1.bf16.xpose.msra.mxu0 0
    %2293 = vmatprep.subr.bf16.mxu0 0
    %2294 = vmatpush1.bf16.xpose.msra.mxu0 0
    %2295 = vmatprep.subr.bf16.mxu0 0
    %2296 = vmatpush1.bf16.xpose.msra.mxu0 0
    %2297 = vmatprep.subr.bf16.mxu0 0
    %2298 = vmatpush1.bf16.xpose.msra.mxu0 %v2283
    %2299 = vmatprep.subr.bf16.mxu0 0
    %2300 = vmatpush1.bf16.xpose.msra.mxu0 %v2280
    %2301 = vmatprep.subr.bf16.mxu0 0
    %2302 = vmatpush2.bf16.xpose.msra.mxu0 0
    %2303 = vmatprep.subr.bf16.mxu0 0
    %2304 = vmatpush2.bf16.xpose.msra.mxu0 0
    %2305 = vmatprep.subr.bf16.mxu0 0
    %2306 = vmatpush2.bf16.xpose.msra.mxu0 0
    %2307 = vmatprep.subr.bf16.mxu0 0
    %2308 = vmatpush2.bf16.xpose.msra.mxu0 0
    %2309 = vmatprep.subr.bf16.mxu0 0
    %2310 = vmatpush2.bf16.xpose.msra.mxu0 0
    %2311 = vmatprep.subr.bf16.mxu0 0
    %2312 = vmatpush2.bf16.xpose.msra.mxu0 0
    %2313 = vmatprep.subr.bf16.mxu0 0
    %2314 = vmatpush2.bf16.xpose.msra.mxu0 0
    %2315 = vmatprep.subr.bf16.mxu0 0
    %2316 = vmatpush2.bf16.xpose.msra.mxu0 0
    %2317 = vmatprep.mubr.bf16.mxu0 0
    %2318 = vmatmul.mubr.bf16.gmra.mxu0 %v2277
    %v2319 = vpop.f32.mrf.mxu0
    %v2320 = vadd.f32 0.0, %v2319
    %v2321 = vpop.f32.mrf.mxu0
    %v2322 = vpop.f32.mrf.mxu0
    %v2323 = vpop.f32.mrf.mxu0
    %2324 = vdwg.mxu0
    %v2325 = vmul.f32 %v2320, 0.17677669
    %v2326 = vsel %vm140, %v2325, -1e+30
    %v2327 = vsel %vm520, %v2326, -inf
    %2328 = vmax.xlane.f32.xlu0 %v2327
    %v2329 = vpop.xlane.xlu0 %2328
    %v2330 = vsub.f32 %v2326, %v2329
    %v2331 = vmul.f32 %v2330, 1.442695
    %v2332 = vpow.pop %v2331
    %v2333 = vsel %vm520, %v2332, 0.0
    %2334 = vadd.xlane.f32.xlu0 %v2333
    %v2335 = vpop.xlane.xlu0 %2334
    %v2336 = vrcp.pop %v2335
    %v2337 = vmul.f32 %v2332, %v2336
    %v2338 = vpack.c.bf16 %v2337, %v2337
    %2339 = vrot.lane.b32.xlu0 %v2099, 64
    %v2340 = vpop.permute.xlu0 %2339
    %2341 = vrot.lane.b32.xlu0 %v2100, 64
    %v2342 = vpop.permute.xlu0 %2341
    %v2346 = vsel %vm520, %v2338, 0
    %2348 = vmatprep.subr.bf16.mxu0 0
    %2349 = vmatpush1.bf16.msra.mxu0 0
    %2350 = vmatprep.subr.bf16.mxu0 0
    %2351 = vmatpush1.bf16.msra.mxu0 0
    %2352 = vmatprep.subr.bf16.mxu0 0
    %2353 = vmatpush1.bf16.msra.mxu0 0
    %2354 = vmatprep.subr.bf16.mxu0 0
    %2355 = vmatpush1.bf16.msra.mxu0 0
    %2356 = vmatprep.subr.bf16.mxu0 0
    %2357 = vmatpush1.bf16.msra.mxu0 0
    %2358 = vmatprep.subr.bf16.mxu0 0
    %2359 = vmatpush1.bf16.msra.mxu0 0
    %2360 = vmatprep.subr.bf16.mxu0 0
    %2361 = vmatpush1.bf16.msra.mxu0 %v2342
    %2362 = vmatprep.subr.bf16.mxu0 0
    %2363 = vmatpush1.bf16.msra.mxu0 %v2340
    %2364 = vmatprep.subr.bf16.mxu0 0
    %2365 = vmatpush2.bf16.msra.mxu0 0
    %2366 = vmatprep.subr.bf16.mxu0 0
    %2367 = vmatpush2.bf16.msra.mxu0 0
    %2368 = vmatprep.subr.bf16.mxu0 0
    %2369 = vmatpush2.bf16.msra.mxu0 0
    %2370 = vmatprep.subr.bf16.mxu0 0
    %2371 = vmatpush2.bf16.msra.mxu0 0
    %2372 = vmatprep.subr.bf16.mxu0 0
    %2373 = vmatpush2.bf16.msra.mxu0 0
    %2374 = vmatprep.subr.bf16.mxu0 0
    %2375 = vmatpush2.bf16.msra.mxu0 0
    %2376 = vmatprep.subr.bf16.mxu0 0
    %2377 = vmatpush2.bf16.msra.mxu0 0
    %2378 = vmatprep.subr.bf16.mxu0 0
    %2379 = vmatpush2.bf16.msra.mxu0 0
    %2380 = vmatprep.mubr.bf16.mxu0 0
    %2381 = vmatmul.mubr.bf16.gmra.mxu0 %v2346
    %v2382 = vpop.f32.mrf.mxu0
    %v2383 = vadd.f32 0.0, %v2382
    %v2384 = vpop.f32.mrf.mxu0
    %v2385 = vpop.f32.mrf.mxu0
    %v2386 = vpop.f32.mrf.mxu0
    %2387 = vdwg.mxu0
    %v2388 = vpack.c.bf16 %v1983, %v1983
    %2390 = vrot.lane.b32.xlu0 %v2388, 32
    %v2391 = vpop.permute.xlu0 %2390
    %2392 = vrot.lane.b32.xlu0 %v2034, 32
    %v2393 = vpop.permute.xlu0 %2392
    %2394 = vrot.lane.b32.xlu0 %v2035, 32
    %v2395 = vpop.permute.xlu0 %2394
    %v2397 = vsel %vm520, %v2391, 0
    %v2400 = vsel %vm520, %v2393, 0
    %v2403 = vsel %vm520, %v2395, 0
    %2405 = vmatprep.subr.bf16.mxu0 0
    %2406 = vmatpush1.bf16.xpose.msra.mxu0 0
    %2407 = vmatprep.subr.bf16.mxu0 0
    %2408 = vmatpush1.bf16.xpose.msra.mxu0 0
    %2409 = vmatprep.subr.bf16.mxu0 0
    %2410 = vmatpush1.bf16.xpose.msra.mxu0 0
    %2411 = vmatprep.subr.bf16.mxu0 0
    %2412 = vmatpush1.bf16.xpose.msra.mxu0 0
    %2413 = vmatprep.subr.bf16.mxu0 0
    %2414 = vmatpush1.bf16.xpose.msra.mxu0 0
    %2415 = vmatprep.subr.bf16.mxu0 0
    %2416 = vmatpush1.bf16.xpose.msra.mxu0 0
    %2417 = vmatprep.subr.bf16.mxu0 0
    %2418 = vmatpush1.bf16.xpose.msra.mxu0 %v2403
    %2419 = vmatprep.subr.bf16.mxu0 0
    %2420 = vmatpush1.bf16.xpose.msra.mxu0 %v2400
    %2421 = vmatprep.subr.bf16.mxu0 0
    %2422 = vmatpush2.bf16.xpose.msra.mxu0 0
    %2423 = vmatprep.subr.bf16.mxu0 0
    %2424 = vmatpush2.bf16.xpose.msra.mxu0 0
    %2425 = vmatprep.subr.bf16.mxu0 0
    %2426 = vmatpush2.bf16.xpose.msra.mxu0 0
    %2427 = vmatprep.subr.bf16.mxu0 0
    %2428 = vmatpush2.bf16.xpose.msra.mxu0 0
    %2429 = vmatprep.subr.bf16.mxu0 0
    %2430 = vmatpush2.bf16.xpose.msra.mxu0 0
    %2431 = vmatprep.subr.bf16.mxu0 0
    %2432 = vmatpush2.bf16.xpose.msra.mxu0 0
    %2433 = vmatprep.subr.bf16.mxu0 0
    %2434 = vmatpush2.bf16.xpose.msra.mxu0 0
    %2435 = vmatprep.subr.bf16.mxu0 0
    %2436 = vmatpush2.bf16.xpose.msra.mxu0 0
    %2437 = vmatprep.mubr.bf16.mxu0 0
    %2438 = vmatmul.mubr.bf16.gmra.mxu0 %v2397
    %v2439 = vpop.f32.mrf.mxu0
    %v2440 = vadd.f32 0.0, %v2439
    %v2441 = vpop.f32.mrf.mxu0
    %v2442 = vpop.f32.mrf.mxu0
    %v2443 = vpop.f32.mrf.mxu0
    %2444 = vdwg.mxu0
    %v2445 = vmul.f32 %v2440, 0.17677669
    %v2446 = vsel %vm140, %v2445, -1e+30
    %v2447 = vsel %vm520, %v2446, -inf
    %2448 = vmax.xlane.f32.xlu0 %v2447
    %v2449 = vpop.xlane.xlu0 %2448
    %v2450 = vsub.f32 %v2446, %v2449
    %v2451 = vmul.f32 %v2450, 1.442695
    %v2452 = vpow.pop %v2451
    %v2453 = vsel %vm520, %v2452, 0.0
    %2454 = vadd.xlane.f32.xlu0 %v2453
    %v2455 = vpop.xlane.xlu0 %2454
    %v2456 = vrcp.pop %v2455
    %v2457 = vmul.f32 %v2452, %v2456
    %v2458 = vpack.c.bf16 %v2457, %v2457
    %2459 = vrot.lane.b32.xlu0 %v2099, 32
    %v2460 = vpop.permute.xlu0 %2459
    %2461 = vrot.lane.b32.xlu0 %v2100, 32
    %v2462 = vpop.permute.xlu0 %2461
    %v2466 = vsel %vm520, %v2458, 0
    %2468 = vmatprep.subr.bf16.mxu0 0
    %2469 = vmatpush1.bf16.msra.mxu0 0
    %2470 = vmatprep.subr.bf16.mxu0 0
    %2471 = vmatpush1.bf16.msra.mxu0 0
    %2472 = vmatprep.subr.bf16.mxu0 0
    %2473 = vmatpush1.bf16.msra.mxu0 0
    %2474 = vmatprep.subr.bf16.mxu0 0
    %2475 = vmatpush1.bf16.msra.mxu0 0
    %2476 = vmatprep.subr.bf16.mxu0 0
    %2477 = vmatpush1.bf16.msra.mxu0 0
    %2478 = vmatprep.subr.bf16.mxu0 0
    %2479 = vmatpush1.bf16.msra.mxu0 0
    %2480 = vmatprep.subr.bf16.mxu0 0
    %2481 = vmatpush1.bf16.msra.mxu0 %v2462
    %2482 = vmatprep.subr.bf16.mxu0 0
    %2483 = vmatpush1.bf16.msra.mxu0 %v2460
    %2484 = vmatprep.subr.bf16.mxu0 0
    %2485 = vmatpush2.bf16.msra.mxu0 0
    %2486 = vmatprep.subr.bf16.mxu0 0
    %2487 = vmatpush2.bf16.msra.mxu0 0
    %2488 = vmatprep.subr.bf16.mxu0 0
    %2489 = vmatpush2.bf16.msra.mxu0 0
    %2490 = vmatprep.subr.bf16.mxu0 0
    %2491 = vmatpush2.bf16.msra.mxu0 0
    %2492 = vmatprep.subr.bf16.mxu0 0
    %2493 = vmatpush2.bf16.msra.mxu0 0
    %2494 = vmatprep.subr.bf16.mxu0 0
    %2495 = vmatpush2.bf16.msra.mxu0 0
    %2496 = vmatprep.subr.bf16.mxu0 0
    %2497 = vmatpush2.bf16.msra.mxu0 0
    %2498 = vmatprep.subr.bf16.mxu0 0
    %2499 = vmatpush2.bf16.msra.mxu0 0
    %2500 = vmatprep.mubr.bf16.mxu0 0
    %2501 = vmatmul.mubr.bf16.gmra.mxu0 %v2466
    %v2502 = vpop.f32.mrf.mxu0
    %v2503 = vadd.f32 0.0, %v2502
    %v2504 = vpop.f32.mrf.mxu0
    %v2505 = vpop.f32.mrf.mxu0
    %v2506 = vpop.f32.mrf.mxu0
    %2507 = vdwg.mxu0
    %2509 = vrot.lane.b32.xlu0 %v2263, 32
    %v2510 = vpop.permute.xlu0 %2509
    %2513 = vrot.lane.b32.xlu0 %v2383, 64
    %v2514 = vpop.permute.xlu0 %2513
    %2517 = vrot.lane.b32.xlu0 %v2503, 96
    %v2518 = vpop.permute.xlu0 %2517
    %v2520 = vsel %vm520, %v2139, %v2510
    %v2521 = vsel %vm522, %v2520, %v2514
    %v2522 = vsel %vm524, %v2521, %v2518
    %s2523 = scalar_lea.vmem [#allocation7], 64
    %v2524 = vld [vmem:[%s2523] sm:$0xf]
    %v2525 = vld [vmem:[%s2523 + $0x4] sm:$0xf]
    %v2526 = vld [vmem:[%s2523 + $0x8] sm:$0xf]
    %v2527 = vld [vmem:[%s2523 + $0xc] sm:$0xf]
    %v2528 = vld [vmem:[%s2523 + $0x10] sm:$0xf]
    %v2529 = vld [vmem:[%s2523 + $0x14] sm:$0xf]
    %v2530 = vld [vmem:[%s2523 + $0x18] sm:$0xf]
    %v2531 = vld [vmem:[%s2523 + $0x1c] sm:$0xf]
    %v2532 = vld [vmem:[%s2523 + $0x20] sm:$0xf]
    %v2533 = vld [vmem:[%s2523 + $0x24] sm:$0xf]
    %v2534 = vld [vmem:[%s2523 + $0x28] sm:$0xf]
    %v2535 = vld [vmem:[%s2523 + $0x2c] sm:$0xf]
    %v2536 = vld [vmem:[%s2523 + $0x30] sm:$0xf]
    %v2537 = vld [vmem:[%s2523 + $0x34] sm:$0xf]
    %v2538 = vld [vmem:[%s2523 + $0x38] sm:$0xf]
    %v2539 = vld [vmem:[%s2523 + $0x3c] sm:$0xf]
    %v2540 = vpack.c.bf16 %v2522, %v2522
    %v2557 = vunpack.c.l.b16 %v2524
    %v2558 = vunpack.c.l.b16 %v2525
    %v2559 = vunpack.c.l.b16 %v2526
    %v2560 = vunpack.c.l.b16 %v2527
    %v2561 = vunpack.c.l.b16 %v2528
    %v2562 = vunpack.c.l.b16 %v2529
    %v2563 = vunpack.c.l.b16 %v2530
    %v2564 = vunpack.c.l.b16 %v2531
    %v2565 = vunpack.c.l.b16 %v2532
    %v2566 = vunpack.c.l.b16 %v2533
    %v2567 = vunpack.c.l.b16 %v2534
    %v2568 = vunpack.c.l.b16 %v2535
    %v2569 = vunpack.c.l.b16 %v2536
    %v2570 = vunpack.c.l.b16 %v2537
    %v2571 = vunpack.c.l.b16 %v2538
    %v2572 = vunpack.c.l.b16 %v2539
    %v2573 = vpack.c.b16 %v2558, %v2557
    %v2574 = vpack.c.b16 %v2560, %v2559
    %v2575 = vpack.c.b16 %v2562, %v2561
    %v2576 = vpack.c.b16 %v2564, %v2563
    %v2577 = vpack.c.b16 %v2566, %v2565
    %v2578 = vpack.c.b16 %v2568, %v2567
    %v2579 = vpack.c.b16 %v2570, %v2569
    %v2580 = vpack.c.b16 %v2572, %v2571
    %2589 = vmatprep.subr.bf16.mxu0 0
    %2590 = vmatpush1.bf16.msra.mxu0 %v2580
    %2591 = vmatprep.subr.bf16.mxu0 0
    %2592 = vmatpush1.bf16.msra.mxu0 %v2579
    %2593 = vmatprep.subr.bf16.mxu0 0
    %2594 = vmatpush1.bf16.msra.mxu0 %v2578
    %2595 = vmatprep.subr.bf16.mxu0 0
    %2596 = vmatpush1.bf16.msra.mxu0 %v2577
    %2597 = vmatprep.subr.bf16.mxu0 0
    %2598 = vmatpush1.bf16.msra.mxu0 %v2576
    %2599 = vmatprep.subr.bf16.mxu0 0
    %2600 = vmatpush1.bf16.msra.mxu0 %v2575
    %2601 = vmatprep.subr.bf16.mxu0 0
    %2602 = vmatpush1.bf16.msra.mxu0 %v2574
    %2603 = vmatprep.subr.bf16.mxu0 0
    %2604 = vmatpush1.bf16.msra.mxu0 %v2573
    %2605 = vmatprep.subr.bf16.mxu0 0
    %2606 = vmatpush2.bf16.msra.mxu0 0
    %2607 = vmatprep.subr.bf16.mxu0 0
    %2608 = vmatpush2.bf16.msra.mxu0 0
    %2609 = vmatprep.subr.bf16.mxu0 0
    %2610 = vmatpush2.bf16.msra.mxu0 0
    %2611 = vmatprep.subr.bf16.mxu0 0
    %2612 = vmatpush2.bf16.msra.mxu0 0
    %2613 = vmatprep.subr.bf16.mxu0 0
    %2614 = vmatpush2.bf16.msra.mxu0 0
    %2615 = vmatprep.subr.bf16.mxu0 0
    %2616 = vmatpush2.bf16.msra.mxu0 0
    %2617 = vmatprep.subr.bf16.mxu0 0
    %2618 = vmatpush2.bf16.msra.mxu0 0
    %2619 = vmatprep.subr.bf16.mxu0 0
    %2620 = vmatpush2.bf16.msra.mxu0 0
    %2621 = vmatprep.mubr.bf16.mxu0 0
    %2622 = vmatmul.mubr.bf16.gmra.mxu0 %v2540
    %v2623 = vpop.f32.mrf.mxu0
    %v2624 = vadd.f32 0.0, %v2623
    %v2625 = vpop.f32.mrf.mxu0
    %v2626 = vpop.f32.mrf.mxu0
    %v2627 = vpop.f32.mrf.mxu0
    %2628 = vdwg.mxu0
    %v2629 = vadd.f32 %v1628, %v2624
    %s2630 = scalar_lea.vmem %s8, 1
    %v2631 = vld [vmem:[%s2630] sm:$0x1]
    %v2632 = vmul.f32 %v2629, %v2629
    %2633 = vadd.xlane.f32.xlu0 %v2632
    %v2634 = vpop.xlane.xlu0 %2633
    %v2635 = vmul.f32 %v2634, %v145
    %v2636 = vadd.f32 %v2635, 1e-06
    %v2637 = vrsqrt.pop %v2636
    %v2638 = vmul.f32 %v2629, %v2637
    %v2640 = vlaneseq
    %v2641 = vshrl.u32 %v2640, 7
    %v2642 = vsub.s32 0, %v2641
    %v2643 = vrot.slane %v2631, %v2642
    %v2645 = vmul.f32 %v2638, %v2643
    %s2646 = scalar_lea.vmem [#allocation9], 256
    %v2647 = vld [vmem:[%s2646] sm:$0xff]
    %v2648 = vld [vmem:[%s2646 + $0x8] sm:$0xff]
    %v2649 = vld [vmem:[%s2646 + $0x10] sm:$0xff]
    %v2650 = vld [vmem:[%s2646 + $0x18] sm:$0xff]
    %v2651 = vld [vmem:[%s2646 + $0x20] sm:$0xff]
    %v2652 = vld [vmem:[%s2646 + $0x28] sm:$0xff]
    %v2653 = vld [vmem:[%s2646 + $0x30] sm:$0xff]
    %v2654 = vld [vmem:[%s2646 + $0x38] sm:$0xff]
    %v2655 = vld [vmem:[%s2646 + $0x40] sm:$0xff]
    %v2656 = vld [vmem:[%s2646 + $0x48] sm:$0xff]
    %v2657 = vld [vmem:[%s2646 + $0x50] sm:$0xff]
    %v2658 = vld [vmem:[%s2646 + $0x58] sm:$0xff]
    %v2659 = vld [vmem:[%s2646 + $0x60] sm:$0xff]
    %v2660 = vld [vmem:[%s2646 + $0x68] sm:$0xff]
    %v2661 = vld [vmem:[%s2646 + $0x70] sm:$0xff]
    %v2662 = vld [vmem:[%s2646 + $0x78] sm:$0xff]
    %v2663 = vld [vmem:[%s2646 + $0x80] sm:$0xff]
    %v2664 = vld [vmem:[%s2646 + $0x88] sm:$0xff]
    %v2665 = vld [vmem:[%s2646 + $0x90] sm:$0xff]
    %v2666 = vld [vmem:[%s2646 + $0x98] sm:$0xff]
    %v2667 = vld [vmem:[%s2646 + $0xa0] sm:$0xff]
    %v2668 = vld [vmem:[%s2646 + $0xa8] sm:$0xff]
    %v2669 = vld [vmem:[%s2646 + $0xb0] sm:$0xff]
    %v2670 = vld [vmem:[%s2646 + $0xb8] sm:$0xff]
    %v2671 = vld [vmem:[%s2646 + $0xc0] sm:$0xff]
    %v2672 = vld [vmem:[%s2646 + $0xc8] sm:$0xff]
    %v2673 = vld [vmem:[%s2646 + $0xd0] sm:$0xff]
    %v2674 = vld [vmem:[%s2646 + $0xd8] sm:$0xff]
    %v2675 = vld [vmem:[%s2646 + $0xe0] sm:$0xff]
    %v2676 = vld [vmem:[%s2646 + $0xe8] sm:$0xff]
    %v2677 = vld [vmem:[%s2646 + $0xf0] sm:$0xff]
    %v2678 = vld [vmem:[%s2646 + $0xf8] sm:$0xff]
    %v2679 = vpack.c.bf16 %v2645, %v2645
    %v2712 = vunpack.c.l.b16 %v2647
    %v2713 = vunpack.c.h.b16 %v2647
    %v2714 = vunpack.c.l.b16 %v2648
    %v2715 = vunpack.c.h.b16 %v2648
    %v2716 = vunpack.c.l.b16 %v2649
    %v2717 = vunpack.c.h.b16 %v2649
    %v2718 = vunpack.c.l.b16 %v2650
    %v2719 = vunpack.c.h.b16 %v2650
    %v2720 = vunpack.c.l.b16 %v2651
    %v2721 = vunpack.c.h.b16 %v2651
    %v2722 = vunpack.c.l.b16 %v2652
    %v2723 = vunpack.c.h.b16 %v2652
    %v2724 = vunpack.c.l.b16 %v2653
    %v2725 = vunpack.c.h.b16 %v2653
    %v2726 = vunpack.c.l.b16 %v2654
    %v2727 = vunpack.c.h.b16 %v2654
    %v2728 = vunpack.c.l.b16 %v2655
    %v2729 = vunpack.c.h.b16 %v2655
    %v2730 = vunpack.c.l.b16 %v2656
    %v2731 = vunpack.c.h.b16 %v2656
    %v2732 = vunpack.c.l.b16 %v2657
    %v2733 = vunpack.c.h.b16 %v2657
    %v2734 = vunpack.c.l.b16 %v2658
    %v2735 = vunpack.c.h.b16 %v2658
    %v2736 = vunpack.c.l.b16 %v2659
    %v2737 = vunpack.c.h.b16 %v2659
    %v2738 = vunpack.c.l.b16 %v2660
    %v2739 = vunpack.c.h.b16 %v2660
    %v2740 = vunpack.c.l.b16 %v2661
    %v2741 = vunpack.c.h.b16 %v2661
    %v2742 = vunpack.c.l.b16 %v2662
    %v2743 = vunpack.c.h.b16 %v2662
    %v2744 = vunpack.c.l.b16 %v2663
    %v2745 = vunpack.c.h.b16 %v2663
    %v2746 = vunpack.c.l.b16 %v2664
    %v2747 = vunpack.c.h.b16 %v2664
    %v2748 = vunpack.c.l.b16 %v2665
    %v2749 = vunpack.c.h.b16 %v2665
    %v2750 = vunpack.c.l.b16 %v2666
    %v2751 = vunpack.c.h.b16 %v2666
    %v2752 = vunpack.c.l.b16 %v2667
    %v2753 = vunpack.c.h.b16 %v2667
    %v2754 = vunpack.c.l.b16 %v2668
    %v2755 = vunpack.c.h.b16 %v2668
    %v2756 = vunpack.c.l.b16 %v2669
    %v2757 = vunpack.c.h.b16 %v2669
    %v2758 = vunpack.c.l.b16 %v2670
    %v2759 = vunpack.c.h.b16 %v2670
    %v2760 = vunpack.c.l.b16 %v2671
    %v2761 = vunpack.c.h.b16 %v2671
    %v2762 = vunpack.c.l.b16 %v2672
    %v2763 = vunpack.c.h.b16 %v2672
    %v2764 = vunpack.c.l.b16 %v2673
    %v2765 = vunpack.c.h.b16 %v2673
    %v2766 = vunpack.c.l.b16 %v2674
    %v2767 = vunpack.c.h.b16 %v2674
    %v2768 = vunpack.c.l.b16 %v2675
    %v2769 = vunpack.c.h.b16 %v2675
    %v2770 = vunpack.c.l.b16 %v2676
    %v2771 = vunpack.c.h.b16 %v2676
    %v2772 = vunpack.c.l.b16 %v2677
    %v2773 = vunpack.c.h.b16 %v2677
    %v2774 = vunpack.c.l.b16 %v2678
    %v2775 = vunpack.c.h.b16 %v2678
    %v2776 = vpack.c.b16 %v2716, %v2712
    %v2777 = vpack.c.b16 %v2717, %v2713
    %v2778 = vpack.c.b16 %v2718, %v2714
    %v2779 = vpack.c.b16 %v2719, %v2715
    %v2780 = vpack.c.b16 %v2724, %v2720
    %v2781 = vpack.c.b16 %v2725, %v2721
    %v2782 = vpack.c.b16 %v2726, %v2722
    %v2783 = vpack.c.b16 %v2727, %v2723
    %v2784 = vpack.c.b16 %v2732, %v2728
    %v2785 = vpack.c.b16 %v2733, %v2729
    %v2786 = vpack.c.b16 %v2734, %v2730
    %v2787 = vpack.c.b16 %v2735, %v2731
    %v2788 = vpack.c.b16 %v2740, %v2736
    %v2789 = vpack.c.b16 %v2741, %v2737
    %v2790 = vpack.c.b16 %v2742, %v2738
    %v2791 = vpack.c.b16 %v2743, %v2739
    %v2792 = vpack.c.b16 %v2748, %v2744
    %v2793 = vpack.c.b16 %v2749, %v2745
    %v2794 = vpack.c.b16 %v2750, %v2746
    %v2795 = vpack.c.b16 %v2751, %v2747
    %v2796 = vpack.c.b16 %v2756, %v2752
    %v2797 = vpack.c.b16 %v2757, %v2753
    %v2798 = vpack.c.b16 %v2758, %v2754
    %v2799 = vpack.c.b16 %v2759, %v2755
    %v2800 = vpack.c.b16 %v2764, %v2760
    %v2801 = vpack.c.b16 %v2765, %v2761
    %v2802 = vpack.c.b16 %v2766, %v2762
    %v2803 = vpack.c.b16 %v2767, %v2763
    %v2804 = vpack.c.b16 %v2772, %v2768
    %v2805 = vpack.c.b16 %v2773, %v2769
    %v2806 = vpack.c.b16 %v2774, %v2770
    %v2807 = vpack.c.b16 %v2775, %v2771
    %2840 = vmatprep.subr.bf16.mxu0 %v2805
    %2841 = vmatpush1.bf16.msra.mxu0 %v2804
    %2842 = vmatprep.subr.bf16.mxu0 %v2801
    %2843 = vmatpush1.bf16.msra.mxu0 %v2800
    %2844 = vmatprep.subr.bf16.mxu0 %v2797
    %2845 = vmatpush1.bf16.msra.mxu0 %v2796
    %2846 = vmatprep.subr.bf16.mxu0 %v2793
    %2847 = vmatpush1.bf16.msra.mxu0 %v2792
    %2848 = vmatprep.subr.bf16.mxu0 %v2789
    %2849 = vmatpush1.bf16.msra.mxu0 %v2788
    %2850 = vmatprep.subr.bf16.mxu0 %v2785
    %2851 = vmatpush1.bf16.msra.mxu0 %v2784
    %2852 = vmatprep.subr.bf16.mxu0 %v2781
    %2853 = vmatpush1.bf16.msra.mxu0 %v2780
    %2854 = vmatprep.subr.bf16.mxu0 %v2777
    %2855 = vmatpush1.bf16.msra.mxu0 %v2776
    %2856 = vmatprep.subr.bf16.mxu0 0
    %2857 = vmatpush2.bf16.msra.mxu0 0
    %2858 = vmatprep.subr.bf16.mxu0 0
    %2859 = vmatpush2.bf16.msra.mxu0 0
    %2860 = vmatprep.subr.bf16.mxu0 0
    %2861 = vmatpush2.bf16.msra.mxu0 0
    %2862 = vmatprep.subr.bf16.mxu0 0
    %2863 = vmatpush2.bf16.msra.mxu0 0
    %2864 = vmatprep.subr.bf16.mxu0 0
    %2865 = vmatpush2.bf16.msra.mxu0 0
    %2866 = vmatprep.subr.bf16.mxu0 0
    %2867 = vmatpush2.bf16.msra.mxu0 0
    %2868 = vmatprep.subr.bf16.mxu0 0
    %2869 = vmatpush2.bf16.msra.mxu0 0
    %2870 = vmatprep.subr.bf16.mxu0 0
    %2871 = vmatpush2.bf16.msra.mxu0 0
    %2872 = vmatprep.mubr.bf16.mxu0 0
    %2873 = vmatmul.mubr.bf16.gmra.mxu0 %v2679
    %v2874 = vpop.f32.mrf.mxu0
    %v2875 = vadd.f32 0.0, %v2874
    %v2876 = vpop.f32.mrf.mxu0
    %v2877 = vadd.f32 0.0, %v2876
    %v2878 = vpop.f32.mrf.mxu0
    %v2879 = vpop.f32.mrf.mxu0
    %2880 = vdwg.mxu0
    %2881 = vmatprep.subr.bf16.mxu0 %v2807
    %2882 = vmatpush1.bf16.msra.mxu0 %v2806
    %2883 = vmatprep.subr.bf16.mxu0 %v2803
    %2884 = vmatpush1.bf16.msra.mxu0 %v2802
    %2885 = vmatprep.subr.bf16.mxu0 %v2799
    %2886 = vmatpush1.bf16.msra.mxu0 %v2798
    %2887 = vmatprep.subr.bf16.mxu0 %v2795
    %2888 = vmatpush1.bf16.msra.mxu0 %v2794
    %2889 = vmatprep.subr.bf16.mxu0 %v2791
    %2890 = vmatpush1.bf16.msra.mxu0 %v2790
    %2891 = vmatprep.subr.bf16.mxu0 %v2787
    %2892 = vmatpush1.bf16.msra.mxu0 %v2786
    %2893 = vmatprep.subr.bf16.mxu0 %v2783
    %2894 = vmatpush1.bf16.msra.mxu0 %v2782
    %2895 = vmatprep.subr.bf16.mxu0 %v2779
    %2896 = vmatpush1.bf16.msra.mxu0 %v2778
    %2897 = vmatprep.subr.bf16.mxu0 0
    %2898 = vmatpush2.bf16.msra.mxu0 0
    %2899 = vmatprep.subr.bf16.mxu0 0
    %2900 = vmatpush2.bf16.msra.mxu0 0
    %2901 = vmatprep.subr.bf16.mxu0 0
    %2902 = vmatpush2.bf16.msra.mxu0 0
    %2903 = vmatprep.subr.bf16.mxu0 0
    %2904 = vmatpush2.bf16.msra.mxu0 0
    %2905 = vmatprep.subr.bf16.mxu0 0
    %2906 = vmatpush2.bf16.msra.mxu0 0
    %2907 = vmatprep.subr.bf16.mxu0 0
    %2908 = vmatpush2.bf16.msra.mxu0 0
    %2909 = vmatprep.subr.bf16.mxu0 0
    %2910 = vmatpush2.bf16.msra.mxu0 0
    %2911 = vmatprep.subr.bf16.mxu0 0
    %2912 = vmatpush2.bf16.msra.mxu0 0
    %2913 = vmatprep.mubr.bf16.mxu0 0
    %2914 = vmatmul.mubr.bf16.gmra.mxu0 %v2679
    %v2915 = vpop.f32.mrf.mxu0
    %v2916 = vadd.f32 0.0, %v2915
    %v2917 = vpop.f32.mrf.mxu0
    %v2918 = vadd.f32 0.0, %v2917
    %v2919 = vpop.f32.mrf.mxu0
    %v2920 = vpop.f32.mrf.mxu0
    %2921 = vdwg.mxu0
    %v2922 = vxor.u32 %v2875, 2147483648
    %v2923 = vxor.u32 %v2877, 2147483648
    %v2924 = vmul.f32 %v2922, 1.442695
    %v2925 = vpow.pop %v2924
    %v2926 = vmul.f32 %v2923, 1.442695
    %v2927 = vpow.pop %v2926
    %v2928 = vadd.f32 %v2925, 1.0
    %v2929 = vadd.f32 %v2927, 1.0
    %v2930 = vrcp.pop %v2928
    %v2931 = vmul.f32 1.0, %v2930
    %v2932 = vrcp.pop %v2929
    %v2933 = vmul.f32 1.0, %v2932
    %v2934 = vmul.f32 %v2875, %v2931
    %v2935 = vmul.f32 %v2877, %v2933
    %v2936 = vmul.f32 %v2934, %v2916
    %v2937 = vmul.f32 %v2935, %v2918
    %s2938 = scalar_lea.vmem [#allocation10], 128
    %v2939 = vld [vmem:[%s2938] sm:$0xf]
    %v2940 = vld [vmem:[%s2938 + $0x4] sm:$0xf]
    %v2941 = vld [vmem:[%s2938 + $0x8] sm:$0xf]
    %v2942 = vld [vmem:[%s2938 + $0xc] sm:$0xf]
    %v2943 = vld [vmem:[%s2938 + $0x10] sm:$0xf]
    %v2944 = vld [vmem:[%s2938 + $0x14] sm:$0xf]
    %v2945 = vld [vmem:[%s2938 + $0x18] sm:$0xf]
    %v2946 = vld [vmem:[%s2938 + $0x1c] sm:$0xf]
    %v2947 = vld [vmem:[%s2938 + $0x20] sm:$0xf]
    %v2948 = vld [vmem:[%s2938 + $0x24] sm:$0xf]
    %v2949 = vld [vmem:[%s2938 + $0x28] sm:$0xf]
    %v2950 = vld [vmem:[%s2938 + $0x2c] sm:$0xf]
    %v2951 = vld [vmem:[%s2938 + $0x30] sm:$0xf]
    %v2952 = vld [vmem:[%s2938 + $0x34] sm:$0xf]
    %v2953 = vld [vmem:[%s2938 + $0x38] sm:$0xf]
    %v2954 = vld [vmem:[%s2938 + $0x3c] sm:$0xf]
    %v2955 = vld [vmem:[%s2938 + $0x40] sm:$0xf]
    %v2956 = vld [vmem:[%s2938 + $0x44] sm:$0xf]
    %v2957 = vld [vmem:[%s2938 + $0x48] sm:$0xf]
    %v2958 = vld [vmem:[%s2938 + $0x4c] sm:$0xf]
    %v2959 = vld [vmem:[%s2938 + $0x50] sm:$0xf]
    %v2960 = vld [vmem:[%s2938 + $0x54] sm:$0xf]
    %v2961 = vld [vmem:[%s2938 + $0x58] sm:$0xf]
    %v2962 = vld [vmem:[%s2938 + $0x5c] sm:$0xf]
    %v2963 = vld [vmem:[%s2938 + $0x60] sm:$0xf]
    %v2964 = vld [vmem:[%s2938 + $0x64] sm:$0xf]
    %v2965 = vld [vmem:[%s2938 + $0x68] sm:$0xf]
    %v2966 = vld [vmem:[%s2938 + $0x6c] sm:$0xf]
    %v2967 = vld [vmem:[%s2938 + $0x70] sm:$0xf]
    %v2968 = vld [vmem:[%s2938 + $0x74] sm:$0xf]
    %v2969 = vld [vmem:[%s2938 + $0x78] sm:$0xf]
    %v2970 = vld [vmem:[%s2938 + $0x7c] sm:$0xf]
    %v2971 = vpack.c.bf16 %v2936, %v2936
    %v2972 = vpack.c.bf16 %v2937, %v2937
    %v3005 = vunpack.c.l.b16 %v2939
    %v3006 = vunpack.c.l.b16 %v2940
    %v3007 = vunpack.c.l.b16 %v2941
    %v3008 = vunpack.c.l.b16 %v2942
    %v3009 = vunpack.c.l.b16 %v2943
    %v3010 = vunpack.c.l.b16 %v2944
    %v3011 = vunpack.c.l.b16 %v2945
    %v3012 = vunpack.c.l.b16 %v2946
    %v3013 = vunpack.c.l.b16 %v2947
    %v3014 = vunpack.c.l.b16 %v2948
    %v3015 = vunpack.c.l.b16 %v2949
    %v3016 = vunpack.c.l.b16 %v2950
    %v3017 = vunpack.c.l.b16 %v2951
    %v3018 = vunpack.c.l.b16 %v2952
    %v3019 = vunpack.c.l.b16 %v2953
    %v3020 = vunpack.c.l.b16 %v2954
    %v3021 = vunpack.c.l.b16 %v2955
    %v3022 = vunpack.c.l.b16 %v2956
    %v3023 = vunpack.c.l.b16 %v2957
    %v3024 = vunpack.c.l.b16 %v2958
    %v3025 = vunpack.c.l.b16 %v2959
    %v3026 = vunpack.c.l.b16 %v2960
    %v3027 = vunpack.c.l.b16 %v2961
    %v3028 = vunpack.c.l.b16 %v2962
    %v3029 = vunpack.c.l.b16 %v2963
    %v3030 = vunpack.c.l.b16 %v2964
    %v3031 = vunpack.c.l.b16 %v2965
    %v3032 = vunpack.c.l.b16 %v2966
    %v3033 = vunpack.c.l.b16 %v2967
    %v3034 = vunpack.c.l.b16 %v2968
    %v3035 = vunpack.c.l.b16 %v2969
    %v3036 = vunpack.c.l.b16 %v2970
    %v3037 = vpack.c.b16 %v3006, %v3005
    %v3038 = vpack.c.b16 %v3008, %v3007
    %v3039 = vpack.c.b16 %v3010, %v3009
    %v3040 = vpack.c.b16 %v3012, %v3011
    %v3041 = vpack.c.b16 %v3014, %v3013
    %v3042 = vpack.c.b16 %v3016, %v3015
    %v3043 = vpack.c.b16 %v3018, %v3017
    %v3044 = vpack.c.b16 %v3020, %v3019
    %v3045 = vpack.c.b16 %v3022, %v3021
    %v3046 = vpack.c.b16 %v3024, %v3023
    %v3047 = vpack.c.b16 %v3026, %v3025
    %v3048 = vpack.c.b16 %v3028, %v3027
    %v3049 = vpack.c.b16 %v3030, %v3029
    %v3050 = vpack.c.b16 %v3032, %v3031
    %v3051 = vpack.c.b16 %v3034, %v3033
    %v3052 = vpack.c.b16 %v3036, %v3035
    %3069 = vmatprep.subr.bf16.mxu0 0
    %3070 = vmatpush1.bf16.msra.mxu0 %v3044
    %3071 = vmatprep.subr.bf16.mxu0 0
    %3072 = vmatpush1.bf16.msra.mxu0 %v3043
    %3073 = vmatprep.subr.bf16.mxu0 0
    %3074 = vmatpush1.bf16.msra.mxu0 %v3042
    %3075 = vmatprep.subr.bf16.mxu0 0
    %3076 = vmatpush1.bf16.msra.mxu0 %v3041
    %3077 = vmatprep.subr.bf16.mxu0 0
    %3078 = vmatpush1.bf16.msra.mxu0 %v3040
    %3079 = vmatprep.subr.bf16.mxu0 0
    %3080 = vmatpush1.bf16.msra.mxu0 %v3039
    %3081 = vmatprep.subr.bf16.mxu0 0
    %3082 = vmatpush1.bf16.msra.mxu0 %v3038
    %3083 = vmatprep.subr.bf16.mxu0 0
    %3084 = vmatpush1.bf16.msra.mxu0 %v3037
    %3085 = vmatprep.subr.bf16.mxu0 0
    %3086 = vmatpush2.bf16.msra.mxu0 %v3052
    %3087 = vmatprep.subr.bf16.mxu0 0
    %3088 = vmatpush2.bf16.msra.mxu0 %v3051
    %3089 = vmatprep.subr.bf16.mxu0 0
    %3090 = vmatpush2.bf16.msra.mxu0 %v3050
    %3091 = vmatprep.subr.bf16.mxu0 0
    %3092 = vmatpush2.bf16.msra.mxu0 %v3049
    %3093 = vmatprep.subr.bf16.mxu0 0
    %3094 = vmatpush2.bf16.msra.mxu0 %v3048
    %3095 = vmatprep.subr.bf16.mxu0 0
    %3096 = vmatpush2.bf16.msra.mxu0 %v3047
    %3097 = vmatprep.subr.bf16.mxu0 0
    %3098 = vmatpush2.bf16.msra.mxu0 %v3046
    %3099 = vmatprep.subr.bf16.mxu0 0
    %3100 = vmatpush2.bf16.msra.mxu0 %v3045
    %3101 = vmatprep.mubr.bf16.mxu0 %v2972
    %3102 = vmatmul.mubr.bf16.gmra.mxu0 %v2971
    %v3103 = vpop.f32.mrf.mxu0
    %v3104 = vadd.f32 0.0, %v3103
    %v3105 = vpop.f32.mrf.mxu0
    %v3106 = vpop.f32.mrf.mxu0
    %v3107 = vpop.f32.mrf.mxu0
    %3108 = vdwg.mxu0
    %v3109 = vadd.f32 %v2629, %v3104
    %v3110 = vld [vmem:[%s11] sm:$0x1]
    %v3111 = vmul.f32 %v3109, %v3109
    %3112 = vadd.xlane.f32.xlu0 %v3111
    %v3113 = vpop.xlane.xlu0 %3112
    %v3114 = vmul.f32 %v3113, %v145
    %v3115 = vadd.f32 %v3114, 1e-06
    %v3116 = vrsqrt.pop %v3115
    %v3117 = vmul.f32 %v3109, %v3116
    %v3119 = vlaneseq
    %v3120 = vshrl.u32 %v3119, 7
    %v3121 = vsub.s32 0, %v3120
    %v3122 = vrot.slane %v3110, %v3121
    %v3124 = vmul.f32 %v3117, %v3122
    %v3125 = vld [vmem:[#allocation12] sm:$0xff]
    %v3126 = vld [vmem:[#allocation12 + $0x8] sm:$0xff]
    %v3127 = vld [vmem:[#allocation12 + $0x10] sm:$0xff]
    %v3128 = vld [vmem:[#allocation12 + $0x18] sm:$0xff]
    %v3129 = vld [vmem:[#allocation12 + $0x20] sm:$0xff]
    %v3130 = vld [vmem:[#allocation12 + $0x28] sm:$0xff]
    %v3131 = vld [vmem:[#allocation12 + $0x30] sm:$0xff]
    %v3132 = vld [vmem:[#allocation12 + $0x38] sm:$0xff]
    %v3133 = vld [vmem:[#allocation12 + $0x40] sm:$0xff]
    %v3134 = vld [vmem:[#allocation12 + $0x48] sm:$0xff]
    %v3135 = vld [vmem:[#allocation12 + $0x50] sm:$0xff]
    %v3136 = vld [vmem:[#allocation12 + $0x58] sm:$0xff]
    %v3137 = vld [vmem:[#allocation12 + $0x60] sm:$0xff]
    %v3138 = vld [vmem:[#allocation12 + $0x68] sm:$0xff]
    %v3139 = vld [vmem:[#allocation12 + $0x70] sm:$0xff]
    %v3140 = vld [vmem:[#allocation12 + $0x78] sm:$0xff]
    %v3141 = vpack.c.bf16 %v3124, %v3124
    %v3158 = vunpack.c.l.b16 %v3125
    %v3159 = vunpack.c.h.b16 %v3125
    %v3160 = vunpack.c.l.b16 %v3126
    %v3161 = vunpack.c.h.b16 %v3126
    %v3162 = vunpack.c.l.b16 %v3127
    %v3163 = vunpack.c.h.b16 %v3127
    %v3164 = vunpack.c.l.b16 %v3128
    %v3165 = vunpack.c.h.b16 %v3128
    %v3166 = vunpack.c.l.b16 %v3129
    %v3167 = vunpack.c.h.b16 %v3129
    %v3168 = vunpack.c.l.b16 %v3130
    %v3169 = vunpack.c.h.b16 %v3130
    %v3170 = vunpack.c.l.b16 %v3131
    %v3171 = vunpack.c.h.b16 %v3131
    %v3172 = vunpack.c.l.b16 %v3132
    %v3173 = vunpack.c.h.b16 %v3132
    %v3174 = vunpack.c.l.b16 %v3133
    %v3175 = vunpack.c.h.b16 %v3133
    %v3176 = vunpack.c.l.b16 %v3134
    %v3177 = vunpack.c.h.b16 %v3134
    %v3178 = vunpack.c.l.b16 %v3135
    %v3179 = vunpack.c.h.b16 %v3135
    %v3180 = vunpack.c.l.b16 %v3136
    %v3181 = vunpack.c.h.b16 %v3136
    %v3182 = vunpack.c.l.b16 %v3137
    %v3183 = vunpack.c.h.b16 %v3137
    %v3184 = vunpack.c.l.b16 %v3138
    %v3185 = vunpack.c.h.b16 %v3138
    %v3186 = vunpack.c.l.b16 %v3139
    %v3187 = vunpack.c.h.b16 %v3139
    %v3188 = vunpack.c.l.b16 %v3140
    %v3189 = vunpack.c.h.b16 %v3140
    %v3190 = vpack.c.b16 %v3160, %v3158
    %v3191 = vpack.c.b16 %v3161, %v3159
    %v3192 = vpack.c.b16 %v3164, %v3162
    %v3193 = vpack.c.b16 %v3165, %v3163
    %v3194 = vpack.c.b16 %v3168, %v3166
    %v3195 = vpack.c.b16 %v3169, %v3167
    %v3196 = vpack.c.b16 %v3172, %v3170
    %v3197 = vpack.c.b16 %v3173, %v3171
    %v3198 = vpack.c.b16 %v3176, %v3174
    %v3199 = vpack.c.b16 %v3177, %v3175
    %v3200 = vpack.c.b16 %v3180, %v3178
    %v3201 = vpack.c.b16 %v3181, %v3179
    %v3202 = vpack.c.b16 %v3184, %v3182
    %v3203 = vpack.c.b16 %v3185, %v3183
    %v3204 = vpack.c.b16 %v3188, %v3186
    %v3205 = vpack.c.b16 %v3189, %v3187
    %3222 = vmatprep.subr.bf16.mxu0 %v3205
    %3223 = vmatpush1.bf16.msra.mxu0 %v3204
    %3224 = vmatprep.subr.bf16.mxu0 %v3203
    %3225 = vmatpush1.bf16.msra.mxu0 %v3202
    %3226 = vmatprep.subr.bf16.mxu0 %v3201
    %3227 = vmatpush1.bf16.msra.mxu0 %v3200
    %3228 = vmatprep.subr.bf16.mxu0 %v3199
    %3229 = vmatpush1.bf16.msra.mxu0 %v3198
    %3230 = vmatprep.subr.bf16.mxu0 %v3197
    %3231 = vmatpush1.bf16.msra.mxu0 %v3196
    %3232 = vmatprep.subr.bf16.mxu0 %v3195
    %3233 = vmatpush1.bf16.msra.mxu0 %v3194
    %3234 = vmatprep.subr.bf16.mxu0 %v3193
    %3235 = vmatpush1.bf16.msra.mxu0 %v3192
    %3236 = vmatprep.subr.bf16.mxu0 %v3191
    %3237 = vmatpush1.bf16.msra.mxu0 %v3190
    %3238 = vmatprep.subr.bf16.mxu0 0
    %3239 = vmatpush2.bf16.msra.mxu0 0
    %3240 = vmatprep.subr.bf16.mxu0 0
    %3241 = vmatpush2.bf16.msra.mxu0 0
    %3242 = vmatprep.subr.bf16.mxu0 0
    %3243 = vmatpush2.bf16.msra.mxu0 0
    %3244 = vmatprep.subr.bf16.mxu0 0
    %3245 = vmatpush2.bf16.msra.mxu0 0
    %3246 = vmatprep.subr.bf16.mxu0 0
    %3247 = vmatpush2.bf16.msra.mxu0 0
    %3248 = vmatprep.subr.bf16.mxu0 0
    %3249 = vmatpush2.bf16.msra.mxu0 0
    %3250 = vmatprep.subr.bf16.mxu0 0
    %3251 = vmatpush2.bf16.msra.mxu0 0
    %3252 = vmatprep.subr.bf16.mxu0 0
    %3253 = vmatpush2.bf16.msra.mxu0 0
    %3254 = vmatprep.mubr.bf16.mxu0 0
    %3255 = vmatmul.mubr.bf16.gmra.mxu0 %v3141
    %v3256 = vpop.f32.mrf.mxu0
    %v3257 = vadd.f32 0.0, %v3256
    %v3258 = vpop.f32.mrf.mxu0
    %v3259 = vadd.f32 0.0, %v3258
    %v3260 = vpop.f32.mrf.mxu0
    %v3261 = vpop.f32.mrf.mxu0
    %3262 = vdwg.mxu0
    %3263 = vst [vmem:[#allocation13] sm:$0xff] %v3257
    %3264 = vst [vmem:[#allocation13 + $0x8] sm:$0xff] %v3259
    // Predicated region
    $region78: #{forward.1} parent=1 // pred_check
      _
    $region79: #{forward.1} parent=1 // pred_check_branch
      %3266 = sbr.rel (0) target = $region81
    $region80: #{forward.1} parent=1 // pred_region
      %s3268 = ssub.s32 256, 256
      %3269 = vsyncadd [#allocation4], %s3268
      %s3271 = sshll.u32 [#allocation13], 4
      %s3272 = int_to_ptr.vmem [resolvable:$true] %s3271
      %3274 = dma.vmem_to_hbm [thread:$0]  %s3272, 256, %s13, [#allocation4]
    $region81: #{forward.1} parent=1 // pred_fallthru
      _
    // Predicated region
    $region82: #{forward.1} parent=1 // pred_check
      _
    $region83: #{forward.1} parent=1 // pred_check_branch
      %3276 = sbr.rel (0) target = $region85
    $region84: #{forward.1} parent=1 // pred_region
      %s3278 = ssub.s32 2048, 2048
      %3279 = vsyncadd [#allocation15], %s3278
      %s3280 = sshll.u32 [#allocation14], 4
      %s3281 = int_to_ptr.vmem [resolvable:$true] %s3280
      %3286 = dma.vmem_to_hbm [thread:$0]  %s3281, 2048, %s14, [#allocation15], 128, 128, 8
    $region85: #{forward.1} parent=1 // pred_fallthru
      _
    // Predicated region
    $region86: #{forward.1} parent=1 // pred_check
      _
    $region87: #{forward.1} parent=1 // pred_check_branch
      %3288 = sbr.rel (0) target = $region89
    $region88: #{forward.1} parent=1 // pred_region
      %3289 = dma.done [#allocation4], 256
    $region89: #{forward.1} parent=1 // pred_fallthru
      _
    // Predicated region
    $region90: #{forward.1} parent=1 // pred_check
      _
    $region91: #{forward.1} parent=1 // pred_check_branch
      %3291 = sbr.rel (0) target = $region93
    $region92: #{forward.1} parent=1 // pred_region
      %3292 = dma.done [#allocation15], 2048
    $region93: #{forward.1} parent=1 // pred_fallthru
      _
    %3293 = vsyncpa [#allocation3], 1
    %3294 = vsyncpa [#allocation8], 1
    %3295 = vsyncpa [#allocation11], 1
    %3296 = vsyncpa [#allocation4], 1
    %3297 = vsyncpa [#allocation15], 1
    %3298 = vsyncpa [#allocation5], 1

</llo_original>
